<compile_context>
chip_gen: v7x
topology: tpu7x:2x2x1
jax: 0.10.0
libtpu: 0.0.40
codegen_flags: <defaults>
</compile_context>

<pallas_src>
import jax
import jax.numpy as jnp
from jax.experimental import pallas as pl
from jax.experimental.pallas import tpu as pltpu


def _conv_block_kernel(x_ref,     # (1, H, W, C)   one batch item, NHWC
                       dwc_ref,   # (5, 5, 2C)     merged depthwise taps (b1 | b2, zero-padded)
                       pw_ref,    # (2C, C)        block-diagonal fused pointwise weight
                       b_ref,     # (1, C)         fused output bias (dw biases folded in)
                       out_ref,   # (1, H, W, C)
                       xp_ref):   # scratch (H+8, W+8, 2C) padded, channel-duplicated input
    _, H, W, C = x_ref.shape
    C2 = 2 * C
    PAD = 4

    # ---- in-kernel zero padding (pad=4; branch-2 with pad=2 uses the +2 interior).
    # Input channels are duplicated so every tap runs on full-width vregs and the
    # pointwise matmul consumes the accumulator directly (no concat).
    xp_ref[...] = jnp.zeros_like(xp_ref)
    xv = x_ref[0]                                            # (H, W, C)
    xp_ref[PAD:PAD + H, PAD:PAD + W, :] = jnp.concatenate([xv, xv], axis=-1)

    pw = pw_ref[...]
    bias = b_ref[...]                                        # (1, C), broadcasts over rows

    # Row-strip size keeps the (RS, W, 2C) f32 accumulator register-resident.
    RS = 8 if (H % 8 == 0) else H
    for s in range(H // RS):                                 # static, small trip count
        h0 = s * RS
        acc = jnp.zeros((RS, W, C2), jnp.float32)

        # ---- merged depthwise taps ----
        # branch-1: 5x5, dil=2, pad=4 -> padded offsets (2*kh, 2*kw), kh,kw in 0..4
        # branch-2: 3x3, dil=2, pad=2 -> identical offsets for 1<=kh,kw<=3; its weights
        # live in dwc[..., C:] (zeros on the border taps), so each tap slice is loaded
        # exactly once and multiplied by ONE (2C,) weight vector.
        for kh in range(5):
            for kw in range(5):
                tap = xp_ref[h0 + 2 * kh:h0 + 2 * kh + RS,
                             2 * kw:2 * kw + W, :]            # (RS, W, 2C)
                acc = acc + tap * dwc_ref[kh, kw, :]

        # ---- fused pointwise 1x1 convs ----
        # One MXU matmul with K = 2C lane-dense block-diagonal weight; the result is
        # already the channel-concat [branch1 | branch2]; one full-width store.
        y = jnp.dot(acc.reshape(RS * W, C2), pw,
                    preferred_element_type=jnp.float32) + bias
        out_ref[0, h0:h0 + RS, :, :] = y.reshape(RS, W, C).astype(out_ref.dtype)


@jax.jit
def custom_conv_block(x_nchw, params):
    """x_nchw: (B, C, H, W) float32. Returns (B, C, H, W): [branch1(C//2) || branch2(C//2)]."""
    B, C, H, W = x_nchw.shape
    Co = C // 2
    C2 = 2 * C
    Hp, Wp = H + 8, W + 8

    # NCHW -> NHWC boundary glue (kernel works channels-on-lanes).
    x = jnp.transpose(x_nchw, (0, 2, 3, 1))

    # Re-layout weights from torch conventions (tiny, once per call).
    dw1 = jnp.transpose(params["dw1_w"][:, 0, :, :], (1, 2, 0))   # (5,5,C)
    dw2 = jnp.transpose(params["dw2_w"][:, 0, :, :], (1, 2, 0))   # (3,3,C)
    pw1 = jnp.transpose(params["pw1_w"][:, :, 0, 0], (1, 0))      # (C, Co)
    pw2 = jnp.transpose(params["pw2_w"][:, :, 0, 0], (1, 0))      # (C, Co)

    # Merged depthwise weights: first C lanes = branch-1 5x5, last C lanes = branch-2
    # 3x3 embedded in the 5x5 interior (zeros elsewhere).
    dwc = jnp.zeros((5, 5, C2), jnp.float32)
    dwc = dwc.at[:, :, :C].set(dw1)
    dwc = dwc.at[1:4, 1:4, C:].set(dw2)

    # Block-diagonal fused pointwise weight: (2C, C).
    pw = jnp.zeros((C2, C), jnp.float32)
    pw = pw.at[:C, :Co].set(pw1)
    pw = pw.at[C:, Co:].set(pw2)

    # Fold the depthwise biases through the pointwise weights into one bias.
    bias = jnp.concatenate([params["pw1_b"] + params["dw1_b"] @ pw1,
                            params["pw2_b"] + params["dw2_b"] @ pw2]).reshape(1, C)

    out_nhwc = pl.pallas_call(
        _conv_block_kernel,
        out_shape=jax.ShapeDtypeStruct((B, H, W, C), jnp.float32),
        grid_spec=pltpu.PrefetchScalarGridSpec(
            num_scalar_prefetch=0,
            grid=(B,),                                           # one batch item / step
            in_specs=[
                pl.BlockSpec((1, H, W, C), lambda b: (b, 0, 0, 0)),
                pl.BlockSpec((5, 5, C2), lambda b: (0, 0, 0)),   # constant -> DMA'd once
                pl.BlockSpec((C2, C), lambda b: (0, 0)),
                pl.BlockSpec((1, C), lambda b: (0, 0)),
            ],
            out_specs=pl.BlockSpec((1, H, W, C), lambda b: (b, 0, 0, 0)),
            scratch_shapes=[pltpu.VMEM((Hp, Wp, C2), jnp.float32)],
        ),
        compiler_params=pltpu.CompilerParams(
            dimension_semantics=("parallel",)),                  # megacore over batch (v7x)
        # TODO(synk): for large H/W, tile H into halo'd row-strip grid blocks and set
        # vmem_limit_bytes; unnecessary at these shapes (scratch ~= 288 KiB).
    )(x, dwc, pw, bias)

    return jnp.transpose(out_nhwc, (0, 3, 1, 2))                 # back to NCHW


# ----------------------- reference (plain JAX, NCHW like torch) -----------------------
def _ref_forward(x, p):
    def dwconv(x, w, b, dil, pad):
        out = jax.lax.conv_general_dilated(
            x, w, window_strides=(1, 1), padding=[(pad, pad), (pad, pad)],
            rhs_dilation=(dil, dil), feature_group_count=x.shape[1],
            dimension_numbers=("NCHW", "OIHW", "NCHW"),
            precision=jax.lax.Precision.HIGHEST)
        return out + b[None, :, None, None]

    def pwconv(x, w, b):
        out = jax.lax.conv_general_dilated(
            x, w, window_strides=(1, 1), padding="VALID",
            dimension_numbers=("NCHW", "OIHW", "NCHW"),
            precision=jax.lax.Precision.HIGHEST)
        return out + b[None, :, None, None]

    x1 = pwconv(dwconv(x, p["dw1_w"], p["dw1_b"], 2, 4), p["pw1_w"], p["pw1_b"])
    x2 = pwconv(dwconv(x, p["dw2_w"], p["dw2_b"], 2, 2), p["pw2_w"], p["pw2_b"])
    return jnp.concatenate([x1, x2], axis=1)


if __name__ == "__main__":
    B, C, H, W = 2, 64, 16, 16        # in_channels=64 as in the module default
    key = jax.random.PRNGKey(0)
    ks = jax.random.split(key, 9)

    # Deterministic synthetic parameters (torch conv weight shapes).
    params = {
        "dw1_w": jax.random.normal(ks[0], (C, 1, 5, 5), jnp.float32) * 0.1,
        "dw1_b": jax.random.normal(ks[1], (C,), jnp.float32) * 0.1,
        "pw1_w": jax.random.normal(ks[2], (C // 2, C, 1, 1), jnp.float32) * 0.1,
        "pw1_b": jax.random.normal(ks[3], (C // 2,), jnp.float32) * 0.1,
        "dw2_w": jax.random.normal(ks[4], (C, 1, 3, 3), jnp.float32) * 0.1,
        "dw2_b": jax.random.normal(ks[5], (C,), jnp.float32) * 0.1,
        "pw2_w": jax.random.normal(ks[6], (C // 2, C, 1, 1), jnp.float32) * 0.1,
        "pw2_b": jax.random.normal(ks[7], (C // 2,), jnp.float32) * 0.1,
    }
    x = jax.random.normal(ks[8], (B, C, H, W), jnp.float32)

    out = jax.block_until_ready(custom_conv_block(x, params))
    ref = jax.block_until_ready(_ref_forward(x, params))

    assert out.shape == (B, C, H, W), out.shape
    # Tolerance accounts for the MXU's default (bf16-pass) precision on the fused
    # pointwise matmul; genuine tap/bias/layout bugs produce O(0.1) errors.
    max_err = float(jnp.abs(out - ref).max())
    assert jnp.allclose(out, ref, atol=1e-2, rtol=1e-2), max_err
    print("KERNEL_OK")
</pallas_src>

<mosaic_0001>
module attributes {stable_mosaic.version = 11 : i64} {
  func.func @_conv_block_kernel(%arg0: i32, %arg1: memref<1x16x16x64xf32, #tpu.memory_space<vmem>>, %arg2: memref<5x5x128xf32, #tpu.memory_space<vmem>>, %arg3: memref<128x64xf32, #tpu.memory_space<vmem>>, %arg4: memref<1x64xf32, #tpu.memory_space<vmem>>, %arg5: memref<1x16x16x64xf32, #tpu.memory_space<vmem>>, %arg6: memref<24x24x128xf32, #tpu.memory_space<vmem>>) attributes {dimension_semantics = [#tpu.dimension_semantics<parallel>], iteration_bounds = array<i64: 2>, scalar_prefetch = 0 : i64, scratch_operands = 1 : i64, tpu.core_type = #tpu.core_type<tc>, window_params = [{transform_indices = @transform_0, window_bounds = array<i64: 1, 16, 16, 64>}, {pipeline_mode = #tpu.pipeline_mode<synchronous>, transform_indices = @transform_1, window_bounds = array<i64: 5, 5, 128>}, {pipeline_mode = #tpu.pipeline_mode<synchronous>, transform_indices = @transform_2, window_bounds = array<i64: 128, 64>}, {pipeline_mode = #tpu.pipeline_mode<synchronous>, transform_indices = @transform_3, window_bounds = array<i64: 1, 64>}, {transform_indices = @transform_4, window_bounds = array<i64: 1, 16, 16, 64>}]} {
    %cst = arith.constant 0.000000e+00 : f32
    %0 = vector.broadcast %cst : f32 to vector<24x24x128xf32>
    %c0 = arith.constant 0 : index
    %c0_0 = arith.constant 0 : index
    %c0_1 = arith.constant 0 : index
    %1 = vector.load %arg6[%c0, %c0_0, %c0_1] : memref<24x24x128xf32, #tpu.memory_space<vmem>>, vector<24x24x128xf32>
    tpu.vector_store %arg6[%c0, %c0_0, %c0_1], %0 {strides = array<i32>} : memref<24x24x128xf32, #tpu.memory_space<vmem>>, vector<24x24x128xf32>,
    %c0_2 = arith.constant 0 : index
    %c0_3 = arith.constant 0 : index
    %c0_4 = arith.constant 0 : index
    %c0_5 = arith.constant 0 : index
    %2 = vector.load %arg1[%c0_2, %c0_3, %c0_4, %c0_5] : memref<1x16x16x64xf32, #tpu.memory_space<vmem>>, vector<1x16x16x64xf32>
    %3 = vector.shape_cast %2 : vector<1x16x16x64xf32> to vector<16x16x64xf32>
    %4 = tpu.concatenate %3, %3 in 2 : vector<16x16x64xf32>, vector<16x16x64xf32> -> vector<16x16x128xf32>
    %c4 = arith.constant 4 : index
    %c4_6 = arith.constant 4 : index
    %c0_7 = arith.constant 0 : index
    %5 = vector.load %arg6[%c4, %c4_6, %c0_7] : memref<24x24x128xf32, #tpu.memory_space<vmem>>, vector<16x16x128xf32>
    tpu.vector_store %arg6[%c4, %c4_6, %c0_7], %4 {strides = array<i32>} : memref<24x24x128xf32, #tpu.memory_space<vmem>>, vector<16x16x128xf32>,
    %c0_8 = arith.constant 0 : index
    %c0_9 = arith.constant 0 : index
    %6 = vector.load %arg3[%c0_8, %c0_9] : memref<128x64xf32, #tpu.memory_space<vmem>>, vector<128x64xf32>
    %c0_10 = arith.constant 0 : index
    %c0_11 = arith.constant 0 : index
    %7 = vector.load %arg4[%c0_10, %c0_11] : memref<1x64xf32, #tpu.memory_space<vmem>>, vector<1x64xf32>
    %cst_12 = arith.constant 0.000000e+00 : f32
    %8 = vector.broadcast %cst_12 : f32 to vector<8x16x128xf32>
    %c0_13 = arith.constant 0 : index
    %c0_14 = arith.constant 0 : index
    %c0_15 = arith.constant 0 : index
    %9 = vector.load %arg6[%c0_13, %c0_14, %c0_15] : memref<24x24x128xf32, #tpu.memory_space<vmem>>, vector<8x16x128xf32>
    %c0_16 = arith.constant 0 : index
    %c0_17 = arith.constant 0 : index
    %c0_18 = arith.constant 0 : index
    %10 = vector.load %arg2[%c0_16, %c0_17, %c0_18] : memref<5x5x128xf32, #tpu.memory_space<vmem>>, vector<1x1x128xf32>
    %11 = vector.shape_cast %10 : vector<1x1x128xf32> to vector<128xf32>
    %12 = vector.shape_cast %11 : vector<128xf32> to vector<1x1x128xf32>
    %13 = vector.broadcast %12 : vector<1x1x128xf32> to vector<8x16x128xf32>
    %14 = arith.mulf %9, %13 : vector<8x16x128xf32>
    %15 = arith.addf %8, %14 : vector<8x16x128xf32>
    %c0_19 = arith.constant 0 : index
    %c2 = arith.constant 2 : index
    %c0_20 = arith.constant 0 : index
    %16 = vector.load %arg6[%c0_19, %c2, %c0_20] : memref<24x24x128xf32, #tpu.memory_space<vmem>>, vector<8x16x128xf32>
    %c0_21 = arith.constant 0 : index
    %c1 = arith.constant 1 : index
    %c0_22 = arith.constant 0 : index
    %17 = vector.load %arg2[%c0_21, %c1, %c0_22] : memref<5x5x128xf32, #tpu.memory_space<vmem>>, vector<1x1x128xf32>
    %18 = vector.shape_cast %17 : vector<1x1x128xf32> to vector<128xf32>
    %19 = vector.shape_cast %18 : vector<128xf32> to vector<1x1x128xf32>
    %20 = vector.broadcast %19 : vector<1x1x128xf32> to vector<8x16x128xf32>
    %21 = arith.mulf %16, %20 : vector<8x16x128xf32>
    %22 = arith.addf %15, %21 : vector<8x16x128xf32>
    %c0_23 = arith.constant 0 : index
    %c4_24 = arith.constant 4 : index
    %c0_25 = arith.constant 0 : index
    %23 = vector.load %arg6[%c0_23, %c4_24, %c0_25] : memref<24x24x128xf32, #tpu.memory_space<vmem>>, vector<8x16x128xf32>
    %c0_26 = arith.constant 0 : index
    %c2_27 = arith.constant 2 : index
    %c0_28 = arith.constant 0 : index
    %24 = vector.load %arg2[%c0_26, %c2_27, %c0_28] : memref<5x5x128xf32, #tpu.memory_space<vmem>>, vector<1x1x128xf32>
    %25 = vector.shape_cast %24 : vector<1x1x128xf32> to vector<128xf32>
    %26 = vector.shape_cast %25 : vector<128xf32> to vector<1x1x128xf32>
    %27 = vector.broadcast %26 : vector<1x1x128xf32> to vector<8x16x128xf32>
    %28 = arith.mulf %23, %27 : vector<8x16x128xf32>
    %29 = arith.addf %22, %28 : vector<8x16x128xf32>
    %c0_29 = arith.constant 0 : index
    %c6 = arith.constant 6 : index
    %c0_30 = arith.constant 0 : index
    %30 = vector.load %arg6[%c0_29, %c6, %c0_30] : memref<24x24x128xf32, #tpu.memory_space<vmem>>, vector<8x16x128xf32>
    %c0_31 = arith.constant 0 : index
    %c3 = arith.constant 3 : index
    %c0_32 = arith.constant 0 : index
    %31 = vector.load %arg2[%c0_31, %c3, %c0_32] : memref<5x5x128xf32, #tpu.memory_space<vmem>>, vector<1x1x128xf32>
    %32 = vector.shape_cast %31 : vector<1x1x128xf32> to vector<128xf32>
    %33 = vector.shape_cast %32 : vector<128xf32> to vector<1x1x128xf32>
    %34 = vector.broadcast %33 : vector<1x1x128xf32> to vector<8x16x128xf32>
    %35 = arith.mulf %30, %34 : vector<8x16x128xf32>
    %36 = arith.addf %29, %35 : vector<8x16x128xf32>
    %c0_33 = arith.constant 0 : index
    %c8 = arith.constant 8 : index
    %c0_34 = arith.constant 0 : index
    %37 = vector.load %arg6[%c0_33, %c8, %c0_34] : memref<24x24x128xf32, #tpu.memory_space<vmem>>, vector<8x16x128xf32>
    %c0_35 = arith.constant 0 : index
    %c4_36 = arith.constant 4 : index
    %c0_37 = arith.constant 0 : index
    %38 = vector.load %arg2[%c0_35, %c4_36, %c0_37] : memref<5x5x128xf32, #tpu.memory_space<vmem>>, vector<1x1x128xf32>
    %39 = vector.shape_cast %38 : vector<1x1x128xf32> to vector<128xf32>
    %40 = vector.shape_cast %39 : vector<128xf32> to vector<1x1x128xf32>
    %41 = vector.broadcast %40 : vector<1x1x128xf32> to vector<8x16x128xf32>
    %42 = arith.mulf %37, %41 : vector<8x16x128xf32>
    %43 = arith.addf %36, %42 : vector<8x16x128xf32>
    %c2_38 = arith.constant 2 : index
    %c0_39 = arith.constant 0 : index
    %c0_40 = arith.constant 0 : index
    %44 = vector.load %arg6[%c2_38, %c0_39, %c0_40] : memref<24x24x128xf32, #tpu.memory_space<vmem>>, vector<8x16x128xf32>
    %c1_41 = arith.constant 1 : index
    %c0_42 = arith.constant 0 : index
    %c0_43 = arith.constant 0 : index
    %45 = vector.load %arg2[%c1_41, %c0_42, %c0_43] : memref<5x5x128xf32, #tpu.memory_space<vmem>>, vector<1x1x128xf32>
    %46 = vector.shape_cast %45 : vector<1x1x128xf32> to vector<128xf32>
    %47 = vector.shape_cast %46 : vector<128xf32> to vector<1x1x128xf32>
    %48 = vector.broadcast %47 : vector<1x1x128xf32> to vector<8x16x128xf32>
    %49 = arith.mulf %44, %48 : vector<8x16x128xf32>
    %50 = arith.addf %43, %49 : vector<8x16x128xf32>
    %c2_44 = arith.constant 2 : index
    %c2_45 = arith.constant 2 : index
    %c0_46 = arith.constant 0 : index
    %51 = vector.load %arg6[%c2_44, %c2_45, %c0_46] : memref<24x24x128xf32, #tpu.memory_space<vmem>>, vector<8x16x128xf32>
    %c1_47 = arith.constant 1 : index
    %c1_48 = arith.constant 1 : index
    %c0_49 = arith.constant 0 : index
    %52 = vector.load %arg2[%c1_47, %c1_48, %c0_49] : memref<5x5x128xf32, #tpu.memory_space<vmem>>, vector<1x1x128xf32>
    %53 = vector.shape_cast %52 : vector<1x1x128xf32> to vector<128xf32>
    %54 = vector.shape_cast %53 : vector<128xf32> to vector<1x1x128xf32>
    %55 = vector.broadcast %54 : vector<1x1x128xf32> to vector<8x16x128xf32>
    %56 = arith.mulf %51, %55 : vector<8x16x128xf32>
    %57 = arith.addf %50, %56 : vector<8x16x128xf32>
    %c2_50 = arith.constant 2 : index
    %c4_51 = arith.constant 4 : index
    %c0_52 = arith.constant 0 : index
    %58 = vector.load %arg6[%c2_50, %c4_51, %c0_52] : memref<24x24x128xf32, #tpu.memory_space<vmem>>, vector<8x16x128xf32>
    %c1_53 = arith.constant 1 : index
    %c2_54 = arith.constant 2 : index
    %c0_55 = arith.constant 0 : index
    %59 = vector.load %arg2[%c1_53, %c2_54, %c0_55] : memref<5x5x128xf32, #tpu.memory_space<vmem>>, vector<1x1x128xf32>
    %60 = vector.shape_cast %59 : vector<1x1x128xf32> to vector<128xf32>
    %61 = vector.shape_cast %60 : vector<128xf32> to vector<1x1x128xf32>
    %62 = vector.broadcast %61 : vector<1x1x128xf32> to vector<8x16x128xf32>
    %63 = arith.mulf %58, %62 : vector<8x16x128xf32>
    %64 = arith.addf %57, %63 : vector<8x16x128xf32>
    %c2_56 = arith.constant 2 : index
    %c6_57 = arith.constant 6 : index
    %c0_58 = arith.constant 0 : index
    %65 = vector.load %arg6[%c2_56, %c6_57, %c0_58] : memref<24x24x128xf32, #tpu.memory_space<vmem>>, vector<8x16x128xf32>
    %c1_59 = arith.constant 1 : index
    %c3_60 = arith.constant 3 : index
    %c0_61 = arith.constant 0 : index
    %66 = vector.load %arg2[%c1_59, %c3_60, %c0_61] : memref<5x5x128xf32, #tpu.memory_space<vmem>>, vector<1x1x128xf32>
    %67 = vector.shape_cast %66 : vector<1x1x128xf32> to vector<128xf32>
    %68 = vector.shape_cast %67 : vector<128xf32> to vector<1x1x128xf32>
    %69 = vector.broadcast %68 : vector<1x1x128xf32> to vector<8x16x128xf32>
    %70 = arith.mulf %65, %69 : vector<8x16x128xf32>
    %71 = arith.addf %64, %70 : vector<8x16x128xf32>
    %c2_62 = arith.constant 2 : index
    %c8_63 = arith.constant 8 : index
    %c0_64 = arith.constant 0 : index
    %72 = vector.load %arg6[%c2_62, %c8_63, %c0_64] : memref<24x24x128xf32, #tpu.memory_space<vmem>>, vector<8x16x128xf32>
    %c1_65 = arith.constant 1 : index
    %c4_66 = arith.constant 4 : index
    %c0_67 = arith.constant 0 : index
    %73 = vector.load %arg2[%c1_65, %c4_66, %c0_67] : memref<5x5x128xf32, #tpu.memory_space<vmem>>, vector<1x1x128xf32>
    %74 = vector.shape_cast %73 : vector<1x1x128xf32> to vector<128xf32>
    %75 = vector.shape_cast %74 : vector<128xf32> to vector<1x1x128xf32>
    %76 = vector.broadcast %75 : vector<1x1x128xf32> to vector<8x16x128xf32>
    %77 = arith.mulf %72, %76 : vector<8x16x128xf32>
    %78 = arith.addf %71, %77 : vector<8x16x128xf32>
    %c4_68 = arith.constant 4 : index
    %c0_69 = arith.constant 0 : index
    %c0_70 = arith.constant 0 : index
    %79 = vector.load %arg6[%c4_68, %c0_69, %c0_70] : memref<24x24x128xf32, #tpu.memory_space<vmem>>, vector<8x16x128xf32>
    %c2_71 = arith.constant 2 : index
    %c0_72 = arith.constant 0 : index
    %c0_73 = arith.constant 0 : index
    %80 = vector.load %arg2[%c2_71, %c0_72, %c0_73] : memref<5x5x128xf32, #tpu.memory_space<vmem>>, vector<1x1x128xf32>
    %81 = vector.shape_cast %80 : vector<1x1x128xf32> to vector<128xf32>
    %82 = vector.shape_cast %81 : vector<128xf32> to vector<1x1x128xf32>
    %83 = vector.broadcast %82 : vector<1x1x128xf32> to vector<8x16x128xf32>
    %84 = arith.mulf %79, %83 : vector<8x16x128xf32>
    %85 = arith.addf %78, %84 : vector<8x16x128xf32>
    %c4_74 = arith.constant 4 : index
    %c2_75 = arith.constant 2 : index
    %c0_76 = arith.constant 0 : index
    %86 = vector.load %arg6[%c4_74, %c2_75, %c0_76] : memref<24x24x128xf32, #tpu.memory_space<vmem>>, vector<8x16x128xf32>
    %c2_77 = arith.constant 2 : index
    %c1_78 = arith.constant 1 : index
    %c0_79 = arith.constant 0 : index
    %87 = vector.load %arg2[%c2_77, %c1_78, %c0_79] : memref<5x5x128xf32, #tpu.memory_space<vmem>>, vector<1x1x128xf32>
    %88 = vector.shape_cast %87 : vector<1x1x128xf32> to vector<128xf32>
    %89 = vector.shape_cast %88 : vector<128xf32> to vector<1x1x128xf32>
    %90 = vector.broadcast %89 : vector<1x1x128xf32> to vector<8x16x128xf32>
    %91 = arith.mulf %86, %90 : vector<8x16x128xf32>
    %92 = arith.addf %85, %91 : vector<8x16x128xf32>
    %c4_80 = arith.constant 4 : index
    %c4_81 = arith.constant 4 : index
    %c0_82 = arith.constant 0 : index
    %93 = vector.load %arg6[%c4_80, %c4_81, %c0_82] : memref<24x24x128xf32, #tpu.memory_space<vmem>>, vector<8x16x128xf32>
    %c2_83 = arith.constant 2 : index
    %c2_84 = arith.constant 2 : index
    %c0_85 = arith.constant 0 : index
    %94 = vector.load %arg2[%c2_83, %c2_84, %c0_85] : memref<5x5x128xf32, #tpu.memory_space<vmem>>, vector<1x1x128xf32>
    %95 = vector.shape_cast %94 : vector<1x1x128xf32> to vector<128xf32>
    %96 = vector.shape_cast %95 : vector<128xf32> to vector<1x1x128xf32>
    %97 = vector.broadcast %96 : vector<1x1x128xf32> to vector<8x16x128xf32>
    %98 = arith.mulf %93, %97 : vector<8x16x128xf32>
    %99 = arith.addf %92, %98 : vector<8x16x128xf32>
    %c4_86 = arith.constant 4 : index
    %c6_87 = arith.constant 6 : index
    %c0_88 = arith.constant 0 : index
    %100 = vector.load %arg6[%c4_86, %c6_87, %c0_88] : memref<24x24x128xf32, #tpu.memory_space<vmem>>, vector<8x16x128xf32>
    %c2_89 = arith.constant 2 : index
    %c3_90 = arith.constant 3 : index
    %c0_91 = arith.constant 0 : index
    %101 = vector.load %arg2[%c2_89, %c3_90, %c0_91] : memref<5x5x128xf32, #tpu.memory_space<vmem>>, vector<1x1x128xf32>
    %102 = vector.shape_cast %101 : vector<1x1x128xf32> to vector<128xf32>
    %103 = vector.shape_cast %102 : vector<128xf32> to vector<1x1x128xf32>
    %104 = vector.broadcast %103 : vector<1x1x128xf32> to vector<8x16x128xf32>
    %105 = arith.mulf %100, %104 : vector<8x16x128xf32>
    %106 = arith.addf %99, %105 : vector<8x16x128xf32>
    %c4_92 = arith.constant 4 : index
    %c8_93 = arith.constant 8 : index
    %c0_94 = arith.constant 0 : index
    %107 = vector.load %arg6[%c4_92, %c8_93, %c0_94] : memref<24x24x128xf32, #tpu.memory_space<vmem>>, vector<8x16x128xf32>
    %c2_95 = arith.constant 2 : index
    %c4_96 = arith.constant 4 : index
    %c0_97 = arith.constant 0 : index
    %108 = vector.load %arg2[%c2_95, %c4_96, %c0_97] : memref<5x5x128xf32, #tpu.memory_space<vmem>>, vector<1x1x128xf32>
    %109 = vector.shape_cast %108 : vector<1x1x128xf32> to vector<128xf32>
    %110 = vector.shape_cast %109 : vector<128xf32> to vector<1x1x128xf32>
    %111 = vector.broadcast %110 : vector<1x1x128xf32> to vector<8x16x128xf32>
    %112 = arith.mulf %107, %111 : vector<8x16x128xf32>
    %113 = arith.addf %106, %112 : vector<8x16x128xf32>
    %c6_98 = arith.constant 6 : index
    %c0_99 = arith.constant 0 : index
    %c0_100 = arith.constant 0 : index
    %114 = vector.load %arg6[%c6_98, %c0_99, %c0_100] : memref<24x24x128xf32, #tpu.memory_space<vmem>>, vector<8x16x128xf32>
    %c3_101 = arith.constant 3 : index
    %c0_102 = arith.constant 0 : index
    %c0_103 = arith.constant 0 : index
    %115 = vector.load %arg2[%c3_101, %c0_102, %c0_103] : memref<5x5x128xf32, #tpu.memory_space<vmem>>, vector<1x1x128xf32>
    %116 = vector.shape_cast %115 : vector<1x1x128xf32> to vector<128xf32>
    %117 = vector.shape_cast %116 : vector<128xf32> to vector<1x1x128xf32>
    %118 = vector.broadcast %117 : vector<1x1x128xf32> to vector<8x16x128xf32>
    %119 = arith.mulf %114, %118 : vector<8x16x128xf32>
    %120 = arith.addf %113, %119 : vector<8x16x128xf32>
    %c6_104 = arith.constant 6 : index
    %c2_105 = arith.constant 2 : index
    %c0_106 = arith.constant 0 : index
    %121 = vector.load %arg6[%c6_104, %c2_105, %c0_106] : memref<24x24x128xf32, #tpu.memory_space<vmem>>, vector<8x16x128xf32>
    %c3_107 = arith.constant 3 : index
    %c1_108 = arith.constant 1 : index
    %c0_109 = arith.constant 0 : index
    %122 = vector.load %arg2[%c3_107, %c1_108, %c0_109] : memref<5x5x128xf32, #tpu.memory_space<vmem>>, vector<1x1x128xf32>
    %123 = vector.shape_cast %122 : vector<1x1x128xf32> to vector<128xf32>
    %124 = vector.shape_cast %123 : vector<128xf32> to vector<1x1x128xf32>
    %125 = vector.broadcast %124 : vector<1x1x128xf32> to vector<8x16x128xf32>
    %126 = arith.mulf %121, %125 : vector<8x16x128xf32>
    %127 = arith.addf %120, %126 : vector<8x16x128xf32>
    %c6_110 = arith.constant 6 : index
    %c4_111 = arith.constant 4 : index
    %c0_112 = arith.constant 0 : index
    %128 = vector.load %arg6[%c6_110, %c4_111, %c0_112] : memref<24x24x128xf32, #tpu.memory_space<vmem>>, vector<8x16x128xf32>
    %c3_113 = arith.constant 3 : index
    %c2_114 = arith.constant 2 : index
    %c0_115 = arith.constant 0 : index
    %129 = vector.load %arg2[%c3_113, %c2_114, %c0_115] : memref<5x5x128xf32, #tpu.memory_space<vmem>>, vector<1x1x128xf32>
    %130 = vector.shape_cast %129 : vector<1x1x128xf32> to vector<128xf32>
    %131 = vector.shape_cast %130 : vector<128xf32> to vector<1x1x128xf32>
    %132 = vector.broadcast %131 : vector<1x1x128xf32> to vector<8x16x128xf32>
    %133 = arith.mulf %128, %132 : vector<8x16x128xf32>
    %134 = arith.addf %127, %133 : vector<8x16x128xf32>
    %c6_116 = arith.constant 6 : index
    %c6_117 = arith.constant 6 : index
    %c0_118 = arith.constant 0 : index
    %135 = vector.load %arg6[%c6_116, %c6_117, %c0_118] : memref<24x24x128xf32, #tpu.memory_space<vmem>>, vector<8x16x128xf32>
    %c3_119 = arith.constant 3 : index
    %c3_120 = arith.constant 3 : index
    %c0_121 = arith.constant 0 : index
    %136 = vector.load %arg2[%c3_119, %c3_120, %c0_121] : memref<5x5x128xf32, #tpu.memory_space<vmem>>, vector<1x1x128xf32>
    %137 = vector.shape_cast %136 : vector<1x1x128xf32> to vector<128xf32>
    %138 = vector.shape_cast %137 : vector<128xf32> to vector<1x1x128xf32>
    %139 = vector.broadcast %138 : vector<1x1x128xf32> to vector<8x16x128xf32>
    %140 = arith.mulf %135, %139 : vector<8x16x128xf32>
    %141 = arith.addf %134, %140 : vector<8x16x128xf32>
    %c6_122 = arith.constant 6 : index
    %c8_123 = arith.constant 8 : index
    %c0_124 = arith.constant 0 : index
    %142 = vector.load %arg6[%c6_122, %c8_123, %c0_124] : memref<24x24x128xf32, #tpu.memory_space<vmem>>, vector<8x16x128xf32>
    %c3_125 = arith.constant 3 : index
    %c4_126 = arith.constant 4 : index
    %c0_127 = arith.constant 0 : index
    %143 = vector.load %arg2[%c3_125, %c4_126, %c0_127] : memref<5x5x128xf32, #tpu.memory_space<vmem>>, vector<1x1x128xf32>
    %144 = vector.shape_cast %143 : vector<1x1x128xf32> to vector<128xf32>
    %145 = vector.shape_cast %144 : vector<128xf32> to vector<1x1x128xf32>
    %146 = vector.broadcast %145 : vector<1x1x128xf32> to vector<8x16x128xf32>
    %147 = arith.mulf %142, %146 : vector<8x16x128xf32>
    %148 = arith.addf %141, %147 : vector<8x16x128xf32>
    %c8_128 = arith.constant 8 : index
    %c0_129 = arith.constant 0 : index
    %c0_130 = arith.constant 0 : index
    %149 = vector.load %arg6[%c8_128, %c0_129, %c0_130] : memref<24x24x128xf32, #tpu.memory_space<vmem>>, vector<8x16x128xf32>
    %c4_131 = arith.constant 4 : index
    %c0_132 = arith.constant 0 : index
    %c0_133 = arith.constant 0 : index
    %150 = vector.load %arg2[%c4_131, %c0_132, %c0_133] : memref<5x5x128xf32, #tpu.memory_space<vmem>>, vector<1x1x128xf32>
    %151 = vector.shape_cast %150 : vector<1x1x128xf32> to vector<128xf32>
    %152 = vector.shape_cast %151 : vector<128xf32> to vector<1x1x128xf32>
    %153 = vector.broadcast %152 : vector<1x1x128xf32> to vector<8x16x128xf32>
    %154 = arith.mulf %149, %153 : vector<8x16x128xf32>
    %155 = arith.addf %148, %154 : vector<8x16x128xf32>
    %c8_134 = arith.constant 8 : index
    %c2_135 = arith.constant 2 : index
    %c0_136 = arith.constant 0 : index
    %156 = vector.load %arg6[%c8_134, %c2_135, %c0_136] : memref<24x24x128xf32, #tpu.memory_space<vmem>>, vector<8x16x128xf32>
    %c4_137 = arith.constant 4 : index
    %c1_138 = arith.constant 1 : index
    %c0_139 = arith.constant 0 : index
    %157 = vector.load %arg2[%c4_137, %c1_138, %c0_139] : memref<5x5x128xf32, #tpu.memory_space<vmem>>, vector<1x1x128xf32>
    %158 = vector.shape_cast %157 : vector<1x1x128xf32> to vector<128xf32>
    %159 = vector.shape_cast %158 : vector<128xf32> to vector<1x1x128xf32>
    %160 = vector.broadcast %159 : vector<1x1x128xf32> to vector<8x16x128xf32>
    %161 = arith.mulf %156, %160 : vector<8x16x128xf32>
    %162 = arith.addf %155, %161 : vector<8x16x128xf32>
    %c8_140 = arith.constant 8 : index
    %c4_141 = arith.constant 4 : index
    %c0_142 = arith.constant 0 : index
    %163 = vector.load %arg6[%c8_140, %c4_141, %c0_142] : memref<24x24x128xf32, #tpu.memory_space<vmem>>, vector<8x16x128xf32>
    %c4_143 = arith.constant 4 : index
    %c2_144 = arith.constant 2 : index
    %c0_145 = arith.constant 0 : index
    %164 = vector.load %arg2[%c4_143, %c2_144, %c0_145] : memref<5x5x128xf32, #tpu.memory_space<vmem>>, vector<1x1x128xf32>
    %165 = vector.shape_cast %164 : vector<1x1x128xf32> to vector<128xf32>
    %166 = vector.shape_cast %165 : vector<128xf32> to vector<1x1x128xf32>
    %167 = vector.broadcast %166 : vector<1x1x128xf32> to vector<8x16x128xf32>
    %168 = arith.mulf %163, %167 : vector<8x16x128xf32>
    %169 = arith.addf %162, %168 : vector<8x16x128xf32>
    %c8_146 = arith.constant 8 : index
    %c6_147 = arith.constant 6 : index
    %c0_148 = arith.constant 0 : index
    %170 = vector.load %arg6[%c8_146, %c6_147, %c0_148] : memref<24x24x128xf32, #tpu.memory_space<vmem>>, vector<8x16x128xf32>
    %c4_149 = arith.constant 4 : index
    %c3_150 = arith.constant 3 : index
    %c0_151 = arith.constant 0 : index
    %171 = vector.load %arg2[%c4_149, %c3_150, %c0_151] : memref<5x5x128xf32, #tpu.memory_space<vmem>>, vector<1x1x128xf32>
    %172 = vector.shape_cast %171 : vector<1x1x128xf32> to vector<128xf32>
    %173 = vector.shape_cast %172 : vector<128xf32> to vector<1x1x128xf32>
    %174 = vector.broadcast %173 : vector<1x1x128xf32> to vector<8x16x128xf32>
    %175 = arith.mulf %170, %174 : vector<8x16x128xf32>
    %176 = arith.addf %169, %175 : vector<8x16x128xf32>
    %c8_152 = arith.constant 8 : index
    %c8_153 = arith.constant 8 : index
    %c0_154 = arith.constant 0 : index
    %177 = vector.load %arg6[%c8_152, %c8_153, %c0_154] : memref<24x24x128xf32, #tpu.memory_space<vmem>>, vector<8x16x128xf32>
    %c4_155 = arith.constant 4 : index
    %c4_156 = arith.constant 4 : index
    %c0_157 = arith.constant 0 : index
    %178 = vector.load %arg2[%c4_155, %c4_156, %c0_157] : memref<5x5x128xf32, #tpu.memory_space<vmem>>, vector<1x1x128xf32>
    %179 = vector.shape_cast %178 : vector<1x1x128xf32> to vector<128xf32>
    %180 = vector.shape_cast %179 : vector<128xf32> to vector<1x1x128xf32>
    %181 = vector.broadcast %180 : vector<1x1x128xf32> to vector<8x16x128xf32>
    %182 = arith.mulf %177, %181 : vector<8x16x128xf32>
    %183 = arith.addf %176, %182 : vector<8x16x128xf32>
    %184 = vector.shape_cast %183 : vector<8x16x128xf32> to vector<128x128xf32>
    %cst_158 = arith.constant dense<0.000000e+00> : vector<128x64xf32>
    %185 = tpu.matmul %184, %6, %cst_158 {dimension_numbers = #tpu.dot_dimension_numbers<[1], [0], [0], [1], [0, 0, 1, 1], [], []>} : vector<128x128xf32>, vector<128x64xf32>, vector<128x64xf32> -> vector<128x64xf32>
    %186 = vector.broadcast %7 : vector<1x64xf32> to vector<128x64xf32>
    %187 = arith.addf %185, %186 : vector<128x64xf32>
    %188 = vector.shape_cast %187 : vector<128x64xf32> to vector<8x16x64xf32>
    %c0_159 = arith.constant 0 : index
    %c0_160 = arith.constant 0 : index
    %c0_161 = arith.constant 0 : index
    %c0_162 = arith.constant 0 : index
    %189 = vector.load %arg5[%c0_159, %c0_160, %c0_161, %c0_162] : memref<1x16x16x64xf32, #tpu.memory_space<vmem>>, vector<1x8x16x64xf32>
    %190 = vector.shape_cast %189 : vector<1x8x16x64xf32> to vector<8x16x64xf32>
    %191 = vector.shape_cast %188 : vector<8x16x64xf32> to vector<1x8x16x64xf32>
    tpu.vector_store %arg5[%c0_159, %c0_160, %c0_161, %c0_162], %191 {strides = array<i32>} : memref<1x16x16x64xf32, #tpu.memory_space<vmem>>, vector<1x8x16x64xf32>,
    %cst_163 = arith.constant 0.000000e+00 : f32
    %192 = vector.broadcast %cst_163 : f32 to vector<8x16x128xf32>
    %c8_164 = arith.constant 8 : index
    %c0_165 = arith.constant 0 : index
    %c0_166 = arith.constant 0 : index
    %193 = vector.load %arg6[%c8_164, %c0_165, %c0_166] : memref<24x24x128xf32, #tpu.memory_space<vmem>>, vector<8x16x128xf32>
    %c0_167 = arith.constant 0 : index
    %c0_168 = arith.constant 0 : index
    %c0_169 = arith.constant 0 : index
    %194 = vector.load %arg2[%c0_167, %c0_168, %c0_169] : memref<5x5x128xf32, #tpu.memory_space<vmem>>, vector<1x1x128xf32>
    %195 = vector.shape_cast %194 : vector<1x1x128xf32> to vector<128xf32>
    %196 = vector.shape_cast %195 : vector<128xf32> to vector<1x1x128xf32>
    %197 = vector.broadcast %196 : vector<1x1x128xf32> to vector<8x16x128xf32>
    %198 = arith.mulf %193, %197 : vector<8x16x128xf32>
    %199 = arith.addf %192, %198 : vector<8x16x128xf32>
    %c8_170 = arith.constant 8 : index
    %c2_171 = arith.constant 2 : index
    %c0_172 = arith.constant 0 : index
    %200 = vector.load %arg6[%c8_170, %c2_171, %c0_172] : memref<24x24x128xf32, #tpu.memory_space<vmem>>, vector<8x16x128xf32>
    %c0_173 = arith.constant 0 : index
    %c1_174 = arith.constant 1 : index
    %c0_175 = arith.constant 0 : index
    %201 = vector.load %arg2[%c0_173, %c1_174, %c0_175] : memref<5x5x128xf32, #tpu.memory_space<vmem>>, vector<1x1x128xf32>
    %202 = vector.shape_cast %201 : vector<1x1x128xf32> to vector<128xf32>
    %203 = vector.shape_cast %202 : vector<128xf32> to vector<1x1x128xf32>
    %204 = vector.broadcast %203 : vector<1x1x128xf32> to vector<8x16x128xf32>
    %205 = arith.mulf %200, %204 : vector<8x16x128xf32>
    %206 = arith.addf %199, %205 : vector<8x16x128xf32>
    %c8_176 = arith.constant 8 : index
    %c4_177 = arith.constant 4 : index
    %c0_178 = arith.constant 0 : index
    %207 = vector.load %arg6[%c8_176, %c4_177, %c0_178] : memref<24x24x128xf32, #tpu.memory_space<vmem>>, vector<8x16x128xf32>
    %c0_179 = arith.constant 0 : index
    %c2_180 = arith.constant 2 : index
    %c0_181 = arith.constant 0 : index
    %208 = vector.load %arg2[%c0_179, %c2_180, %c0_181] : memref<5x5x128xf32, #tpu.memory_space<vmem>>, vector<1x1x128xf32>
    %209 = vector.shape_cast %208 : vector<1x1x128xf32> to vector<128xf32>
    %210 = vector.shape_cast %209 : vector<128xf32> to vector<1x1x128xf32>
    %211 = vector.broadcast %210 : vector<1x1x128xf32> to vector<8x16x128xf32>
    %212 = arith.mulf %207, %211 : vector<8x16x128xf32>
    %213 = arith.addf %206, %212 : vector<8x16x128xf32>
    %c8_182 = arith.constant 8 : index
    %c6_183 = arith.constant 6 : index
    %c0_184 = arith.constant 0 : index
    %214 = vector.load %arg6[%c8_182, %c6_183, %c0_184] : memref<24x24x128xf32, #tpu.memory_space<vmem>>, vector<8x16x128xf32>
    %c0_185 = arith.constant 0 : index
    %c3_186 = arith.constant 3 : index
    %c0_187 = arith.constant 0 : index
    %215 = vector.load %arg2[%c0_185, %c3_186, %c0_187] : memref<5x5x128xf32, #tpu.memory_space<vmem>>, vector<1x1x128xf32>
    %216 = vector.shape_cast %215 : vector<1x1x128xf32> to vector<128xf32>
    %217 = vector.shape_cast %216 : vector<128xf32> to vector<1x1x128xf32>
    %218 = vector.broadcast %217 : vector<1x1x128xf32> to vector<8x16x128xf32>
    %219 = arith.mulf %214, %218 : vector<8x16x128xf32>
    %220 = arith.addf %213, %219 : vector<8x16x128xf32>
    %c8_188 = arith.constant 8 : index
    %c8_189 = arith.constant 8 : index
    %c0_190 = arith.constant 0 : index
    %221 = vector.load %arg6[%c8_188, %c8_189, %c0_190] : memref<24x24x128xf32, #tpu.memory_space<vmem>>, vector<8x16x128xf32>
    %c0_191 = arith.constant 0 : index
    %c4_192 = arith.constant 4 : index
    %c0_193 = arith.constant 0 : index
    %222 = vector.load %arg2[%c0_191, %c4_192, %c0_193] : memref<5x5x128xf32, #tpu.memory_space<vmem>>, vector<1x1x128xf32>
    %223 = vector.shape_cast %222 : vector<1x1x128xf32> to vector<128xf32>
    %224 = vector.shape_cast %223 : vector<128xf32> to vector<1x1x128xf32>
    %225 = vector.broadcast %224 : vector<1x1x128xf32> to vector<8x16x128xf32>
    %226 = arith.mulf %221, %225 : vector<8x16x128xf32>
    %227 = arith.addf %220, %226 : vector<8x16x128xf32>
    %c10 = arith.constant 10 : index
    %c0_194 = arith.constant 0 : index
    %c0_195 = arith.constant 0 : index
    %228 = vector.load %arg6[%c10, %c0_194, %c0_195] : memref<24x24x128xf32, #tpu.memory_space<vmem>>, vector<8x16x128xf32>
    %c1_196 = arith.constant 1 : index
    %c0_197 = arith.constant 0 : index
    %c0_198 = arith.constant 0 : index
    %229 = vector.load %arg2[%c1_196, %c0_197, %c0_198] : memref<5x5x128xf32, #tpu.memory_space<vmem>>, vector<1x1x128xf32>
    %230 = vector.shape_cast %229 : vector<1x1x128xf32> to vector<128xf32>
    %231 = vector.shape_cast %230 : vector<128xf32> to vector<1x1x128xf32>
    %232 = vector.broadcast %231 : vector<1x1x128xf32> to vector<8x16x128xf32>
    %233 = arith.mulf %228, %232 : vector<8x16x128xf32>
    %234 = arith.addf %227, %233 : vector<8x16x128xf32>
    %c10_199 = arith.constant 10 : index
    %c2_200 = arith.constant 2 : index
    %c0_201 = arith.constant 0 : index
    %235 = vector.load %arg6[%c10_199, %c2_200, %c0_201] : memref<24x24x128xf32, #tpu.memory_space<vmem>>, vector<8x16x128xf32>
    %c1_202 = arith.constant 1 : index
    %c1_203 = arith.constant 1 : index
    %c0_204 = arith.constant 0 : index
    %236 = vector.load %arg2[%c1_202, %c1_203, %c0_204] : memref<5x5x128xf32, #tpu.memory_space<vmem>>, vector<1x1x128xf32>
    %237 = vector.shape_cast %236 : vector<1x1x128xf32> to vector<128xf32>
    %238 = vector.shape_cast %237 : vector<128xf32> to vector<1x1x128xf32>
    %239 = vector.broadcast %238 : vector<1x1x128xf32> to vector<8x16x128xf32>
    %240 = arith.mulf %235, %239 : vector<8x16x128xf32>
    %241 = arith.addf %234, %240 : vector<8x16x128xf32>
    %c10_205 = arith.constant 10 : index
    %c4_206 = arith.constant 4 : index
    %c0_207 = arith.constant 0 : index
    %242 = vector.load %arg6[%c10_205, %c4_206, %c0_207] : memref<24x24x128xf32, #tpu.memory_space<vmem>>, vector<8x16x128xf32>
    %c1_208 = arith.constant 1 : index
    %c2_209 = arith.constant 2 : index
    %c0_210 = arith.constant 0 : index
    %243 = vector.load %arg2[%c1_208, %c2_209, %c0_210] : memref<5x5x128xf32, #tpu.memory_space<vmem>>, vector<1x1x128xf32>
    %244 = vector.shape_cast %243 : vector<1x1x128xf32> to vector<128xf32>
    %245 = vector.shape_cast %244 : vector<128xf32> to vector<1x1x128xf32>
    %246 = vector.broadcast %245 : vector<1x1x128xf32> to vector<8x16x128xf32>
    %247 = arith.mulf %242, %246 : vector<8x16x128xf32>
    %248 = arith.addf %241, %247 : vector<8x16x128xf32>
    %c10_211 = arith.constant 10 : index
    %c6_212 = arith.constant 6 : index
    %c0_213 = arith.constant 0 : index
    %249 = vector.load %arg6[%c10_211, %c6_212, %c0_213] : memref<24x24x128xf32, #tpu.memory_space<vmem>>, vector<8x16x128xf32>
    %c1_214 = arith.constant 1 : index
    %c3_215 = arith.constant 3 : index
    %c0_216 = arith.constant 0 : index
    %250 = vector.load %arg2[%c1_214, %c3_215, %c0_216] : memref<5x5x128xf32, #tpu.memory_space<vmem>>, vector<1x1x128xf32>
    %251 = vector.shape_cast %250 : vector<1x1x128xf32> to vector<128xf32>
    %252 = vector.shape_cast %251 : vector<128xf32> to vector<1x1x128xf32>
    %253 = vector.broadcast %252 : vector<1x1x128xf32> to vector<8x16x128xf32>
    %254 = arith.mulf %249, %253 : vector<8x16x128xf32>
    %255 = arith.addf %248, %254 : vector<8x16x128xf32>
    %c10_217 = arith.constant 10 : index
    %c8_218 = arith.constant 8 : index
    %c0_219 = arith.constant 0 : index
    %256 = vector.load %arg6[%c10_217, %c8_218, %c0_219] : memref<24x24x128xf32, #tpu.memory_space<vmem>>, vector<8x16x128xf32>
    %c1_220 = arith.constant 1 : index
    %c4_221 = arith.constant 4 : index
    %c0_222 = arith.constant 0 : index
    %257 = vector.load %arg2[%c1_220, %c4_221, %c0_222] : memref<5x5x128xf32, #tpu.memory_space<vmem>>, vector<1x1x128xf32>
    %258 = vector.shape_cast %257 : vector<1x1x128xf32> to vector<128xf32>
    %259 = vector.shape_cast %258 : vector<128xf32> to vector<1x1x128xf32>
    %260 = vector.broadcast %259 : vector<1x1x128xf32> to vector<8x16x128xf32>
    %261 = arith.mulf %256, %260 : vector<8x16x128xf32>
    %262 = arith.addf %255, %261 : vector<8x16x128xf32>
    %c12 = arith.constant 12 : index
    %c0_223 = arith.constant 0 : index
    %c0_224 = arith.constant 0 : index
    %263 = vector.load %arg6[%c12, %c0_223, %c0_224] : memref<24x24x128xf32, #tpu.memory_space<vmem>>, vector<8x16x128xf32>
    %c2_225 = arith.constant 2 : index
    %c0_226 = arith.constant 0 : index
    %c0_227 = arith.constant 0 : index
    %264 = vector.load %arg2[%c2_225, %c0_226, %c0_227] : memref<5x5x128xf32, #tpu.memory_space<vmem>>, vector<1x1x128xf32>
    %265 = vector.shape_cast %264 : vector<1x1x128xf32> to vector<128xf32>
    %266 = vector.shape_cast %265 : vector<128xf32> to vector<1x1x128xf32>
    %267 = vector.broadcast %266 : vector<1x1x128xf32> to vector<8x16x128xf32>
    %268 = arith.mulf %263, %267 : vector<8x16x128xf32>
    %269 = arith.addf %262, %268 : vector<8x16x128xf32>
    %c12_228 = arith.constant 12 : index
    %c2_229 = arith.constant 2 : index
    %c0_230 = arith.constant 0 : index
    %270 = vector.load %arg6[%c12_228, %c2_229, %c0_230] : memref<24x24x128xf32, #tpu.memory_space<vmem>>, vector<8x16x128xf32>
    %c2_231 = arith.constant 2 : index
    %c1_232 = arith.constant 1 : index
    %c0_233 = arith.constant 0 : index
    %271 = vector.load %arg2[%c2_231, %c1_232, %c0_233] : memref<5x5x128xf32, #tpu.memory_space<vmem>>, vector<1x1x128xf32>
    %272 = vector.shape_cast %271 : vector<1x1x128xf32> to vector<128xf32>
    %273 = vector.shape_cast %272 : vector<128xf32> to vector<1x1x128xf32>
    %274 = vector.broadcast %273 : vector<1x1x128xf32> to vector<8x16x128xf32>
    %275 = arith.mulf %270, %274 : vector<8x16x128xf32>
    %276 = arith.addf %269, %275 : vector<8x16x128xf32>
    %c12_234 = arith.constant 12 : index
    %c4_235 = arith.constant 4 : index
    %c0_236 = arith.constant 0 : index
    %277 = vector.load %arg6[%c12_234, %c4_235, %c0_236] : memref<24x24x128xf32, #tpu.memory_space<vmem>>, vector<8x16x128xf32>
    %c2_237 = arith.constant 2 : index
    %c2_238 = arith.constant 2 : index
    %c0_239 = arith.constant 0 : index
    %278 = vector.load %arg2[%c2_237, %c2_238, %c0_239] : memref<5x5x128xf32, #tpu.memory_space<vmem>>, vector<1x1x128xf32>
    %279 = vector.shape_cast %278 : vector<1x1x128xf32> to vector<128xf32>
    %280 = vector.shape_cast %279 : vector<128xf32> to vector<1x1x128xf32>
    %281 = vector.broadcast %280 : vector<1x1x128xf32> to vector<8x16x128xf32>
    %282 = arith.mulf %277, %281 : vector<8x16x128xf32>
    %283 = arith.addf %276, %282 : vector<8x16x128xf32>
    %c12_240 = arith.constant 12 : index
    %c6_241 = arith.constant 6 : index
    %c0_242 = arith.constant 0 : index
    %284 = vector.load %arg6[%c12_240, %c6_241, %c0_242] : memref<24x24x128xf32, #tpu.memory_space<vmem>>, vector<8x16x128xf32>
    %c2_243 = arith.constant 2 : index
    %c3_244 = arith.constant 3 : index
    %c0_245 = arith.constant 0 : index
    %285 = vector.load %arg2[%c2_243, %c3_244, %c0_245] : memref<5x5x128xf32, #tpu.memory_space<vmem>>, vector<1x1x128xf32>
    %286 = vector.shape_cast %285 : vector<1x1x128xf32> to vector<128xf32>
    %287 = vector.shape_cast %286 : vector<128xf32> to vector<1x1x128xf32>
    %288 = vector.broadcast %287 : vector<1x1x128xf32> to vector<8x16x128xf32>
    %289 = arith.mulf %284, %288 : vector<8x16x128xf32>
    %290 = arith.addf %283, %289 : vector<8x16x128xf32>
    %c12_246 = arith.constant 12 : index
    %c8_247 = arith.constant 8 : index
    %c0_248 = arith.constant 0 : index
    %291 = vector.load %arg6[%c12_246, %c8_247, %c0_248] : memref<24x24x128xf32, #tpu.memory_space<vmem>>, vector<8x16x128xf32>
    %c2_249 = arith.constant 2 : index
    %c4_250 = arith.constant 4 : index
    %c0_251 = arith.constant 0 : index
    %292 = vector.load %arg2[%c2_249, %c4_250, %c0_251] : memref<5x5x128xf32, #tpu.memory_space<vmem>>, vector<1x1x128xf32>
    %293 = vector.shape_cast %292 : vector<1x1x128xf32> to vector<128xf32>
    %294 = vector.shape_cast %293 : vector<128xf32> to vector<1x1x128xf32>
    %295 = vector.broadcast %294 : vector<1x1x128xf32> to vector<8x16x128xf32>
    %296 = arith.mulf %291, %295 : vector<8x16x128xf32>
    %297 = arith.addf %290, %296 : vector<8x16x128xf32>
    %c14 = arith.constant 14 : index
    %c0_252 = arith.constant 0 : index
    %c0_253 = arith.constant 0 : index
    %298 = vector.load %arg6[%c14, %c0_252, %c0_253] : memref<24x24x128xf32, #tpu.memory_space<vmem>>, vector<8x16x128xf32>
    %c3_254 = arith.constant 3 : index
    %c0_255 = arith.constant 0 : index
    %c0_256 = arith.constant 0 : index
    %299 = vector.load %arg2[%c3_254, %c0_255, %c0_256] : memref<5x5x128xf32, #tpu.memory_space<vmem>>, vector<1x1x128xf32>
    %300 = vector.shape_cast %299 : vector<1x1x128xf32> to vector<128xf32>
    %301 = vector.shape_cast %300 : vector<128xf32> to vector<1x1x128xf32>
    %302 = vector.broadcast %301 : vector<1x1x128xf32> to vector<8x16x128xf32>
    %303 = arith.mulf %298, %302 : vector<8x16x128xf32>
    %304 = arith.addf %297, %303 : vector<8x16x128xf32>
    %c14_257 = arith.constant 14 : index
    %c2_258 = arith.constant 2 : index
    %c0_259 = arith.constant 0 : index
    %305 = vector.load %arg6[%c14_257, %c2_258, %c0_259] : memref<24x24x128xf32, #tpu.memory_space<vmem>>, vector<8x16x128xf32>
    %c3_260 = arith.constant 3 : index
    %c1_261 = arith.constant 1 : index
    %c0_262 = arith.constant 0 : index
    %306 = vector.load %arg2[%c3_260, %c1_261, %c0_262] : memref<5x5x128xf32, #tpu.memory_space<vmem>>, vector<1x1x128xf32>
    %307 = vector.shape_cast %306 : vector<1x1x128xf32> to vector<128xf32>
    %308 = vector.shape_cast %307 : vector<128xf32> to vector<1x1x128xf32>
    %309 = vector.broadcast %308 : vector<1x1x128xf32> to vector<8x16x128xf32>
    %310 = arith.mulf %305, %309 : vector<8x16x128xf32>
    %311 = arith.addf %304, %310 : vector<8x16x128xf32>
    %c14_263 = arith.constant 14 : index
    %c4_264 = arith.constant 4 : index
    %c0_265 = arith.constant 0 : index
    %312 = vector.load %arg6[%c14_263, %c4_264, %c0_265] : memref<24x24x128xf32, #tpu.memory_space<vmem>>, vector<8x16x128xf32>
    %c3_266 = arith.constant 3 : index
    %c2_267 = arith.constant 2 : index
    %c0_268 = arith.constant 0 : index
    %313 = vector.load %arg2[%c3_266, %c2_267, %c0_268] : memref<5x5x128xf32, #tpu.memory_space<vmem>>, vector<1x1x128xf32>
    %314 = vector.shape_cast %313 : vector<1x1x128xf32> to vector<128xf32>
    %315 = vector.shape_cast %314 : vector<128xf32> to vector<1x1x128xf32>
    %316 = vector.broadcast %315 : vector<1x1x128xf32> to vector<8x16x128xf32>
    %317 = arith.mulf %312, %316 : vector<8x16x128xf32>
    %318 = arith.addf %311, %317 : vector<8x16x128xf32>
    %c14_269 = arith.constant 14 : index
    %c6_270 = arith.constant 6 : index
    %c0_271 = arith.constant 0 : index
    %319 = vector.load %arg6[%c14_269, %c6_270, %c0_271] : memref<24x24x128xf32, #tpu.memory_space<vmem>>, vector<8x16x128xf32>
    %c3_272 = arith.constant 3 : index
    %c3_273 = arith.constant 3 : index
    %c0_274 = arith.constant 0 : index
    %320 = vector.load %arg2[%c3_272, %c3_273, %c0_274] : memref<5x5x128xf32, #tpu.memory_space<vmem>>, vector<1x1x128xf32>
    %321 = vector.shape_cast %320 : vector<1x1x128xf32> to vector<128xf32>
    %322 = vector.shape_cast %321 : vector<128xf32> to vector<1x1x128xf32>
    %323 = vector.broadcast %322 : vector<1x1x128xf32> to vector<8x16x128xf32>
    %324 = arith.mulf %319, %323 : vector<8x16x128xf32>
    %325 = arith.addf %318, %324 : vector<8x16x128xf32>
    %c14_275 = arith.constant 14 : index
    %c8_276 = arith.constant 8 : index
    %c0_277 = arith.constant 0 : index
    %326 = vector.load %arg6[%c14_275, %c8_276, %c0_277] : memref<24x24x128xf32, #tpu.memory_space<vmem>>, vector<8x16x128xf32>
    %c3_278 = arith.constant 3 : index
    %c4_279 = arith.constant 4 : index
    %c0_280 = arith.constant 0 : index
    %327 = vector.load %arg2[%c3_278, %c4_279, %c0_280] : memref<5x5x128xf32, #tpu.memory_space<vmem>>, vector<1x1x128xf32>
    %328 = vector.shape_cast %327 : vector<1x1x128xf32> to vector<128xf32>
    %329 = vector.shape_cast %328 : vector<128xf32> to vector<1x1x128xf32>
    %330 = vector.broadcast %329 : vector<1x1x128xf32> to vector<8x16x128xf32>
    %331 = arith.mulf %326, %330 : vector<8x16x128xf32>
    %332 = arith.addf %325, %331 : vector<8x16x128xf32>
    %c16 = arith.constant 16 : index
    %c0_281 = arith.constant 0 : index
    %c0_282 = arith.constant 0 : index
    %333 = vector.load %arg6[%c16, %c0_281, %c0_282] : memref<24x24x128xf32, #tpu.memory_space<vmem>>, vector<8x16x128xf32>
    %c4_283 = arith.constant 4 : index
    %c0_284 = arith.constant 0 : index
    %c0_285 = arith.constant 0 : index
    %334 = vector.load %arg2[%c4_283, %c0_284, %c0_285] : memref<5x5x128xf32, #tpu.memory_space<vmem>>, vector<1x1x128xf32>
    %335 = vector.shape_cast %334 : vector<1x1x128xf32> to vector<128xf32>
    %336 = vector.shape_cast %335 : vector<128xf32> to vector<1x1x128xf32>
    %337 = vector.broadcast %336 : vector<1x1x128xf32> to vector<8x16x128xf32>
    %338 = arith.mulf %333, %337 : vector<8x16x128xf32>
    %339 = arith.addf %332, %338 : vector<8x16x128xf32>
    %c16_286 = arith.constant 16 : index
    %c2_287 = arith.constant 2 : index
    %c0_288 = arith.constant 0 : index
    %340 = vector.load %arg6[%c16_286, %c2_287, %c0_288] : memref<24x24x128xf32, #tpu.memory_space<vmem>>, vector<8x16x128xf32>
    %c4_289 = arith.constant 4 : index
    %c1_290 = arith.constant 1 : index
    %c0_291 = arith.constant 0 : index
    %341 = vector.load %arg2[%c4_289, %c1_290, %c0_291] : memref<5x5x128xf32, #tpu.memory_space<vmem>>, vector<1x1x128xf32>
    %342 = vector.shape_cast %341 : vector<1x1x128xf32> to vector<128xf32>
    %343 = vector.shape_cast %342 : vector<128xf32> to vector<1x1x128xf32>
    %344 = vector.broadcast %343 : vector<1x1x128xf32> to vector<8x16x128xf32>
    %345 = arith.mulf %340, %344 : vector<8x16x128xf32>
    %346 = arith.addf %339, %345 : vector<8x16x128xf32>
    %c16_292 = arith.constant 16 : index
    %c4_293 = arith.constant 4 : index
    %c0_294 = arith.constant 0 : index
    %347 = vector.load %arg6[%c16_292, %c4_293, %c0_294] : memref<24x24x128xf32, #tpu.memory_space<vmem>>, vector<8x16x128xf32>
    %c4_295 = arith.constant 4 : index
    %c2_296 = arith.constant 2 : index
    %c0_297 = arith.constant 0 : index
    %348 = vector.load %arg2[%c4_295, %c2_296, %c0_297] : memref<5x5x128xf32, #tpu.memory_space<vmem>>, vector<1x1x128xf32>
    %349 = vector.shape_cast %348 : vector<1x1x128xf32> to vector<128xf32>
    %350 = vector.shape_cast %349 : vector<128xf32> to vector<1x1x128xf32>
    %351 = vector.broadcast %350 : vector<1x1x128xf32> to vector<8x16x128xf32>
    %352 = arith.mulf %347, %351 : vector<8x16x128xf32>
    %353 = arith.addf %346, %352 : vector<8x16x128xf32>
    %c16_298 = arith.constant 16 : index
    %c6_299 = arith.constant 6 : index
    %c0_300 = arith.constant 0 : index
    %354 = vector.load %arg6[%c16_298, %c6_299, %c0_300] : memref<24x24x128xf32, #tpu.memory_space<vmem>>, vector<8x16x128xf32>
    %c4_301 = arith.constant 4 : index
    %c3_302 = arith.constant 3 : index
    %c0_303 = arith.constant 0 : index
    %355 = vector.load %arg2[%c4_301, %c3_302, %c0_303] : memref<5x5x128xf32, #tpu.memory_space<vmem>>, vector<1x1x128xf32>
    %356 = vector.shape_cast %355 : vector<1x1x128xf32> to vector<128xf32>
    %357 = vector.shape_cast %356 : vector<128xf32> to vector<1x1x128xf32>
    %358 = vector.broadcast %357 : vector<1x1x128xf32> to vector<8x16x128xf32>
    %359 = arith.mulf %354, %358 : vector<8x16x128xf32>
    %360 = arith.addf %353, %359 : vector<8x16x128xf32>
    %c16_304 = arith.constant 16 : index
    %c8_305 = arith.constant 8 : index
    %c0_306 = arith.constant 0 : index
    %361 = vector.load %arg6[%c16_304, %c8_305, %c0_306] : memref<24x24x128xf32, #tpu.memory_space<vmem>>, vector<8x16x128xf32>
    %c4_307 = arith.constant 4 : index
    %c4_308 = arith.constant 4 : index
    %c0_309 = arith.constant 0 : index
    %362 = vector.load %arg2[%c4_307, %c4_308, %c0_309] : memref<5x5x128xf32, #tpu.memory_space<vmem>>, vector<1x1x128xf32>
    %363 = vector.shape_cast %362 : vector<1x1x128xf32> to vector<128xf32>
    %364 = vector.shape_cast %363 : vector<128xf32> to vector<1x1x128xf32>
    %365 = vector.broadcast %364 : vector<1x1x128xf32> to vector<8x16x128xf32>
    %366 = arith.mulf %361, %365 : vector<8x16x128xf32>
    %367 = arith.addf %360, %366 : vector<8x16x128xf32>
    %368 = vector.shape_cast %367 : vector<8x16x128xf32> to vector<128x128xf32>
    %cst_310 = arith.constant dense<0.000000e+00> : vector<128x64xf32>
    %369 = tpu.matmul %368, %6, %cst_310 {dimension_numbers = #tpu.dot_dimension_numbers<[1], [0], [0], [1], [0, 0, 1, 1], [], []>} : vector<128x128xf32>, vector<128x64xf32>, vector<128x64xf32> -> vector<128x64xf32>
    %370 = vector.broadcast %7 : vector<1x64xf32> to vector<128x64xf32>
    %371 = arith.addf %369, %370 : vector<128x64xf32>
    %372 = vector.shape_cast %371 : vector<128x64xf32> to vector<8x16x64xf32>
    %c0_311 = arith.constant 0 : index
    %c8_312 = arith.constant 8 : index
    %c0_313 = arith.constant 0 : index
    %c0_314 = arith.constant 0 : index
    %373 = vector.load %arg5[%c0_311, %c8_312, %c0_313, %c0_314] : memref<1x16x16x64xf32, #tpu.memory_space<vmem>>, vector<1x8x16x64xf32>
    %374 = vector.shape_cast %373 : vector<1x8x16x64xf32> to vector<8x16x64xf32>
    %375 = vector.shape_cast %372 : vector<8x16x64xf32> to vector<1x8x16x64xf32>
    tpu.vector_store %arg5[%c0_311, %c8_312, %c0_313, %c0_314], %375 {strides = array<i32>} : memref<1x16x16x64xf32, #tpu.memory_space<vmem>>, vector<1x8x16x64xf32>,
    return
  }
  func.func @transform_0(%arg0: i32) -> (i32, i32, i32, i32) {
    %c0_i32 = arith.constant 0 : i32
    %c0_i32_0 = arith.constant 0 : i32
    %c0_i32_1 = arith.constant 0 : i32
    %c0_i32_2 = arith.constant 0 : i32
    return %arg0, %c0_i32, %c0_i32_0, %c0_i32_1 : i32, i32, i32, i32
  }
  func.func @transform_1(%arg0: i32) -> (i32, i32, i32) {
    %c0_i32 = arith.constant 0 : i32
    %c0_i32_0 = arith.constant 0 : i32
    %c0_i32_1 = arith.constant 0 : i32
    %c0_i32_2 = arith.constant 0 : i32
    return %c0_i32, %c0_i32_0, %c0_i32_1 : i32, i32, i32
  }
  func.func @transform_2(%arg0: i32) -> (i32, i32) {
    %c0_i32 = arith.constant 0 : i32
    %c0_i32_0 = arith.constant 0 : i32
    %c0_i32_1 = arith.constant 0 : i32
    return %c0_i32, %c0_i32_0 : i32, i32
  }
  func.func @transform_3(%arg0: i32) -> (i32, i32) {
    %c0_i32 = arith.constant 0 : i32
    %c0_i32_0 = arith.constant 0 : i32
    %c0_i32_1 = arith.constant 0 : i32
    return %c0_i32, %c0_i32_0 : i32, i32
  }
  func.func @transform_4(%arg0: i32) -> (i32, i32, i32, i32) {
    %c0_i32 = arith.constant 0 : i32
    %c0_i32_0 = arith.constant 0 : i32
    %c0_i32_1 = arith.constant 0 : i32
    %c0_i32_2 = arith.constant 0 : i32
    return %arg0, %c0_i32, %c0_i32_0, %c0_i32_1 : i32, i32, i32, i32
  }
}

</mosaic_0001>

<llo_original>
// kernel: custom_conv_block.1
$region0: #{custom_conv_block.1}
  #allocation0 [shape = 'u32[]', space=smem, size = 0x4, offset = 0x4, fixed_abs, tag = 'smem constant byte address 0x4 - core index']
  #allocation1 [shape = 'u32[144,128]{1,0:T(1,128)}', space=vmem, size = 0x12000, scoped, tag = 'internal scratch']
  #allocation2 [shape = 'f32[24,24,128]{2,1,0:T(8,128)}', space=vmem, size = 0x48000, scoped, tag = 'scratch operand']
  %s0 = inlined_call_operand.vmem [shape: f32[2,16,16,64], index: 0, kind: input, shape index: {}]
  %s1 = inlined_call_operand.vmem [shape: f32[5,5,128], index: 1, kind: input, shape index: {}]
  %s2 = inlined_call_operand.vmem [shape: f32[128,64], index: 2, kind: input, shape index: {}]
  %s3 = inlined_call_operand.vmem [shape: f32[1,64], index: 3, kind: input, shape index: {}]
  %s4 = inlined_call_operand.hbm [shape: f32[2,16,16,64], index: 4, kind: output, shape index: {}]
  %s5 = sld [smem:[#allocation0]]
  $region49: #{custom_conv_block.1} parent=0
    _
  %s7 = ssub.s32 1, %s5
  %s8 = scalar_select 0, %s7, %s5
  $region1: #{custom_conv_block.1} parent=0
    #allocation3 [shape = 'u8[262144]{0}', space=vmem, size = 0x40000, scoped, tag = 'output window, operand 0']
    #allocation4 [shape = 's32[2]{0}', space=sflag, size = 0x8, scoped, tag = 'scoped memory for custom_conv_block.1']
    %9 = vsyncpa [#allocation4], 0
    %s10 = scalar_lea.sflag [#allocation4], 1
    %11 = vsyncpa %s10, 0
    loop: start=0, step=1, limit=4
    $region2: #{custom_conv_block.1} parent=1 // loop_pre_header
      _
    $region3: #{custom_conv_block.1} parent=1 // loop_header
      %s13 = sphi 0, %s17
      %p14 = scmp.ge.s32.totalorder %s13, 4
      %s23 = sphi 0, %s25
      %s26 = sphi 0, %s23
      %s27 = sphi 0, %s26
      %s43 = sphi 0, %s27
      %s47 = sphi 0, %s47
      %s49 = sphi 0, %s47
      %s50 = sphi 0, %s49
      %s64 = sphi 0, %s50
      %s68 = sphi 0, %s68
      %s70 = sphi 0, %s68
      %s71 = sphi 0, %s70
      %s85 = sphi 0, %s71
      %s89 = sphi 0, %s89
      %s91 = sphi 0, %s89
      %s92 = sphi 0, %s91
      %s106 = sphi 0, %s92
      %s112 = sphi 0, %s114
      %s115 = sphi 0, %s112
      %s116 = sphi 0, %s115
      %s132 = sphi 0, %s116
    $region4: #{custom_conv_block.1} parent=1 // loop_header_branch
      %16 = sbr.rel (%p14) target = $region8
    $region5: #{custom_conv_block.1} parent=1 // loop_body
      %s18 = ssub.s32 %s13, 1
      %s19 = ssub.s32 %s13, 2
      %s20 = sadd.s32 %s13, 1
      %s21 = ssub.s32 %s13, %s20
      %p22 = scmp.eq.s32.totalorder %s21, 0
      %s24 = sadd.s32 %s23, 1
      %s25 = scalar_select %p22, %s23, %s24
      %p28 = pneg %p22
      %p29 = scmp.eq.s32.totalorder %s13, 1
      %p30 = por %p28, %p29
      %p31 = scmp.ne.s32.totalorder %s23, %s26
      %p32 = scmp.eq.s32.totalorder %s13, 0
      %p33 = por %p31, %p32
      %p34 = scmp.ne.s32.totalorder %s23, %s26
      %p35 = scmp.eq.s32.totalorder %s18, 1
      %p36 = por %p34, %p35
      %p37 = scmp.ne.s32.totalorder %s26, %s27
      %p38 = scmp.eq.s32.totalorder %s18, 0
      %p39 = por %p37, %p38
      %p40 = scmp.ne.s32.totalorder %s26, %s27
      %p41 = scmp.eq.s32.totalorder %s19, 1
      %p42 = por %p40, %p41
      %p44 = scmp.ne.s32.totalorder %s27, %s43
      %p45 = scmp.eq.s32.totalorder %s19, 0
      %p46 = por %p44, %p45
      %s48 = sadd.s32 %s47, 1
      %p51 = scmp.eq.s32.totalorder %s13, 1
      %p52 = scmp.ne.s32.totalorder %s47, %s49
      %p53 = scmp.eq.s32.totalorder %s13, 0
      %p54 = por %p52, %p53
      %p55 = scmp.ne.s32.totalorder %s47, %s49
      %p56 = scmp.eq.s32.totalorder %s18, 1
      %p57 = por %p55, %p56
      %p58 = scmp.ne.s32.totalorder %s49, %s50
      %p59 = scmp.eq.s32.totalorder %s18, 0
      %p60 = por %p58, %p59
      %p61 = scmp.ne.s32.totalorder %s49, %s50
      %p62 = scmp.eq.s32.totalorder %s19, 1
      %p63 = por %p61, %p62
      %p65 = scmp.ne.s32.totalorder %s50, %s64
      %p66 = scmp.eq.s32.totalorder %s19, 0
      %p67 = por %p65, %p66
      %s69 = sadd.s32 %s68, 1
      %p72 = scmp.eq.s32.totalorder %s13, 1
      %p73 = scmp.ne.s32.totalorder %s68, %s70
      %p74 = scmp.eq.s32.totalorder %s13, 0
      %p75 = por %p73, %p74
      %p76 = scmp.ne.s32.totalorder %s68, %s70
      %p77 = scmp.eq.s32.totalorder %s18, 1
      %p78 = por %p76, %p77
      %p79 = scmp.ne.s32.totalorder %s70, %s71
      %p80 = scmp.eq.s32.totalorder %s18, 0
      %p81 = por %p79, %p80
      %p82 = scmp.ne.s32.totalorder %s70, %s71
      %p83 = scmp.eq.s32.totalorder %s19, 1
      %p84 = por %p82, %p83
      %p86 = scmp.ne.s32.totalorder %s71, %s85
      %p87 = scmp.eq.s32.totalorder %s19, 0
      %p88 = por %p86, %p87
      %s90 = sadd.s32 %s89, 1
      %p93 = scmp.eq.s32.totalorder %s13, 1
      %p94 = scmp.ne.s32.totalorder %s89, %s91
      %p95 = scmp.eq.s32.totalorder %s13, 0
      %p96 = por %p94, %p95
      %p97 = scmp.ne.s32.totalorder %s89, %s91
      %p98 = scmp.eq.s32.totalorder %s18, 1
      %p99 = por %p97, %p98
      %p100 = scmp.ne.s32.totalorder %s91, %s92
      %p101 = scmp.eq.s32.totalorder %s18, 0
      %p102 = por %p100, %p101
      %p103 = scmp.ne.s32.totalorder %s91, %s92
      %p104 = scmp.eq.s32.totalorder %s19, 1
      %p105 = por %p103, %p104
      %p107 = scmp.ne.s32.totalorder %s92, %s106
      %p108 = scmp.eq.s32.totalorder %s19, 0
      %p109 = por %p107, %p108
      %s110 = ssub.s32 %s13, %s20
      %p111 = scmp.eq.s32.totalorder %s110, 0
      %s113 = sadd.s32 %s112, 1
      %s114 = scalar_select %p111, %s112, %s113
      %p117 = pneg %p111
      %p118 = scmp.eq.s32.totalorder %s13, 1
      %p119 = por %p117, %p118
      %p120 = scmp.ne.s32.totalorder %s112, %s115
      %p121 = scmp.eq.s32.totalorder %s13, 0
      %p122 = por %p120, %p121
      %p123 = scmp.ne.s32.totalorder %s112, %s115
      %p124 = scmp.eq.s32.totalorder %s18, 1
      %p125 = por %p123, %p124
      %p126 = scmp.ne.s32.totalorder %s115, %s116
      %p127 = scmp.eq.s32.totalorder %s18, 0
      %p128 = por %p126, %p127
      %p129 = scmp.ne.s32.totalorder %s115, %s116
      %p130 = scmp.eq.s32.totalorder %s19, 1
      %p131 = por %p129, %p130
      %p133 = scmp.ne.s32.totalorder %s116, %s132
      %p134 = scmp.eq.s32.totalorder %s19, 0
      %p135 = por %p133, %p134
      %p136 = scmp.le.s32.totalorder 1, %s13
      %p137 = scmp.lt.s32.totalorder %s13, 3
      %p138 = pnand %p136, %p137
      %p139 = pneg %p138
      // Predicated region
      $region9: #{custom_conv_block.1} parent=5 // pred_check
        _
      $region10: #{custom_conv_block.1} parent=5 // pred_check_branch
        %141 = sbr.rel (%p138) target = $region12
      $region11: #{custom_conv_block.1} parent=5 // pred_region
        %s142 = ssub.s32 %s13, 1
        // Predicated region
        $region13: #{custom_conv_block.1} parent=11 // pred_check
          %p143 = pneg %p60
        $region14: #{custom_conv_block.1} parent=11 // pred_check_branch
          %145 = sbr.rel (%p143) target = $region16
        $region15: #{custom_conv_block.1} parent=11 // pred_region
          _
        $region16: #{custom_conv_block.1} parent=11 // pred_fallthru
          _
        // Predicated region
        $region17: #{custom_conv_block.1} parent=11 // pred_check
          %p146 = pneg %p81
        $region18: #{custom_conv_block.1} parent=11 // pred_check_branch
          %148 = sbr.rel (%p146) target = $region20
        $region19: #{custom_conv_block.1} parent=11 // pred_region
          _
        $region20: #{custom_conv_block.1} parent=11 // pred_fallthru
          _
        // Predicated region
        $region21: #{custom_conv_block.1} parent=11 // pred_check
          %p149 = pneg %p102
        $region22: #{custom_conv_block.1} parent=11 // pred_check_branch
          %151 = sbr.rel (%p149) target = $region24
        $region23: #{custom_conv_block.1} parent=11 // pred_region
          _
        $region24: #{custom_conv_block.1} parent=11 // pred_fallthru
          _
      $region12: #{custom_conv_block.1} parent=5 // pred_fallthru
        _
      %p152 = scmp.lt.s32.totalorder %s13, 2
      // Predicated region
      $region25: #{custom_conv_block.1} parent=5 // pred_check
        %p153 = pneg %p152
      $region26: #{custom_conv_block.1} parent=5 // pred_check_branch
        %155 = sbr.rel (%p153) target = $region28
      $region27: #{custom_conv_block.1} parent=5 // pred_region
        // Predicated region
        $region29: #{custom_conv_block.1} parent=27 // pred_check
          %p156 = pneg %p33
        $region30: #{custom_conv_block.1} parent=27 // pred_check_branch
          %158 = sbr.rel (%p156) target = $region32
        $region31: #{custom_conv_block.1} parent=27 // pred_region
          %p159 = scmp.lt.s32.totalorder %s13, 1
          %s160 = scalar_select %p159, %s13, 1
          %s161 = smul.addr %s160, 32
          %s162 = smul.addr %s161, 8
          %s163 = scalar_lea.vmem %s0, %s162
        $region32: #{custom_conv_block.1} parent=27 // pred_fallthru
          _
      $region28: #{custom_conv_block.1} parent=5 // pred_fallthru
        _
      %p164 = scmp.le.s32.totalorder 1, %s13
      %p165 = scmp.lt.s32.totalorder %s13, 3
      %p166 = pnand %p164, %p165
      %p167 = pneg %p166
      // Predicated region
      $region33: #{custom_conv_block.1} parent=5 // pred_check
        _
      $region34: #{custom_conv_block.1} parent=5 // pred_check_branch
        %169 = sbr.rel (%p166) target = $region36
      $region35: #{custom_conv_block.1} parent=5 // pred_region
        %s170 = ssub.s32 %s13, 1
        %p171 = scmp.lt.s32.totalorder %s18, 1
        %s172 = scalar_select %p171, %s18, 1
        %s173 = smul.addr %s172, 32
        %s174 = smul.addr %s173, 8
        %s175 = scalar_lea.vmem %s0, %s174
        %p176 = pneg %p39
        %p177 = pneg %p36
        %p178 = pneg %p60
        %p179 = pneg %p57
        %p180 = pneg %p81
        %p181 = pneg %p78
        %p182 = pneg %p102
        %p183 = pneg %p99
        %p184 = pneg %p128
        %p185 = pneg %p125
        %s186 = sand.u32 %s115, 1
        %s187 = scalar_lea.sflag [#allocation4], %s186
        %s188 = sand.u32 %s115, 1
        %s189 = smul.addr %s188, 256
        %s190 = scalar_lea.vmem [#allocation3], %s189
        %p191 = scmp.lt.s32.totalorder %s18, 1
        %s192 = scalar_select %p191, %s18, 1
        %s193 = smul.addr %s192, 32
        %s194 = smul.addr %s193, 8
        %s195 = scalar_lea.vmem %s0, %s194
        %196 = vst [vmem:[#allocation2] sm:$0xff] 0.0
        %197 = vst [vmem:[#allocation2 + $0x8] sm:$0xff] 0.0
        %198 = vst [vmem:[#allocation2 + $0x10] sm:$0xff] 0.0
        %199 = vst [vmem:[#allocation2 + $0x18] sm:$0xff] 0.0
        %200 = vst [vmem:[#allocation2 + $0x20] sm:$0xff] 0.0
        %201 = vst [vmem:[#allocation2 + $0x28] sm:$0xff] 0.0
        %202 = vst [vmem:[#allocation2 + $0x30] sm:$0xff] 0.0
        %203 = vst [vmem:[#allocation2 + $0x38] sm:$0xff] 0.0
        %204 = vst [vmem:[#allocation2 + $0x40] sm:$0xff] 0.0
        %205 = vst [vmem:[#allocation2 + $0x48] sm:$0xff] 0.0
        %206 = vst [vmem:[#allocation2 + $0x50] sm:$0xff] 0.0
        %207 = vst [vmem:[#allocation2 + $0x58] sm:$0xff] 0.0
        %208 = vst [vmem:[#allocation2 + $0x60] sm:$0xff] 0.0
        %209 = vst [vmem:[#allocation2 + $0x68] sm:$0xff] 0.0
        %210 = vst [vmem:[#allocation2 + $0x70] sm:$0xff] 0.0
        %211 = vst [vmem:[#allocation2 + $0x78] sm:$0xff] 0.0
        %212 = vst [vmem:[#allocation2 + $0x80] sm:$0xff] 0.0
        %213 = vst [vmem:[#allocation2 + $0x88] sm:$0xff] 0.0
        %214 = vst [vmem:[#allocation2 + $0x90] sm:$0xff] 0.0
        %215 = vst [vmem:[#allocation2 + $0x98] sm:$0xff] 0.0
        %216 = vst [vmem:[#allocation2 + $0xa0] sm:$0xff] 0.0
        %217 = vst [vmem:[#allocation2 + $0xa8] sm:$0xff] 0.0
        %218 = vst [vmem:[#allocation2 + $0xb0] sm:$0xff] 0.0
        %219 = vst [vmem:[#allocation2 + $0xb8] sm:$0xff] 0.0
        %220 = vst [vmem:[#allocation2 + $0xc0] sm:$0xff] 0.0
        %221 = vst [vmem:[#allocation2 + $0xc8] sm:$0xff] 0.0
        %222 = vst [vmem:[#allocation2 + $0xd0] sm:$0xff] 0.0
        %223 = vst [vmem:[#allocation2 + $0xd8] sm:$0xff] 0.0
        %224 = vst [vmem:[#allocation2 + $0xe0] sm:$0xff] 0.0
        %225 = vst [vmem:[#allocation2 + $0xe8] sm:$0xff] 0.0
        %226 = vst [vmem:[#allocation2 + $0xf0] sm:$0xff] 0.0
        %227 = vst [vmem:[#allocation2 + $0xf8] sm:$0xff] 0.0
        %228 = vst [vmem:[#allocation2 + $0x100] sm:$0xff] 0.0
        %229 = vst [vmem:[#allocation2 + $0x108] sm:$0xff] 0.0
        %230 = vst [vmem:[#allocation2 + $0x110] sm:$0xff] 0.0
        %231 = vst [vmem:[#allocation2 + $0x118] sm:$0xff] 0.0
        %232 = vst [vmem:[#allocation2 + $0x120] sm:$0xff] 0.0
        %233 = vst [vmem:[#allocation2 + $0x128] sm:$0xff] 0.0
        %234 = vst [vmem:[#allocation2 + $0x130] sm:$0xff] 0.0
        %235 = vst [vmem:[#allocation2 + $0x138] sm:$0xff] 0.0
        %236 = vst [vmem:[#allocation2 + $0x140] sm:$0xff] 0.0
        %237 = vst [vmem:[#allocation2 + $0x148] sm:$0xff] 0.0
        %238 = vst [vmem:[#allocation2 + $0x150] sm:$0xff] 0.0
        %239 = vst [vmem:[#allocation2 + $0x158] sm:$0xff] 0.0
        %240 = vst [vmem:[#allocation2 + $0x160] sm:$0xff] 0.0
        %241 = vst [vmem:[#allocation2 + $0x168] sm:$0xff] 0.0
        %242 = vst [vmem:[#allocation2 + $0x170] sm:$0xff] 0.0
        %243 = vst [vmem:[#allocation2 + $0x178] sm:$0xff] 0.0
        %244 = vst [vmem:[#allocation2 + $0x180] sm:$0xff] 0.0
        %245 = vst [vmem:[#allocation2 + $0x188] sm:$0xff] 0.0
        %246 = vst [vmem:[#allocation2 + $0x190] sm:$0xff] 0.0
        %247 = vst [vmem:[#allocation2 + $0x198] sm:$0xff] 0.0
        %248 = vst [vmem:[#allocation2 + $0x1a0] sm:$0xff] 0.0
        %249 = vst [vmem:[#allocation2 + $0x1a8] sm:$0xff] 0.0
        %250 = vst [vmem:[#allocation2 + $0x1b0] sm:$0xff] 0.0
        %251 = vst [vmem:[#allocation2 + $0x1b8] sm:$0xff] 0.0
        %252 = vst [vmem:[#allocation2 + $0x1c0] sm:$0xff] 0.0
        %253 = vst [vmem:[#allocation2 + $0x1c8] sm:$0xff] 0.0
        %254 = vst [vmem:[#allocation2 + $0x1d0] sm:$0xff] 0.0
        %255 = vst [vmem:[#allocation2 + $0x1d8] sm:$0xff] 0.0
        %256 = vst [vmem:[#allocation2 + $0x1e0] sm:$0xff] 0.0
        %257 = vst [vmem:[#allocation2 + $0x1e8] sm:$0xff] 0.0
        %258 = vst [vmem:[#allocation2 + $0x1f0] sm:$0xff] 0.0
        %259 = vst [vmem:[#allocation2 + $0x1f8] sm:$0xff] 0.0
        %260 = vst [vmem:[#allocation2 + $0x200] sm:$0xff] 0.0
        %261 = vst [vmem:[#allocation2 + $0x208] sm:$0xff] 0.0
        %262 = vst [vmem:[#allocation2 + $0x210] sm:$0xff] 0.0
        %263 = vst [vmem:[#allocation2 + $0x218] sm:$0xff] 0.0
        %264 = vst [vmem:[#allocation2 + $0x220] sm:$0xff] 0.0
        %265 = vst [vmem:[#allocation2 + $0x228] sm:$0xff] 0.0
        %266 = vst [vmem:[#allocation2 + $0x230] sm:$0xff] 0.0
        %267 = vst [vmem:[#allocation2 + $0x238] sm:$0xff] 0.0
        %v268 = vld [vmem:[%s195] sm:$0xff]
        %v269 = vld [vmem:[%s195 + $0x8] sm:$0xff]
        %v270 = vld [vmem:[%s195 + $0x10] sm:$0xff]
        %v271 = vld [vmem:[%s195 + $0x18] sm:$0xff]
        %v272 = vld [vmem:[%s195 + $0x20] sm:$0xff]
        %v273 = vld [vmem:[%s195 + $0x28] sm:$0xff]
        %v274 = vld [vmem:[%s195 + $0x30] sm:$0xff]
        %v275 = vld [vmem:[%s195 + $0x38] sm:$0xff]
        %v276 = vld [vmem:[%s195 + $0x40] sm:$0xff]
        %v277 = vld [vmem:[%s195 + $0x48] sm:$0xff]
        %v278 = vld [vmem:[%s195 + $0x50] sm:$0xff]
        %v279 = vld [vmem:[%s195 + $0x58] sm:$0xff]
        %v280 = vld [vmem:[%s195 + $0x60] sm:$0xff]
        %v281 = vld [vmem:[%s195 + $0x68] sm:$0xff]
        %v282 = vld [vmem:[%s195 + $0x70] sm:$0xff]
        %v283 = vld [vmem:[%s195 + $0x78] sm:$0xff]
        %v284 = vld [vmem:[%s195 + $0x80] sm:$0xff]
        %v285 = vld [vmem:[%s195 + $0x88] sm:$0xff]
        %v286 = vld [vmem:[%s195 + $0x90] sm:$0xff]
        %v287 = vld [vmem:[%s195 + $0x98] sm:$0xff]
        %v288 = vld [vmem:[%s195 + $0xa0] sm:$0xff]
        %v289 = vld [vmem:[%s195 + $0xa8] sm:$0xff]
        %v290 = vld [vmem:[%s195 + $0xb0] sm:$0xff]
        %v291 = vld [vmem:[%s195 + $0xb8] sm:$0xff]
        %v292 = vld [vmem:[%s195 + $0xc0] sm:$0xff]
        %v293 = vld [vmem:[%s195 + $0xc8] sm:$0xff]
        %v294 = vld [vmem:[%s195 + $0xd0] sm:$0xff]
        %v295 = vld [vmem:[%s195 + $0xd8] sm:$0xff]
        %v296 = vld [vmem:[%s195 + $0xe0] sm:$0xff]
        %v297 = vld [vmem:[%s195 + $0xe8] sm:$0xff]
        %v298 = vld [vmem:[%s195 + $0xf0] sm:$0xff]
        %v299 = vld [vmem:[%s195 + $0xf8] sm:$0xff]
        %332 = vrot.lane.b32.xlu0 %v268, 64
        %v333 = vpop.permute.xlu0 %332
        %334 = vrot.lane.b32.xlu0 %v269, 64
        %v335 = vpop.permute.xlu0 %334
        %336 = vrot.lane.b32.xlu0 %v270, 64
        %v337 = vpop.permute.xlu0 %336
        %338 = vrot.lane.b32.xlu0 %v271, 64
        %v339 = vpop.permute.xlu0 %338
        %340 = vrot.lane.b32.xlu0 %v272, 64
        %v341 = vpop.permute.xlu0 %340
        %342 = vrot.lane.b32.xlu0 %v273, 64
        %v343 = vpop.permute.xlu0 %342
        %344 = vrot.lane.b32.xlu0 %v274, 64
        %v345 = vpop.permute.xlu0 %344
        %346 = vrot.lane.b32.xlu0 %v275, 64
        %v347 = vpop.permute.xlu0 %346
        %348 = vrot.lane.b32.xlu0 %v276, 64
        %v349 = vpop.permute.xlu0 %348
        %350 = vrot.lane.b32.xlu0 %v277, 64
        %v351 = vpop.permute.xlu0 %350
        %352 = vrot.lane.b32.xlu0 %v278, 64
        %v353 = vpop.permute.xlu0 %352
        %354 = vrot.lane.b32.xlu0 %v279, 64
        %v355 = vpop.permute.xlu0 %354
        %356 = vrot.lane.b32.xlu0 %v280, 64
        %v357 = vpop.permute.xlu0 %356
        %358 = vrot.lane.b32.xlu0 %v281, 64
        %v359 = vpop.permute.xlu0 %358
        %360 = vrot.lane.b32.xlu0 %v282, 64
        %v361 = vpop.permute.xlu0 %360
        %362 = vrot.lane.b32.xlu0 %v283, 64
        %v363 = vpop.permute.xlu0 %362
        %364 = vrot.lane.b32.xlu0 %v284, 64
        %v365 = vpop.permute.xlu0 %364
        %366 = vrot.lane.b32.xlu0 %v285, 64
        %v367 = vpop.permute.xlu0 %366
        %368 = vrot.lane.b32.xlu0 %v286, 64
        %v369 = vpop.permute.xlu0 %368
        %370 = vrot.lane.b32.xlu0 %v287, 64
        %v371 = vpop.permute.xlu0 %370
        %372 = vrot.lane.b32.xlu0 %v288, 64
        %v373 = vpop.permute.xlu0 %372
        %374 = vrot.lane.b32.xlu0 %v289, 64
        %v375 = vpop.permute.xlu0 %374
        %376 = vrot.lane.b32.xlu0 %v290, 64
        %v377 = vpop.permute.xlu0 %376
        %378 = vrot.lane.b32.xlu0 %v291, 64
        %v379 = vpop.permute.xlu0 %378
        %380 = vrot.lane.b32.xlu0 %v292, 64
        %v381 = vpop.permute.xlu0 %380
        %382 = vrot.lane.b32.xlu0 %v293, 64
        %v383 = vpop.permute.xlu0 %382
        %384 = vrot.lane.b32.xlu0 %v294, 64
        %v385 = vpop.permute.xlu0 %384
        %386 = vrot.lane.b32.xlu0 %v295, 64
        %v387 = vpop.permute.xlu0 %386
        %388 = vrot.lane.b32.xlu0 %v296, 64
        %v389 = vpop.permute.xlu0 %388
        %390 = vrot.lane.b32.xlu0 %v297, 64
        %v391 = vpop.permute.xlu0 %390
        %392 = vrot.lane.b32.xlu0 %v298, 64
        %v393 = vpop.permute.xlu0 %392
        %394 = vrot.lane.b32.xlu0 %v299, 64
        %v395 = vpop.permute.xlu0 %394
        %vm428 = vcmask 523264
        %v429 = vsel %vm428, %v268, %v333
        %v430 = vsel %vm428, %v269, %v335
        %v431 = vsel %vm428, %v270, %v337
        %v432 = vsel %vm428, %v271, %v339
        %v433 = vsel %vm428, %v272, %v341
        %v434 = vsel %vm428, %v273, %v343
        %v435 = vsel %vm428, %v274, %v345
        %v436 = vsel %vm428, %v275, %v347
        %v437 = vsel %vm428, %v276, %v349
        %v438 = vsel %vm428, %v277, %v351
        %v439 = vsel %vm428, %v278, %v353
        %v440 = vsel %vm428, %v279, %v355
        %v441 = vsel %vm428, %v280, %v357
        %v442 = vsel %vm428, %v281, %v359
        %v443 = vsel %vm428, %v282, %v361
        %v444 = vsel %vm428, %v283, %v363
        %v445 = vsel %vm428, %v284, %v365
        %v446 = vsel %vm428, %v285, %v367
        %v447 = vsel %vm428, %v286, %v369
        %v448 = vsel %vm428, %v287, %v371
        %v449 = vsel %vm428, %v288, %v373
        %v450 = vsel %vm428, %v289, %v375
        %v451 = vsel %vm428, %v290, %v377
        %v452 = vsel %vm428, %v291, %v379
        %v453 = vsel %vm428, %v292, %v381
        %v454 = vsel %vm428, %v293, %v383
        %v455 = vsel %vm428, %v294, %v385
        %v456 = vsel %vm428, %v295, %v387
        %v457 = vsel %vm428, %v296, %v389
        %v458 = vsel %vm428, %v297, %v391
        %v459 = vsel %vm428, %v298, %v393
        %v460 = vsel %vm428, %v299, %v395
        %s461 = scalar_lea.vmem [#allocation2], 96
        %462 = vst [vmem:[%s461 + $0x4] sm:$0xff] %v429
        %463 = vst [vmem:[%s461 + $0xc] sm:$0xff] %v430
        %464 = vst [vmem:[%s461 + $0x1c] sm:$0xff] %v431
        %465 = vst [vmem:[%s461 + $0x24] sm:$0xff] %v432
        %466 = vst [vmem:[%s461 + $0x34] sm:$0xff] %v433
        %467 = vst [vmem:[%s461 + $0x3c] sm:$0xff] %v434
        %468 = vst [vmem:[%s461 + $0x4c] sm:$0xff] %v435
        %469 = vst [vmem:[%s461 + $0x54] sm:$0xff] %v436
        %470 = vst [vmem:[%s461 + $0x64] sm:$0xff] %v437
        %471 = vst [vmem:[%s461 + $0x6c] sm:$0xff] %v438
        %472 = vst [vmem:[%s461 + $0x7c] sm:$0xff] %v439
        %473 = vst [vmem:[%s461 + $0x84] sm:$0xff] %v440
        %474 = vst [vmem:[%s461 + $0x94] sm:$0xff] %v441
        %475 = vst [vmem:[%s461 + $0x9c] sm:$0xff] %v442
        %476 = vst [vmem:[%s461 + $0xac] sm:$0xff] %v443
        %477 = vst [vmem:[%s461 + $0xb4] sm:$0xff] %v444
        %478 = vst [vmem:[%s461 + $0xc4] sm:$0xff] %v445
        %479 = vst [vmem:[%s461 + $0xcc] sm:$0xff] %v446
        %480 = vst [vmem:[%s461 + $0xdc] sm:$0xff] %v447
        %481 = vst [vmem:[%s461 + $0xe4] sm:$0xff] %v448
        %482 = vst [vmem:[%s461 + $0xf4] sm:$0xff] %v449
        %483 = vst [vmem:[%s461 + $0xfc] sm:$0xff] %v450
        %484 = vst [vmem:[%s461 + $0x10c] sm:$0xff] %v451
        %485 = vst [vmem:[%s461 + $0x114] sm:$0xff] %v452
        %486 = vst [vmem:[%s461 + $0x124] sm:$0xff] %v453
        %487 = vst [vmem:[%s461 + $0x12c] sm:$0xff] %v454
        %488 = vst [vmem:[%s461 + $0x13c] sm:$0xff] %v455
        %489 = vst [vmem:[%s461 + $0x144] sm:$0xff] %v456
        %490 = vst [vmem:[%s461 + $0x154] sm:$0xff] %v457
        %491 = vst [vmem:[%s461 + $0x15c] sm:$0xff] %v458
        %492 = vst [vmem:[%s461 + $0x16c] sm:$0xff] %v459
        %493 = vst [vmem:[%s461 + $0x174] sm:$0xff] %v460
        %v494 = vld [vmem:[%s2] sm:$0xff]
        %v495 = vld [vmem:[%s2 + $0x8] sm:$0xff]
        %v496 = vld [vmem:[%s2 + $0x10] sm:$0xff]
        %v497 = vld [vmem:[%s2 + $0x18] sm:$0xff]
        %v498 = vld [vmem:[%s2 + $0x20] sm:$0xff]
        %v499 = vld [vmem:[%s2 + $0x28] sm:$0xff]
        %v500 = vld [vmem:[%s2 + $0x30] sm:$0xff]
        %v501 = vld [vmem:[%s2 + $0x38] sm:$0xff]
        %v502 = vld [vmem:[%s2 + $0x40] sm:$0xff]
        %v503 = vld [vmem:[%s2 + $0x48] sm:$0xff]
        %v504 = vld [vmem:[%s2 + $0x50] sm:$0xff]
        %v505 = vld [vmem:[%s2 + $0x58] sm:$0xff]
        %v506 = vld [vmem:[%s2 + $0x60] sm:$0xff]
        %v507 = vld [vmem:[%s2 + $0x68] sm:$0xff]
        %v508 = vld [vmem:[%s2 + $0x70] sm:$0xff]
        %v509 = vld [vmem:[%s2 + $0x78] sm:$0xff]
        %v510 = vld [vmem:[%s3] sm:$0x1]
        %v511 = vld [vmem:[#allocation2] sm:$0xff]
        %v512 = vld [vmem:[#allocation2 + $0x8] sm:$0xff]
        %v513 = vld [vmem:[#allocation2 + $0x18] sm:$0xff]
        %v514 = vld [vmem:[#allocation2 + $0x20] sm:$0xff]
        %v515 = vld [vmem:[#allocation2 + $0x30] sm:$0xff]
        %v516 = vld [vmem:[#allocation2 + $0x38] sm:$0xff]
        %v517 = vld [vmem:[#allocation2 + $0x48] sm:$0xff]
        %v518 = vld [vmem:[#allocation2 + $0x50] sm:$0xff]
        %v519 = vld [vmem:[#allocation2 + $0x60] sm:$0xff]
        %v520 = vld [vmem:[#allocation2 + $0x68] sm:$0xff]
        %v521 = vld [vmem:[#allocation2 + $0x78] sm:$0xff]
        %v522 = vld [vmem:[#allocation2 + $0x80] sm:$0xff]
        %v523 = vld [vmem:[#allocation2 + $0x90] sm:$0xff]
        %v524 = vld [vmem:[#allocation2 + $0x98] sm:$0xff]
        %v525 = vld [vmem:[#allocation2 + $0xa8] sm:$0xff]
        %v526 = vld [vmem:[#allocation2 + $0xb0] sm:$0xff]
        %v527 = vld [vmem:[%s1] sm:$0x1]
        %v528 = vlaneseq
        %v529 = vshrl.u32 %v528, 7
        %v530 = vsub.s32 0, %v529
        %v531 = vrot.slane %v527, %v530
        %v532 = vmul.f32 %v511, %v531
        %v533 = vmul.f32 %v512, %v531
        %v534 = vmul.f32 %v513, %v531
        %v535 = vmul.f32 %v514, %v531
        %v536 = vmul.f32 %v515, %v531
        %v537 = vmul.f32 %v516, %v531
        %v538 = vmul.f32 %v517, %v531
        %v539 = vmul.f32 %v518, %v531
        %v540 = vmul.f32 %v519, %v531
        %v541 = vmul.f32 %v520, %v531
        %v542 = vmul.f32 %v521, %v531
        %v543 = vmul.f32 %v522, %v531
        %v544 = vmul.f32 %v523, %v531
        %v545 = vmul.f32 %v524, %v531
        %v546 = vmul.f32 %v525, %v531
        %v547 = vmul.f32 %v526, %v531
        %v548 = vadd.f32 %v532, 0.0
        %v549 = vadd.f32 %v533, 0.0
        %v550 = vadd.f32 %v534, 0.0
        %v551 = vadd.f32 %v535, 0.0
        %v552 = vadd.f32 %v536, 0.0
        %v553 = vadd.f32 %v537, 0.0
        %v554 = vadd.f32 %v538, 0.0
        %v555 = vadd.f32 %v539, 0.0
        %v556 = vadd.f32 %v540, 0.0
        %v557 = vadd.f32 %v541, 0.0
        %v558 = vadd.f32 %v542, 0.0
        %v559 = vadd.f32 %v543, 0.0
        %v560 = vadd.f32 %v544, 0.0
        %v561 = vadd.f32 %v545, 0.0
        %v562 = vadd.f32 %v546, 0.0
        %v563 = vadd.f32 %v547, 0.0
        %v564 = vld [vmem:[#allocation2 + $0x2] sm:$0xff]
        %v565 = vld [vmem:[#allocation2 + $0xa] sm:$0xff]
        %v566 = vld [vmem:[#allocation2 + $0x1a] sm:$0xff]
        %v567 = vld [vmem:[#allocation2 + $0x22] sm:$0xff]
        %v568 = vld [vmem:[#allocation2 + $0x32] sm:$0xff]
        %v569 = vld [vmem:[#allocation2 + $0x3a] sm:$0xff]
        %v570 = vld [vmem:[#allocation2 + $0x4a] sm:$0xff]
        %v571 = vld [vmem:[#allocation2 + $0x52] sm:$0xff]
        %v572 = vld [vmem:[#allocation2 + $0x62] sm:$0xff]
        %v573 = vld [vmem:[#allocation2 + $0x6a] sm:$0xff]
        %v574 = vld [vmem:[#allocation2 + $0x7a] sm:$0xff]
        %v575 = vld [vmem:[#allocation2 + $0x82] sm:$0xff]
        %v576 = vld [vmem:[#allocation2 + $0x92] sm:$0xff]
        %v577 = vld [vmem:[#allocation2 + $0x9a] sm:$0xff]
        %v578 = vld [vmem:[#allocation2 + $0xaa] sm:$0xff]
        %v579 = vld [vmem:[#allocation2 + $0xb2] sm:$0xff]
        %v580 = vld [vmem:[%s1 + $0x1] sm:$0x1]
        %v581 = vlaneseq
        %v582 = vshrl.u32 %v581, 7
        %v583 = vsub.s32 0, %v582
        %v584 = vrot.slane %v580, %v583
        %v585 = vmul.f32 %v564, %v584
        %v586 = vmul.f32 %v565, %v584
        %v587 = vmul.f32 %v566, %v584
        %v588 = vmul.f32 %v567, %v584
        %v589 = vmul.f32 %v568, %v584
        %v590 = vmul.f32 %v569, %v584
        %v591 = vmul.f32 %v570, %v584
        %v592 = vmul.f32 %v571, %v584
        %v593 = vmul.f32 %v572, %v584
        %v594 = vmul.f32 %v573, %v584
        %v595 = vmul.f32 %v574, %v584
        %v596 = vmul.f32 %v575, %v584
        %v597 = vmul.f32 %v576, %v584
        %v598 = vmul.f32 %v577, %v584
        %v599 = vmul.f32 %v578, %v584
        %v600 = vmul.f32 %v579, %v584
        %v601 = vadd.f32 %v548, %v585
        %v602 = vadd.f32 %v549, %v586
        %v603 = vadd.f32 %v550, %v587
        %v604 = vadd.f32 %v551, %v588
        %v605 = vadd.f32 %v552, %v589
        %v606 = vadd.f32 %v553, %v590
        %v607 = vadd.f32 %v554, %v591
        %v608 = vadd.f32 %v555, %v592
        %v609 = vadd.f32 %v556, %v593
        %v610 = vadd.f32 %v557, %v594
        %v611 = vadd.f32 %v558, %v595
        %v612 = vadd.f32 %v559, %v596
        %v613 = vadd.f32 %v560, %v597
        %v614 = vadd.f32 %v561, %v598
        %v615 = vadd.f32 %v562, %v599
        %v616 = vadd.f32 %v563, %v600
        %v617 = vld [vmem:[#allocation2 + $0x4] sm:$0xff]
        %v618 = vld [vmem:[#allocation2 + $0xc] sm:$0xff]
        %v619 = vld [vmem:[#allocation2 + $0x1c] sm:$0xff]
        %v620 = vld [vmem:[#allocation2 + $0x24] sm:$0xff]
        %v621 = vld [vmem:[#allocation2 + $0x34] sm:$0xff]
        %v622 = vld [vmem:[#allocation2 + $0x3c] sm:$0xff]
        %v623 = vld [vmem:[#allocation2 + $0x4c] sm:$0xff]
        %v624 = vld [vmem:[#allocation2 + $0x54] sm:$0xff]
        %v625 = vld [vmem:[#allocation2 + $0x64] sm:$0xff]
        %v626 = vld [vmem:[#allocation2 + $0x6c] sm:$0xff]
        %v627 = vld [vmem:[#allocation2 + $0x7c] sm:$0xff]
        %v628 = vld [vmem:[#allocation2 + $0x84] sm:$0xff]
        %v629 = vld [vmem:[#allocation2 + $0x94] sm:$0xff]
        %v630 = vld [vmem:[#allocation2 + $0x9c] sm:$0xff]
        %v631 = vld [vmem:[#allocation2 + $0xac] sm:$0xff]
        %v632 = vld [vmem:[#allocation2 + $0xb4] sm:$0xff]
        %v633 = vld [vmem:[%s1 + $0x2] sm:$0x1]
        %v634 = vlaneseq
        %v635 = vshrl.u32 %v634, 7
        %v636 = vsub.s32 0, %v635
        %v637 = vrot.slane %v633, %v636
        %v638 = vmul.f32 %v617, %v637
        %v639 = vmul.f32 %v618, %v637
        %v640 = vmul.f32 %v619, %v637
        %v641 = vmul.f32 %v620, %v637
        %v642 = vmul.f32 %v621, %v637
        %v643 = vmul.f32 %v622, %v637
        %v644 = vmul.f32 %v623, %v637
        %v645 = vmul.f32 %v624, %v637
        %v646 = vmul.f32 %v625, %v637
        %v647 = vmul.f32 %v626, %v637
        %v648 = vmul.f32 %v627, %v637
        %v649 = vmul.f32 %v628, %v637
        %v650 = vmul.f32 %v629, %v637
        %v651 = vmul.f32 %v630, %v637
        %v652 = vmul.f32 %v631, %v637
        %v653 = vmul.f32 %v632, %v637
        %v654 = vadd.f32 %v601, %v638
        %v655 = vadd.f32 %v602, %v639
        %v656 = vadd.f32 %v603, %v640
        %v657 = vadd.f32 %v604, %v641
        %v658 = vadd.f32 %v605, %v642
        %v659 = vadd.f32 %v606, %v643
        %v660 = vadd.f32 %v607, %v644
        %v661 = vadd.f32 %v608, %v645
        %v662 = vadd.f32 %v609, %v646
        %v663 = vadd.f32 %v610, %v647
        %v664 = vadd.f32 %v611, %v648
        %v665 = vadd.f32 %v612, %v649
        %v666 = vadd.f32 %v613, %v650
        %v667 = vadd.f32 %v614, %v651
        %v668 = vadd.f32 %v615, %v652
        %v669 = vadd.f32 %v616, %v653
        %v670 = vld [vmem:[#allocation2 + $0x6] sm:$0xff]
        %v671 = vld [vmem:[#allocation2 + $0xe] sm:$0xff]
        %v672 = vld [vmem:[#allocation2 + $0x1e] sm:$0xff]
        %v673 = vld [vmem:[#allocation2 + $0x26] sm:$0xff]
        %v674 = vld [vmem:[#allocation2 + $0x36] sm:$0xff]
        %v675 = vld [vmem:[#allocation2 + $0x3e] sm:$0xff]
        %v676 = vld [vmem:[#allocation2 + $0x4e] sm:$0xff]
        %v677 = vld [vmem:[#allocation2 + $0x56] sm:$0xff]
        %v678 = vld [vmem:[#allocation2 + $0x66] sm:$0xff]
        %v679 = vld [vmem:[#allocation2 + $0x6e] sm:$0xff]
        %v680 = vld [vmem:[#allocation2 + $0x7e] sm:$0xff]
        %v681 = vld [vmem:[#allocation2 + $0x86] sm:$0xff]
        %v682 = vld [vmem:[#allocation2 + $0x96] sm:$0xff]
        %v683 = vld [vmem:[#allocation2 + $0x9e] sm:$0xff]
        %v684 = vld [vmem:[#allocation2 + $0xae] sm:$0xff]
        %v685 = vld [vmem:[#allocation2 + $0xb6] sm:$0xff]
        %v686 = vld [vmem:[%s1 + $0x3] sm:$0x1]
        %v687 = vlaneseq
        %v688 = vshrl.u32 %v687, 7
        %v689 = vsub.s32 0, %v688
        %v690 = vrot.slane %v686, %v689
        %v691 = vmul.f32 %v670, %v690
        %v692 = vmul.f32 %v671, %v690
        %v693 = vmul.f32 %v672, %v690
        %v694 = vmul.f32 %v673, %v690
        %v695 = vmul.f32 %v674, %v690
        %v696 = vmul.f32 %v675, %v690
        %v697 = vmul.f32 %v676, %v690
        %v698 = vmul.f32 %v677, %v690
        %v699 = vmul.f32 %v678, %v690
        %v700 = vmul.f32 %v679, %v690
        %v701 = vmul.f32 %v680, %v690
        %v702 = vmul.f32 %v681, %v690
        %v703 = vmul.f32 %v682, %v690
        %v704 = vmul.f32 %v683, %v690
        %v705 = vmul.f32 %v684, %v690
        %v706 = vmul.f32 %v685, %v690
        %v707 = vadd.f32 %v654, %v691
        %v708 = vadd.f32 %v655, %v692
        %v709 = vadd.f32 %v656, %v693
        %v710 = vadd.f32 %v657, %v694
        %v711 = vadd.f32 %v658, %v695
        %v712 = vadd.f32 %v659, %v696
        %v713 = vadd.f32 %v660, %v697
        %v714 = vadd.f32 %v661, %v698
        %v715 = vadd.f32 %v662, %v699
        %v716 = vadd.f32 %v663, %v700
        %v717 = vadd.f32 %v664, %v701
        %v718 = vadd.f32 %v665, %v702
        %v719 = vadd.f32 %v666, %v703
        %v720 = vadd.f32 %v667, %v704
        %v721 = vadd.f32 %v668, %v705
        %v722 = vadd.f32 %v669, %v706
        %v723 = vld [vmem:[#allocation2 + $0x10] sm:$0xff]
        %v724 = vld [vmem:[#allocation2 + $0x28] sm:$0xff]
        %v725 = vld [vmem:[#allocation2 + $0x40] sm:$0xff]
        %v726 = vld [vmem:[#allocation2 + $0x58] sm:$0xff]
        %v727 = vld [vmem:[#allocation2 + $0x70] sm:$0xff]
        %v728 = vld [vmem:[#allocation2 + $0x88] sm:$0xff]
        %v729 = vld [vmem:[#allocation2 + $0xa0] sm:$0xff]
        %v730 = vld [vmem:[#allocation2 + $0xb8] sm:$0xff]
        %v731 = vld [vmem:[%s1 + $0x4] sm:$0x1]
        %v732 = vlaneseq
        %v733 = vshrl.u32 %v732, 7
        %v734 = vsub.s32 0, %v733
        %v735 = vrot.slane %v731, %v734
        %v736 = vmul.f32 %v512, %v735
        %v737 = vmul.f32 %v723, %v735
        %v738 = vmul.f32 %v514, %v735
        %v739 = vmul.f32 %v724, %v735
        %v740 = vmul.f32 %v516, %v735
        %v741 = vmul.f32 %v725, %v735
        %v742 = vmul.f32 %v518, %v735
        %v743 = vmul.f32 %v726, %v735
        %v744 = vmul.f32 %v520, %v735
        %v745 = vmul.f32 %v727, %v735
        %v746 = vmul.f32 %v522, %v735
        %v747 = vmul.f32 %v728, %v735
        %v748 = vmul.f32 %v524, %v735
        %v749 = vmul.f32 %v729, %v735
        %v750 = vmul.f32 %v526, %v735
        %v751 = vmul.f32 %v730, %v735
        %v752 = vadd.f32 %v707, %v736
        %v753 = vadd.f32 %v708, %v737
        %v754 = vadd.f32 %v709, %v738
        %v755 = vadd.f32 %v710, %v739
        %v756 = vadd.f32 %v711, %v740
        %v757 = vadd.f32 %v712, %v741
        %v758 = vadd.f32 %v713, %v742
        %v759 = vadd.f32 %v714, %v743
        %v760 = vadd.f32 %v715, %v744
        %v761 = vadd.f32 %v716, %v745
        %v762 = vadd.f32 %v717, %v746
        %v763 = vadd.f32 %v718, %v747
        %v764 = vadd.f32 %v719, %v748
        %v765 = vadd.f32 %v720, %v749
        %v766 = vadd.f32 %v721, %v750
        %v767 = vadd.f32 %v722, %v751
        %s768 = scalar_lea.vmem [#allocation2], 48
        %v769 = vld [vmem:[%s768] sm:$0xff]
        %v770 = vld [vmem:[%s768 + $0x8] sm:$0xff]
        %v771 = vld [vmem:[%s768 + $0x18] sm:$0xff]
        %v772 = vld [vmem:[%s768 + $0x20] sm:$0xff]
        %v773 = vld [vmem:[%s768 + $0x30] sm:$0xff]
        %v774 = vld [vmem:[%s768 + $0x38] sm:$0xff]
        %v775 = vld [vmem:[%s768 + $0x48] sm:$0xff]
        %v776 = vld [vmem:[%s768 + $0x50] sm:$0xff]
        %v777 = vld [vmem:[%s768 + $0x60] sm:$0xff]
        %v778 = vld [vmem:[%s768 + $0x68] sm:$0xff]
        %v779 = vld [vmem:[%s768 + $0x78] sm:$0xff]
        %v780 = vld [vmem:[%s768 + $0x80] sm:$0xff]
        %v781 = vld [vmem:[%s768 + $0x90] sm:$0xff]
        %v782 = vld [vmem:[%s768 + $0x98] sm:$0xff]
        %v783 = vld [vmem:[%s768 + $0xa8] sm:$0xff]
        %v784 = vld [vmem:[%s768 + $0xb0] sm:$0xff]
        %s785 = scalar_lea.vmem %s1, 8
        %v786 = vld [vmem:[%s785] sm:$0x1]
        %v787 = vlaneseq
        %v788 = vshrl.u32 %v787, 7
        %v789 = vsub.s32 0, %v788
        %v790 = vrot.slane %v786, %v789
        %v791 = vmul.f32 %v769, %v790
        %v792 = vmul.f32 %v770, %v790
        %v793 = vmul.f32 %v771, %v790
        %v794 = vmul.f32 %v772, %v790
        %v795 = vmul.f32 %v773, %v790
        %v796 = vmul.f32 %v774, %v790
        %v797 = vmul.f32 %v775, %v790
        %v798 = vmul.f32 %v776, %v790
        %v799 = vmul.f32 %v777, %v790
        %v800 = vmul.f32 %v778, %v790
        %v801 = vmul.f32 %v779, %v790
        %v802 = vmul.f32 %v780, %v790
        %v803 = vmul.f32 %v781, %v790
        %v804 = vmul.f32 %v782, %v790
        %v805 = vmul.f32 %v783, %v790
        %v806 = vmul.f32 %v784, %v790
        %v807 = vadd.f32 %v752, %v791
        %v808 = vadd.f32 %v753, %v792
        %v809 = vadd.f32 %v754, %v793
        %v810 = vadd.f32 %v755, %v794
        %v811 = vadd.f32 %v756, %v795
        %v812 = vadd.f32 %v757, %v796
        %v813 = vadd.f32 %v758, %v797
        %v814 = vadd.f32 %v759, %v798
        %v815 = vadd.f32 %v760, %v799
        %v816 = vadd.f32 %v761, %v800
        %v817 = vadd.f32 %v762, %v801
        %v818 = vadd.f32 %v763, %v802
        %v819 = vadd.f32 %v764, %v803
        %v820 = vadd.f32 %v765, %v804
        %v821 = vadd.f32 %v766, %v805
        %v822 = vadd.f32 %v767, %v806
        %v823 = vld [vmem:[%s768 + $0x2] sm:$0xff]
        %v824 = vld [vmem:[%s768 + $0xa] sm:$0xff]
        %v825 = vld [vmem:[%s768 + $0x1a] sm:$0xff]
        %v826 = vld [vmem:[%s768 + $0x22] sm:$0xff]
        %v827 = vld [vmem:[%s768 + $0x32] sm:$0xff]
        %v828 = vld [vmem:[%s768 + $0x3a] sm:$0xff]
        %v829 = vld [vmem:[%s768 + $0x4a] sm:$0xff]
        %v830 = vld [vmem:[%s768 + $0x52] sm:$0xff]
        %v831 = vld [vmem:[%s768 + $0x62] sm:$0xff]
        %v832 = vld [vmem:[%s768 + $0x6a] sm:$0xff]
        %v833 = vld [vmem:[%s768 + $0x7a] sm:$0xff]
        %v834 = vld [vmem:[%s768 + $0x82] sm:$0xff]
        %v835 = vld [vmem:[%s768 + $0x92] sm:$0xff]
        %v836 = vld [vmem:[%s768 + $0x9a] sm:$0xff]
        %v837 = vld [vmem:[%s768 + $0xaa] sm:$0xff]
        %v838 = vld [vmem:[%s768 + $0xb2] sm:$0xff]
        %v839 = vld [vmem:[%s785 + $0x1] sm:$0x1]
        %v840 = vlaneseq
        %v841 = vshrl.u32 %v840, 7
        %v842 = vsub.s32 0, %v841
        %v843 = vrot.slane %v839, %v842
        %v844 = vmul.f32 %v823, %v843
        %v845 = vmul.f32 %v824, %v843
        %v846 = vmul.f32 %v825, %v843
        %v847 = vmul.f32 %v826, %v843
        %v848 = vmul.f32 %v827, %v843
        %v849 = vmul.f32 %v828, %v843
        %v850 = vmul.f32 %v829, %v843
        %v851 = vmul.f32 %v830, %v843
        %v852 = vmul.f32 %v831, %v843
        %v853 = vmul.f32 %v832, %v843
        %v854 = vmul.f32 %v833, %v843
        %v855 = vmul.f32 %v834, %v843
        %v856 = vmul.f32 %v835, %v843
        %v857 = vmul.f32 %v836, %v843
        %v858 = vmul.f32 %v837, %v843
        %v859 = vmul.f32 %v838, %v843
        %v860 = vadd.f32 %v807, %v844
        %v861 = vadd.f32 %v808, %v845
        %v862 = vadd.f32 %v809, %v846
        %v863 = vadd.f32 %v810, %v847
        %v864 = vadd.f32 %v811, %v848
        %v865 = vadd.f32 %v812, %v849
        %v866 = vadd.f32 %v813, %v850
        %v867 = vadd.f32 %v814, %v851
        %v868 = vadd.f32 %v815, %v852
        %v869 = vadd.f32 %v816, %v853
        %v870 = vadd.f32 %v817, %v854
        %v871 = vadd.f32 %v818, %v855
        %v872 = vadd.f32 %v819, %v856
        %v873 = vadd.f32 %v820, %v857
        %v874 = vadd.f32 %v821, %v858
        %v875 = vadd.f32 %v822, %v859
        %v876 = vld [vmem:[%s768 + $0x4] sm:$0xff]
        %v877 = vld [vmem:[%s768 + $0xc] sm:$0xff]
        %v878 = vld [vmem:[%s768 + $0x1c] sm:$0xff]
        %v879 = vld [vmem:[%s768 + $0x24] sm:$0xff]
        %v880 = vld [vmem:[%s768 + $0x34] sm:$0xff]
        %v881 = vld [vmem:[%s768 + $0x3c] sm:$0xff]
        %v882 = vld [vmem:[%s768 + $0x4c] sm:$0xff]
        %v883 = vld [vmem:[%s768 + $0x54] sm:$0xff]
        %v884 = vld [vmem:[%s768 + $0x64] sm:$0xff]
        %v885 = vld [vmem:[%s768 + $0x6c] sm:$0xff]
        %v886 = vld [vmem:[%s768 + $0x7c] sm:$0xff]
        %v887 = vld [vmem:[%s768 + $0x84] sm:$0xff]
        %v888 = vld [vmem:[%s768 + $0x94] sm:$0xff]
        %v889 = vld [vmem:[%s768 + $0x9c] sm:$0xff]
        %v890 = vld [vmem:[%s768 + $0xac] sm:$0xff]
        %v891 = vld [vmem:[%s768 + $0xb4] sm:$0xff]
        %v892 = vld [vmem:[%s785 + $0x2] sm:$0x1]
        %v893 = vlaneseq
        %v894 = vshrl.u32 %v893, 7
        %v895 = vsub.s32 0, %v894
        %v896 = vrot.slane %v892, %v895
        %v897 = vmul.f32 %v876, %v896
        %v898 = vmul.f32 %v877, %v896
        %v899 = vmul.f32 %v878, %v896
        %v900 = vmul.f32 %v879, %v896
        %v901 = vmul.f32 %v880, %v896
        %v902 = vmul.f32 %v881, %v896
        %v903 = vmul.f32 %v882, %v896
        %v904 = vmul.f32 %v883, %v896
        %v905 = vmul.f32 %v884, %v896
        %v906 = vmul.f32 %v885, %v896
        %v907 = vmul.f32 %v886, %v896
        %v908 = vmul.f32 %v887, %v896
        %v909 = vmul.f32 %v888, %v896
        %v910 = vmul.f32 %v889, %v896
        %v911 = vmul.f32 %v890, %v896
        %v912 = vmul.f32 %v891, %v896
        %v913 = vadd.f32 %v860, %v897
        %v914 = vadd.f32 %v861, %v898
        %v915 = vadd.f32 %v862, %v899
        %v916 = vadd.f32 %v863, %v900
        %v917 = vadd.f32 %v864, %v901
        %v918 = vadd.f32 %v865, %v902
        %v919 = vadd.f32 %v866, %v903
        %v920 = vadd.f32 %v867, %v904
        %v921 = vadd.f32 %v868, %v905
        %v922 = vadd.f32 %v869, %v906
        %v923 = vadd.f32 %v870, %v907
        %v924 = vadd.f32 %v871, %v908
        %v925 = vadd.f32 %v872, %v909
        %v926 = vadd.f32 %v873, %v910
        %v927 = vadd.f32 %v874, %v911
        %v928 = vadd.f32 %v875, %v912
        %v929 = vld [vmem:[%s768 + $0x6] sm:$0xff]
        %v930 = vld [vmem:[%s768 + $0xe] sm:$0xff]
        %v931 = vld [vmem:[%s768 + $0x1e] sm:$0xff]
        %v932 = vld [vmem:[%s768 + $0x26] sm:$0xff]
        %v933 = vld [vmem:[%s768 + $0x36] sm:$0xff]
        %v934 = vld [vmem:[%s768 + $0x3e] sm:$0xff]
        %v935 = vld [vmem:[%s768 + $0x4e] sm:$0xff]
        %v936 = vld [vmem:[%s768 + $0x56] sm:$0xff]
        %v937 = vld [vmem:[%s768 + $0x66] sm:$0xff]
        %v938 = vld [vmem:[%s768 + $0x6e] sm:$0xff]
        %v939 = vld [vmem:[%s768 + $0x7e] sm:$0xff]
        %v940 = vld [vmem:[%s768 + $0x86] sm:$0xff]
        %v941 = vld [vmem:[%s768 + $0x96] sm:$0xff]
        %v942 = vld [vmem:[%s768 + $0x9e] sm:$0xff]
        %v943 = vld [vmem:[%s768 + $0xae] sm:$0xff]
        %v944 = vld [vmem:[%s768 + $0xb6] sm:$0xff]
        %v945 = vld [vmem:[%s785 + $0x3] sm:$0x1]
        %v946 = vlaneseq
        %v947 = vshrl.u32 %v946, 7
        %v948 = vsub.s32 0, %v947
        %v949 = vrot.slane %v945, %v948
        %v950 = vmul.f32 %v929, %v949
        %v951 = vmul.f32 %v930, %v949
        %v952 = vmul.f32 %v931, %v949
        %v953 = vmul.f32 %v932, %v949
        %v954 = vmul.f32 %v933, %v949
        %v955 = vmul.f32 %v934, %v949
        %v956 = vmul.f32 %v935, %v949
        %v957 = vmul.f32 %v936, %v949
        %v958 = vmul.f32 %v937, %v949
        %v959 = vmul.f32 %v938, %v949
        %v960 = vmul.f32 %v939, %v949
        %v961 = vmul.f32 %v940, %v949
        %v962 = vmul.f32 %v941, %v949
        %v963 = vmul.f32 %v942, %v949
        %v964 = vmul.f32 %v943, %v949
        %v965 = vmul.f32 %v944, %v949
        %v966 = vadd.f32 %v913, %v950
        %v967 = vadd.f32 %v914, %v951
        %v968 = vadd.f32 %v915, %v952
        %v969 = vadd.f32 %v916, %v953
        %v970 = vadd.f32 %v917, %v954
        %v971 = vadd.f32 %v918, %v955
        %v972 = vadd.f32 %v919, %v956
        %v973 = vadd.f32 %v920, %v957
        %v974 = vadd.f32 %v921, %v958
        %v975 = vadd.f32 %v922, %v959
        %v976 = vadd.f32 %v923, %v960
        %v977 = vadd.f32 %v924, %v961
        %v978 = vadd.f32 %v925, %v962
        %v979 = vadd.f32 %v926, %v963
        %v980 = vadd.f32 %v927, %v964
        %v981 = vadd.f32 %v928, %v965
        %v982 = vld [vmem:[%s768 + $0x10] sm:$0xff]
        %v983 = vld [vmem:[%s768 + $0x28] sm:$0xff]
        %v984 = vld [vmem:[%s768 + $0x40] sm:$0xff]
        %v985 = vld [vmem:[%s768 + $0x58] sm:$0xff]
        %v986 = vld [vmem:[%s768 + $0x70] sm:$0xff]
        %v987 = vld [vmem:[%s768 + $0x88] sm:$0xff]
        %v988 = vld [vmem:[%s768 + $0xa0] sm:$0xff]
        %v989 = vld [vmem:[%s768 + $0xb8] sm:$0xff]
        %v990 = vld [vmem:[%s785 + $0x4] sm:$0x1]
        %v991 = vlaneseq
        %v992 = vshrl.u32 %v991, 7
        %v993 = vsub.s32 0, %v992
        %v994 = vrot.slane %v990, %v993
        %v995 = vmul.f32 %v770, %v994
        %v996 = vmul.f32 %v982, %v994
        %v997 = vmul.f32 %v772, %v994
        %v998 = vmul.f32 %v983, %v994
        %v999 = vmul.f32 %v774, %v994
        %v1000 = vmul.f32 %v984, %v994
        %v1001 = vmul.f32 %v776, %v994
        %v1002 = vmul.f32 %v985, %v994
        %v1003 = vmul.f32 %v778, %v994
        %v1004 = vmul.f32 %v986, %v994
        %v1005 = vmul.f32 %v780, %v994
        %v1006 = vmul.f32 %v987, %v994
        %v1007 = vmul.f32 %v782, %v994
        %v1008 = vmul.f32 %v988, %v994
        %v1009 = vmul.f32 %v784, %v994
        %v1010 = vmul.f32 %v989, %v994
        %v1011 = vadd.f32 %v966, %v995
        %v1012 = vadd.f32 %v967, %v996
        %v1013 = vadd.f32 %v968, %v997
        %v1014 = vadd.f32 %v969, %v998
        %v1015 = vadd.f32 %v970, %v999
        %v1016 = vadd.f32 %v971, %v1000
        %v1017 = vadd.f32 %v972, %v1001
        %v1018 = vadd.f32 %v973, %v1002
        %v1019 = vadd.f32 %v974, %v1003
        %v1020 = vadd.f32 %v975, %v1004
        %v1021 = vadd.f32 %v976, %v1005
        %v1022 = vadd.f32 %v977, %v1006
        %v1023 = vadd.f32 %v978, %v1007
        %v1024 = vadd.f32 %v979, %v1008
        %v1025 = vadd.f32 %v980, %v1009
        %v1026 = vadd.f32 %v981, %v1010
        %v1027 = vld [vmem:[%s461] sm:$0xff]
        %v1028 = vld [vmem:[%s461 + $0x8] sm:$0xff]
        %v1029 = vld [vmem:[%s461 + $0x18] sm:$0xff]
        %v1030 = vld [vmem:[%s461 + $0x20] sm:$0xff]
        %v1031 = vld [vmem:[%s461 + $0x30] sm:$0xff]
        %v1032 = vld [vmem:[%s461 + $0x38] sm:$0xff]
        %v1033 = vld [vmem:[%s461 + $0x48] sm:$0xff]
        %v1034 = vld [vmem:[%s461 + $0x50] sm:$0xff]
        %v1035 = vld [vmem:[%s461 + $0x60] sm:$0xff]
        %v1036 = vld [vmem:[%s461 + $0x68] sm:$0xff]
        %v1037 = vld [vmem:[%s461 + $0x78] sm:$0xff]
        %v1038 = vld [vmem:[%s461 + $0x80] sm:$0xff]
        %v1039 = vld [vmem:[%s461 + $0x90] sm:$0xff]
        %v1040 = vld [vmem:[%s461 + $0x98] sm:$0xff]
        %v1041 = vld [vmem:[%s461 + $0xa8] sm:$0xff]
        %v1042 = vld [vmem:[%s461 + $0xb0] sm:$0xff]
        %s1043 = scalar_lea.vmem %s1, 16
        %v1044 = vld [vmem:[%s1043] sm:$0x1]
        %v1045 = vlaneseq
        %v1046 = vshrl.u32 %v1045, 7
        %v1047 = vsub.s32 0, %v1046
        %v1048 = vrot.slane %v1044, %v1047
        %v1049 = vmul.f32 %v1027, %v1048
        %v1050 = vmul.f32 %v1028, %v1048
        %v1051 = vmul.f32 %v1029, %v1048
        %v1052 = vmul.f32 %v1030, %v1048
        %v1053 = vmul.f32 %v1031, %v1048
        %v1054 = vmul.f32 %v1032, %v1048
        %v1055 = vmul.f32 %v1033, %v1048
        %v1056 = vmul.f32 %v1034, %v1048
        %v1057 = vmul.f32 %v1035, %v1048
        %v1058 = vmul.f32 %v1036, %v1048
        %v1059 = vmul.f32 %v1037, %v1048
        %v1060 = vmul.f32 %v1038, %v1048
        %v1061 = vmul.f32 %v1039, %v1048
        %v1062 = vmul.f32 %v1040, %v1048
        %v1063 = vmul.f32 %v1041, %v1048
        %v1064 = vmul.f32 %v1042, %v1048
        %v1065 = vadd.f32 %v1011, %v1049
        %v1066 = vadd.f32 %v1012, %v1050
        %v1067 = vadd.f32 %v1013, %v1051
        %v1068 = vadd.f32 %v1014, %v1052
        %v1069 = vadd.f32 %v1015, %v1053
        %v1070 = vadd.f32 %v1016, %v1054
        %v1071 = vadd.f32 %v1017, %v1055
        %v1072 = vadd.f32 %v1018, %v1056
        %v1073 = vadd.f32 %v1019, %v1057
        %v1074 = vadd.f32 %v1020, %v1058
        %v1075 = vadd.f32 %v1021, %v1059
        %v1076 = vadd.f32 %v1022, %v1060
        %v1077 = vadd.f32 %v1023, %v1061
        %v1078 = vadd.f32 %v1024, %v1062
        %v1079 = vadd.f32 %v1025, %v1063
        %v1080 = vadd.f32 %v1026, %v1064
        %v1081 = vld [vmem:[%s461 + $0x2] sm:$0xff]
        %v1082 = vld [vmem:[%s461 + $0xa] sm:$0xff]
        %v1083 = vld [vmem:[%s461 + $0x1a] sm:$0xff]
        %v1084 = vld [vmem:[%s461 + $0x22] sm:$0xff]
        %v1085 = vld [vmem:[%s461 + $0x32] sm:$0xff]
        %v1086 = vld [vmem:[%s461 + $0x3a] sm:$0xff]
        %v1087 = vld [vmem:[%s461 + $0x4a] sm:$0xff]
        %v1088 = vld [vmem:[%s461 + $0x52] sm:$0xff]
        %v1089 = vld [vmem:[%s461 + $0x62] sm:$0xff]
        %v1090 = vld [vmem:[%s461 + $0x6a] sm:$0xff]
        %v1091 = vld [vmem:[%s461 + $0x7a] sm:$0xff]
        %v1092 = vld [vmem:[%s461 + $0x82] sm:$0xff]
        %v1093 = vld [vmem:[%s461 + $0x92] sm:$0xff]
        %v1094 = vld [vmem:[%s461 + $0x9a] sm:$0xff]
        %v1095 = vld [vmem:[%s461 + $0xaa] sm:$0xff]
        %v1096 = vld [vmem:[%s461 + $0xb2] sm:$0xff]
        %v1097 = vld [vmem:[%s1043 + $0x1] sm:$0x1]
        %v1098 = vlaneseq
        %v1099 = vshrl.u32 %v1098, 7
        %v1100 = vsub.s32 0, %v1099
        %v1101 = vrot.slane %v1097, %v1100
        %v1102 = vmul.f32 %v1081, %v1101
        %v1103 = vmul.f32 %v1082, %v1101
        %v1104 = vmul.f32 %v1083, %v1101
        %v1105 = vmul.f32 %v1084, %v1101
        %v1106 = vmul.f32 %v1085, %v1101
        %v1107 = vmul.f32 %v1086, %v1101
        %v1108 = vmul.f32 %v1087, %v1101
        %v1109 = vmul.f32 %v1088, %v1101
        %v1110 = vmul.f32 %v1089, %v1101
        %v1111 = vmul.f32 %v1090, %v1101
        %v1112 = vmul.f32 %v1091, %v1101
        %v1113 = vmul.f32 %v1092, %v1101
        %v1114 = vmul.f32 %v1093, %v1101
        %v1115 = vmul.f32 %v1094, %v1101
        %v1116 = vmul.f32 %v1095, %v1101
        %v1117 = vmul.f32 %v1096, %v1101
        %v1118 = vadd.f32 %v1065, %v1102
        %v1119 = vadd.f32 %v1066, %v1103
        %v1120 = vadd.f32 %v1067, %v1104
        %v1121 = vadd.f32 %v1068, %v1105
        %v1122 = vadd.f32 %v1069, %v1106
        %v1123 = vadd.f32 %v1070, %v1107
        %v1124 = vadd.f32 %v1071, %v1108
        %v1125 = vadd.f32 %v1072, %v1109
        %v1126 = vadd.f32 %v1073, %v1110
        %v1127 = vadd.f32 %v1074, %v1111
        %v1128 = vadd.f32 %v1075, %v1112
        %v1129 = vadd.f32 %v1076, %v1113
        %v1130 = vadd.f32 %v1077, %v1114
        %v1131 = vadd.f32 %v1078, %v1115
        %v1132 = vadd.f32 %v1079, %v1116
        %v1133 = vadd.f32 %v1080, %v1117
        %v1134 = vld [vmem:[%s461 + $0x4] sm:$0xff]
        %v1135 = vld [vmem:[%s461 + $0xc] sm:$0xff]
        %v1136 = vld [vmem:[%s461 + $0x1c] sm:$0xff]
        %v1137 = vld [vmem:[%s461 + $0x24] sm:$0xff]
        %v1138 = vld [vmem:[%s461 + $0x34] sm:$0xff]
        %v1139 = vld [vmem:[%s461 + $0x3c] sm:$0xff]
        %v1140 = vld [vmem:[%s461 + $0x4c] sm:$0xff]
        %v1141 = vld [vmem:[%s461 + $0x54] sm:$0xff]
        %v1142 = vld [vmem:[%s461 + $0x64] sm:$0xff]
        %v1143 = vld [vmem:[%s461 + $0x6c] sm:$0xff]
        %v1144 = vld [vmem:[%s461 + $0x7c] sm:$0xff]
        %v1145 = vld [vmem:[%s461 + $0x84] sm:$0xff]
        %v1146 = vld [vmem:[%s461 + $0x94] sm:$0xff]
        %v1147 = vld [vmem:[%s461 + $0x9c] sm:$0xff]
        %v1148 = vld [vmem:[%s461 + $0xac] sm:$0xff]
        %v1149 = vld [vmem:[%s461 + $0xb4] sm:$0xff]
        %v1150 = vld [vmem:[%s1043 + $0x2] sm:$0x1]
        %v1151 = vlaneseq
        %v1152 = vshrl.u32 %v1151, 7
        %v1153 = vsub.s32 0, %v1152
        %v1154 = vrot.slane %v1150, %v1153
        %v1155 = vmul.f32 %v1134, %v1154
        %v1156 = vmul.f32 %v1135, %v1154
        %v1157 = vmul.f32 %v1136, %v1154
        %v1158 = vmul.f32 %v1137, %v1154
        %v1159 = vmul.f32 %v1138, %v1154
        %v1160 = vmul.f32 %v1139, %v1154
        %v1161 = vmul.f32 %v1140, %v1154
        %v1162 = vmul.f32 %v1141, %v1154
        %v1163 = vmul.f32 %v1142, %v1154
        %v1164 = vmul.f32 %v1143, %v1154
        %v1165 = vmul.f32 %v1144, %v1154
        %v1166 = vmul.f32 %v1145, %v1154
        %v1167 = vmul.f32 %v1146, %v1154
        %v1168 = vmul.f32 %v1147, %v1154
        %v1169 = vmul.f32 %v1148, %v1154
        %v1170 = vmul.f32 %v1149, %v1154
        %v1171 = vadd.f32 %v1118, %v1155
        %v1172 = vadd.f32 %v1119, %v1156
        %v1173 = vadd.f32 %v1120, %v1157
        %v1174 = vadd.f32 %v1121, %v1158
        %v1175 = vadd.f32 %v1122, %v1159
        %v1176 = vadd.f32 %v1123, %v1160
        %v1177 = vadd.f32 %v1124, %v1161
        %v1178 = vadd.f32 %v1125, %v1162
        %v1179 = vadd.f32 %v1126, %v1163
        %v1180 = vadd.f32 %v1127, %v1164
        %v1181 = vadd.f32 %v1128, %v1165
        %v1182 = vadd.f32 %v1129, %v1166
        %v1183 = vadd.f32 %v1130, %v1167
        %v1184 = vadd.f32 %v1131, %v1168
        %v1185 = vadd.f32 %v1132, %v1169
        %v1186 = vadd.f32 %v1133, %v1170
        %v1187 = vld [vmem:[%s461 + $0x6] sm:$0xff]
        %v1188 = vld [vmem:[%s461 + $0xe] sm:$0xff]
        %v1189 = vld [vmem:[%s461 + $0x1e] sm:$0xff]
        %v1190 = vld [vmem:[%s461 + $0x26] sm:$0xff]
        %v1191 = vld [vmem:[%s461 + $0x36] sm:$0xff]
        %v1192 = vld [vmem:[%s461 + $0x3e] sm:$0xff]
        %v1193 = vld [vmem:[%s461 + $0x4e] sm:$0xff]
        %v1194 = vld [vmem:[%s461 + $0x56] sm:$0xff]
        %v1195 = vld [vmem:[%s461 + $0x66] sm:$0xff]
        %v1196 = vld [vmem:[%s461 + $0x6e] sm:$0xff]
        %v1197 = vld [vmem:[%s461 + $0x7e] sm:$0xff]
        %v1198 = vld [vmem:[%s461 + $0x86] sm:$0xff]
        %v1199 = vld [vmem:[%s461 + $0x96] sm:$0xff]
        %v1200 = vld [vmem:[%s461 + $0x9e] sm:$0xff]
        %v1201 = vld [vmem:[%s461 + $0xae] sm:$0xff]
        %v1202 = vld [vmem:[%s461 + $0xb6] sm:$0xff]
        %v1203 = vld [vmem:[%s1043 + $0x3] sm:$0x1]
        %v1204 = vlaneseq
        %v1205 = vshrl.u32 %v1204, 7
        %v1206 = vsub.s32 0, %v1205
        %v1207 = vrot.slane %v1203, %v1206
        %v1208 = vmul.f32 %v1187, %v1207
        %v1209 = vmul.f32 %v1188, %v1207
        %v1210 = vmul.f32 %v1189, %v1207
        %v1211 = vmul.f32 %v1190, %v1207
        %v1212 = vmul.f32 %v1191, %v1207
        %v1213 = vmul.f32 %v1192, %v1207
        %v1214 = vmul.f32 %v1193, %v1207
        %v1215 = vmul.f32 %v1194, %v1207
        %v1216 = vmul.f32 %v1195, %v1207
        %v1217 = vmul.f32 %v1196, %v1207
        %v1218 = vmul.f32 %v1197, %v1207
        %v1219 = vmul.f32 %v1198, %v1207
        %v1220 = vmul.f32 %v1199, %v1207
        %v1221 = vmul.f32 %v1200, %v1207
        %v1222 = vmul.f32 %v1201, %v1207
        %v1223 = vmul.f32 %v1202, %v1207
        %v1224 = vadd.f32 %v1171, %v1208
        %v1225 = vadd.f32 %v1172, %v1209
        %v1226 = vadd.f32 %v1173, %v1210
        %v1227 = vadd.f32 %v1174, %v1211
        %v1228 = vadd.f32 %v1175, %v1212
        %v1229 = vadd.f32 %v1176, %v1213
        %v1230 = vadd.f32 %v1177, %v1214
        %v1231 = vadd.f32 %v1178, %v1215
        %v1232 = vadd.f32 %v1179, %v1216
        %v1233 = vadd.f32 %v1180, %v1217
        %v1234 = vadd.f32 %v1181, %v1218
        %v1235 = vadd.f32 %v1182, %v1219
        %v1236 = vadd.f32 %v1183, %v1220
        %v1237 = vadd.f32 %v1184, %v1221
        %v1238 = vadd.f32 %v1185, %v1222
        %v1239 = vadd.f32 %v1186, %v1223
        %v1240 = vld [vmem:[%s461 + $0x10] sm:$0xff]
        %v1241 = vld [vmem:[%s461 + $0x28] sm:$0xff]
        %v1242 = vld [vmem:[%s461 + $0x40] sm:$0xff]
        %v1243 = vld [vmem:[%s461 + $0x58] sm:$0xff]
        %v1244 = vld [vmem:[%s461 + $0x70] sm:$0xff]
        %v1245 = vld [vmem:[%s461 + $0x88] sm:$0xff]
        %v1246 = vld [vmem:[%s461 + $0xa0] sm:$0xff]
        %v1247 = vld [vmem:[%s461 + $0xb8] sm:$0xff]
        %v1248 = vld [vmem:[%s1043 + $0x4] sm:$0x1]
        %v1249 = vlaneseq
        %v1250 = vshrl.u32 %v1249, 7
        %v1251 = vsub.s32 0, %v1250
        %v1252 = vrot.slane %v1248, %v1251
        %v1253 = vmul.f32 %v1028, %v1252
        %v1254 = vmul.f32 %v1240, %v1252
        %v1255 = vmul.f32 %v1030, %v1252
        %v1256 = vmul.f32 %v1241, %v1252
        %v1257 = vmul.f32 %v1032, %v1252
        %v1258 = vmul.f32 %v1242, %v1252
        %v1259 = vmul.f32 %v1034, %v1252
        %v1260 = vmul.f32 %v1243, %v1252
        %v1261 = vmul.f32 %v1036, %v1252
        %v1262 = vmul.f32 %v1244, %v1252
        %v1263 = vmul.f32 %v1038, %v1252
        %v1264 = vmul.f32 %v1245, %v1252
        %v1265 = vmul.f32 %v1040, %v1252
        %v1266 = vmul.f32 %v1246, %v1252
        %v1267 = vmul.f32 %v1042, %v1252
        %v1268 = vmul.f32 %v1247, %v1252
        %v1269 = vadd.f32 %v1224, %v1253
        %v1270 = vadd.f32 %v1225, %v1254
        %v1271 = vadd.f32 %v1226, %v1255
        %v1272 = vadd.f32 %v1227, %v1256
        %v1273 = vadd.f32 %v1228, %v1257
        %v1274 = vadd.f32 %v1229, %v1258
        %v1275 = vadd.f32 %v1230, %v1259
        %v1276 = vadd.f32 %v1231, %v1260
        %v1277 = vadd.f32 %v1232, %v1261
        %v1278 = vadd.f32 %v1233, %v1262
        %v1279 = vadd.f32 %v1234, %v1263
        %v1280 = vadd.f32 %v1235, %v1264
        %v1281 = vadd.f32 %v1236, %v1265
        %v1282 = vadd.f32 %v1237, %v1266
        %v1283 = vadd.f32 %v1238, %v1267
        %v1284 = vadd.f32 %v1239, %v1268
        %s1285 = scalar_lea.vmem [#allocation2], 144
        %v1286 = vld [vmem:[%s1285] sm:$0xff]
        %v1287 = vld [vmem:[%s1285 + $0x8] sm:$0xff]
        %v1288 = vld [vmem:[%s1285 + $0x18] sm:$0xff]
        %v1289 = vld [vmem:[%s1285 + $0x20] sm:$0xff]
        %v1290 = vld [vmem:[%s1285 + $0x30] sm:$0xff]
        %v1291 = vld [vmem:[%s1285 + $0x38] sm:$0xff]
        %v1292 = vld [vmem:[%s1285 + $0x48] sm:$0xff]
        %v1293 = vld [vmem:[%s1285 + $0x50] sm:$0xff]
        %v1294 = vld [vmem:[%s1285 + $0x60] sm:$0xff]
        %v1295 = vld [vmem:[%s1285 + $0x68] sm:$0xff]
        %v1296 = vld [vmem:[%s1285 + $0x78] sm:$0xff]
        %v1297 = vld [vmem:[%s1285 + $0x80] sm:$0xff]
        %v1298 = vld [vmem:[%s1285 + $0x90] sm:$0xff]
        %v1299 = vld [vmem:[%s1285 + $0x98] sm:$0xff]
        %v1300 = vld [vmem:[%s1285 + $0xa8] sm:$0xff]
        %v1301 = vld [vmem:[%s1285 + $0xb0] sm:$0xff]
        %s1302 = scalar_lea.vmem %s1, 24
        %v1303 = vld [vmem:[%s1302] sm:$0x1]
        %v1304 = vlaneseq
        %v1305 = vshrl.u32 %v1304, 7
        %v1306 = vsub.s32 0, %v1305
        %v1307 = vrot.slane %v1303, %v1306
        %v1308 = vmul.f32 %v1286, %v1307
        %v1309 = vmul.f32 %v1287, %v1307
        %v1310 = vmul.f32 %v1288, %v1307
        %v1311 = vmul.f32 %v1289, %v1307
        %v1312 = vmul.f32 %v1290, %v1307
        %v1313 = vmul.f32 %v1291, %v1307
        %v1314 = vmul.f32 %v1292, %v1307
        %v1315 = vmul.f32 %v1293, %v1307
        %v1316 = vmul.f32 %v1294, %v1307
        %v1317 = vmul.f32 %v1295, %v1307
        %v1318 = vmul.f32 %v1296, %v1307
        %v1319 = vmul.f32 %v1297, %v1307
        %v1320 = vmul.f32 %v1298, %v1307
        %v1321 = vmul.f32 %v1299, %v1307
        %v1322 = vmul.f32 %v1300, %v1307
        %v1323 = vmul.f32 %v1301, %v1307
        %v1324 = vadd.f32 %v1269, %v1308
        %v1325 = vadd.f32 %v1270, %v1309
        %v1326 = vadd.f32 %v1271, %v1310
        %v1327 = vadd.f32 %v1272, %v1311
        %v1328 = vadd.f32 %v1273, %v1312
        %v1329 = vadd.f32 %v1274, %v1313
        %v1330 = vadd.f32 %v1275, %v1314
        %v1331 = vadd.f32 %v1276, %v1315
        %v1332 = vadd.f32 %v1277, %v1316
        %v1333 = vadd.f32 %v1278, %v1317
        %v1334 = vadd.f32 %v1279, %v1318
        %v1335 = vadd.f32 %v1280, %v1319
        %v1336 = vadd.f32 %v1281, %v1320
        %v1337 = vadd.f32 %v1282, %v1321
        %v1338 = vadd.f32 %v1283, %v1322
        %v1339 = vadd.f32 %v1284, %v1323
        %v1340 = vld [vmem:[%s1285 + $0x2] sm:$0xff]
        %v1341 = vld [vmem:[%s1285 + $0xa] sm:$0xff]
        %v1342 = vld [vmem:[%s1285 + $0x1a] sm:$0xff]
        %v1343 = vld [vmem:[%s1285 + $0x22] sm:$0xff]
        %v1344 = vld [vmem:[%s1285 + $0x32] sm:$0xff]
        %v1345 = vld [vmem:[%s1285 + $0x3a] sm:$0xff]
        %v1346 = vld [vmem:[%s1285 + $0x4a] sm:$0xff]
        %v1347 = vld [vmem:[%s1285 + $0x52] sm:$0xff]
        %v1348 = vld [vmem:[%s1285 + $0x62] sm:$0xff]
        %v1349 = vld [vmem:[%s1285 + $0x6a] sm:$0xff]
        %v1350 = vld [vmem:[%s1285 + $0x7a] sm:$0xff]
        %v1351 = vld [vmem:[%s1285 + $0x82] sm:$0xff]
        %v1352 = vld [vmem:[%s1285 + $0x92] sm:$0xff]
        %v1353 = vld [vmem:[%s1285 + $0x9a] sm:$0xff]
        %v1354 = vld [vmem:[%s1285 + $0xaa] sm:$0xff]
        %v1355 = vld [vmem:[%s1285 + $0xb2] sm:$0xff]
        %v1356 = vld [vmem:[%s1302 + $0x1] sm:$0x1]
        %v1357 = vlaneseq
        %v1358 = vshrl.u32 %v1357, 7
        %v1359 = vsub.s32 0, %v1358
        %v1360 = vrot.slane %v1356, %v1359
        %v1361 = vmul.f32 %v1340, %v1360
        %v1362 = vmul.f32 %v1341, %v1360
        %v1363 = vmul.f32 %v1342, %v1360
        %v1364 = vmul.f32 %v1343, %v1360
        %v1365 = vmul.f32 %v1344, %v1360
        %v1366 = vmul.f32 %v1345, %v1360
        %v1367 = vmul.f32 %v1346, %v1360
        %v1368 = vmul.f32 %v1347, %v1360
        %v1369 = vmul.f32 %v1348, %v1360
        %v1370 = vmul.f32 %v1349, %v1360
        %v1371 = vmul.f32 %v1350, %v1360
        %v1372 = vmul.f32 %v1351, %v1360
        %v1373 = vmul.f32 %v1352, %v1360
        %v1374 = vmul.f32 %v1353, %v1360
        %v1375 = vmul.f32 %v1354, %v1360
        %v1376 = vmul.f32 %v1355, %v1360
        %v1377 = vadd.f32 %v1324, %v1361
        %v1378 = vadd.f32 %v1325, %v1362
        %v1379 = vadd.f32 %v1326, %v1363
        %v1380 = vadd.f32 %v1327, %v1364
        %v1381 = vadd.f32 %v1328, %v1365
        %v1382 = vadd.f32 %v1329, %v1366
        %v1383 = vadd.f32 %v1330, %v1367
        %v1384 = vadd.f32 %v1331, %v1368
        %v1385 = vadd.f32 %v1332, %v1369
        %v1386 = vadd.f32 %v1333, %v1370
        %v1387 = vadd.f32 %v1334, %v1371
        %v1388 = vadd.f32 %v1335, %v1372
        %v1389 = vadd.f32 %v1336, %v1373
        %v1390 = vadd.f32 %v1337, %v1374
        %v1391 = vadd.f32 %v1338, %v1375
        %v1392 = vadd.f32 %v1339, %v1376
        %v1393 = vld [vmem:[%s1285 + $0x4] sm:$0xff]
        %v1394 = vld [vmem:[%s1285 + $0xc] sm:$0xff]
        %v1395 = vld [vmem:[%s1285 + $0x1c] sm:$0xff]
        %v1396 = vld [vmem:[%s1285 + $0x24] sm:$0xff]
        %v1397 = vld [vmem:[%s1285 + $0x34] sm:$0xff]
        %v1398 = vld [vmem:[%s1285 + $0x3c] sm:$0xff]
        %v1399 = vld [vmem:[%s1285 + $0x4c] sm:$0xff]
        %v1400 = vld [vmem:[%s1285 + $0x54] sm:$0xff]
        %v1401 = vld [vmem:[%s1285 + $0x64] sm:$0xff]
        %v1402 = vld [vmem:[%s1285 + $0x6c] sm:$0xff]
        %v1403 = vld [vmem:[%s1285 + $0x7c] sm:$0xff]
        %v1404 = vld [vmem:[%s1285 + $0x84] sm:$0xff]
        %v1405 = vld [vmem:[%s1285 + $0x94] sm:$0xff]
        %v1406 = vld [vmem:[%s1285 + $0x9c] sm:$0xff]
        %v1407 = vld [vmem:[%s1285 + $0xac] sm:$0xff]
        %v1408 = vld [vmem:[%s1285 + $0xb4] sm:$0xff]
        %v1409 = vld [vmem:[%s1302 + $0x2] sm:$0x1]
        %v1410 = vlaneseq
        %v1411 = vshrl.u32 %v1410, 7
        %v1412 = vsub.s32 0, %v1411
        %v1413 = vrot.slane %v1409, %v1412
        %v1414 = vmul.f32 %v1393, %v1413
        %v1415 = vmul.f32 %v1394, %v1413
        %v1416 = vmul.f32 %v1395, %v1413
        %v1417 = vmul.f32 %v1396, %v1413
        %v1418 = vmul.f32 %v1397, %v1413
        %v1419 = vmul.f32 %v1398, %v1413
        %v1420 = vmul.f32 %v1399, %v1413
        %v1421 = vmul.f32 %v1400, %v1413
        %v1422 = vmul.f32 %v1401, %v1413
        %v1423 = vmul.f32 %v1402, %v1413
        %v1424 = vmul.f32 %v1403, %v1413
        %v1425 = vmul.f32 %v1404, %v1413
        %v1426 = vmul.f32 %v1405, %v1413
        %v1427 = vmul.f32 %v1406, %v1413
        %v1428 = vmul.f32 %v1407, %v1413
        %v1429 = vmul.f32 %v1408, %v1413
        %v1430 = vadd.f32 %v1377, %v1414
        %v1431 = vadd.f32 %v1378, %v1415
        %v1432 = vadd.f32 %v1379, %v1416
        %v1433 = vadd.f32 %v1380, %v1417
        %v1434 = vadd.f32 %v1381, %v1418
        %v1435 = vadd.f32 %v1382, %v1419
        %v1436 = vadd.f32 %v1383, %v1420
        %v1437 = vadd.f32 %v1384, %v1421
        %v1438 = vadd.f32 %v1385, %v1422
        %v1439 = vadd.f32 %v1386, %v1423
        %v1440 = vadd.f32 %v1387, %v1424
        %v1441 = vadd.f32 %v1388, %v1425
        %v1442 = vadd.f32 %v1389, %v1426
        %v1443 = vadd.f32 %v1390, %v1427
        %v1444 = vadd.f32 %v1391, %v1428
        %v1445 = vadd.f32 %v1392, %v1429
        %v1446 = vld [vmem:[%s1285 + $0x6] sm:$0xff]
        %v1447 = vld [vmem:[%s1285 + $0xe] sm:$0xff]
        %v1448 = vld [vmem:[%s1285 + $0x1e] sm:$0xff]
        %v1449 = vld [vmem:[%s1285 + $0x26] sm:$0xff]
        %v1450 = vld [vmem:[%s1285 + $0x36] sm:$0xff]
        %v1451 = vld [vmem:[%s1285 + $0x3e] sm:$0xff]
        %v1452 = vld [vmem:[%s1285 + $0x4e] sm:$0xff]
        %v1453 = vld [vmem:[%s1285 + $0x56] sm:$0xff]
        %v1454 = vld [vmem:[%s1285 + $0x66] sm:$0xff]
        %v1455 = vld [vmem:[%s1285 + $0x6e] sm:$0xff]
        %v1456 = vld [vmem:[%s1285 + $0x7e] sm:$0xff]
        %v1457 = vld [vmem:[%s1285 + $0x86] sm:$0xff]
        %v1458 = vld [vmem:[%s1285 + $0x96] sm:$0xff]
        %v1459 = vld [vmem:[%s1285 + $0x9e] sm:$0xff]
        %v1460 = vld [vmem:[%s1285 + $0xae] sm:$0xff]
        %v1461 = vld [vmem:[%s1285 + $0xb6] sm:$0xff]
        %v1462 = vld [vmem:[%s1302 + $0x3] sm:$0x1]
        %v1463 = vlaneseq
        %v1464 = vshrl.u32 %v1463, 7
        %v1465 = vsub.s32 0, %v1464
        %v1466 = vrot.slane %v1462, %v1465
        %v1467 = vmul.f32 %v1446, %v1466
        %v1468 = vmul.f32 %v1447, %v1466
        %v1469 = vmul.f32 %v1448, %v1466
        %v1470 = vmul.f32 %v1449, %v1466
        %v1471 = vmul.f32 %v1450, %v1466
        %v1472 = vmul.f32 %v1451, %v1466
        %v1473 = vmul.f32 %v1452, %v1466
        %v1474 = vmul.f32 %v1453, %v1466
        %v1475 = vmul.f32 %v1454, %v1466
        %v1476 = vmul.f32 %v1455, %v1466
        %v1477 = vmul.f32 %v1456, %v1466
        %v1478 = vmul.f32 %v1457, %v1466
        %v1479 = vmul.f32 %v1458, %v1466
        %v1480 = vmul.f32 %v1459, %v1466
        %v1481 = vmul.f32 %v1460, %v1466
        %v1482 = vmul.f32 %v1461, %v1466
        %v1483 = vadd.f32 %v1430, %v1467
        %v1484 = vadd.f32 %v1431, %v1468
        %v1485 = vadd.f32 %v1432, %v1469
        %v1486 = vadd.f32 %v1433, %v1470
        %v1487 = vadd.f32 %v1434, %v1471
        %v1488 = vadd.f32 %v1435, %v1472
        %v1489 = vadd.f32 %v1436, %v1473
        %v1490 = vadd.f32 %v1437, %v1474
        %v1491 = vadd.f32 %v1438, %v1475
        %v1492 = vadd.f32 %v1439, %v1476
        %v1493 = vadd.f32 %v1440, %v1477
        %v1494 = vadd.f32 %v1441, %v1478
        %v1495 = vadd.f32 %v1442, %v1479
        %v1496 = vadd.f32 %v1443, %v1480
        %v1497 = vadd.f32 %v1444, %v1481
        %v1498 = vadd.f32 %v1445, %v1482
        %v1499 = vld [vmem:[%s1285 + $0x10] sm:$0xff]
        %v1500 = vld [vmem:[%s1285 + $0x28] sm:$0xff]
        %v1501 = vld [vmem:[%s1285 + $0x40] sm:$0xff]
        %v1502 = vld [vmem:[%s1285 + $0x58] sm:$0xff]
        %v1503 = vld [vmem:[%s1285 + $0x70] sm:$0xff]
        %v1504 = vld [vmem:[%s1285 + $0x88] sm:$0xff]
        %v1505 = vld [vmem:[%s1285 + $0xa0] sm:$0xff]
        %v1506 = vld [vmem:[%s1285 + $0xb8] sm:$0xff]
        %v1507 = vld [vmem:[%s1302 + $0x4] sm:$0x1]
        %v1508 = vlaneseq
        %v1509 = vshrl.u32 %v1508, 7
        %v1510 = vsub.s32 0, %v1509
        %v1511 = vrot.slane %v1507, %v1510
        %v1512 = vmul.f32 %v1287, %v1511
        %v1513 = vmul.f32 %v1499, %v1511
        %v1514 = vmul.f32 %v1289, %v1511
        %v1515 = vmul.f32 %v1500, %v1511
        %v1516 = vmul.f32 %v1291, %v1511
        %v1517 = vmul.f32 %v1501, %v1511
        %v1518 = vmul.f32 %v1293, %v1511
        %v1519 = vmul.f32 %v1502, %v1511
        %v1520 = vmul.f32 %v1295, %v1511
        %v1521 = vmul.f32 %v1503, %v1511
        %v1522 = vmul.f32 %v1297, %v1511
        %v1523 = vmul.f32 %v1504, %v1511
        %v1524 = vmul.f32 %v1299, %v1511
        %v1525 = vmul.f32 %v1505, %v1511
        %v1526 = vmul.f32 %v1301, %v1511
        %v1527 = vmul.f32 %v1506, %v1511
        %v1528 = vadd.f32 %v1483, %v1512
        %v1529 = vadd.f32 %v1484, %v1513
        %v1530 = vadd.f32 %v1485, %v1514
        %v1531 = vadd.f32 %v1486, %v1515
        %v1532 = vadd.f32 %v1487, %v1516
        %v1533 = vadd.f32 %v1488, %v1517
        %v1534 = vadd.f32 %v1489, %v1518
        %v1535 = vadd.f32 %v1490, %v1519
        %v1536 = vadd.f32 %v1491, %v1520
        %v1537 = vadd.f32 %v1492, %v1521
        %v1538 = vadd.f32 %v1493, %v1522
        %v1539 = vadd.f32 %v1494, %v1523
        %v1540 = vadd.f32 %v1495, %v1524
        %v1541 = vadd.f32 %v1496, %v1525
        %v1542 = vadd.f32 %v1497, %v1526
        %v1543 = vadd.f32 %v1498, %v1527
        %s1544 = scalar_lea.vmem [#allocation2], 192
        %v1545 = vld [vmem:[%s1544] sm:$0xff]
        %v1546 = vld [vmem:[%s1544 + $0x8] sm:$0xff]
        %v1547 = vld [vmem:[%s1544 + $0x18] sm:$0xff]
        %v1548 = vld [vmem:[%s1544 + $0x20] sm:$0xff]
        %v1549 = vld [vmem:[%s1544 + $0x30] sm:$0xff]
        %v1550 = vld [vmem:[%s1544 + $0x38] sm:$0xff]
        %v1551 = vld [vmem:[%s1544 + $0x48] sm:$0xff]
        %v1552 = vld [vmem:[%s1544 + $0x50] sm:$0xff]
        %v1553 = vld [vmem:[%s1544 + $0x60] sm:$0xff]
        %v1554 = vld [vmem:[%s1544 + $0x68] sm:$0xff]
        %v1555 = vld [vmem:[%s1544 + $0x78] sm:$0xff]
        %v1556 = vld [vmem:[%s1544 + $0x80] sm:$0xff]
        %v1557 = vld [vmem:[%s1544 + $0x90] sm:$0xff]
        %v1558 = vld [vmem:[%s1544 + $0x98] sm:$0xff]
        %v1559 = vld [vmem:[%s1544 + $0xa8] sm:$0xff]
        %v1560 = vld [vmem:[%s1544 + $0xb0] sm:$0xff]
        %s1561 = scalar_lea.vmem %s1, 32
        %v1562 = vld [vmem:[%s1561] sm:$0x1]
        %v1563 = vlaneseq
        %v1564 = vshrl.u32 %v1563, 7
        %v1565 = vsub.s32 0, %v1564
        %v1566 = vrot.slane %v1562, %v1565
        %v1567 = vmul.f32 %v1545, %v1566
        %v1568 = vmul.f32 %v1546, %v1566
        %v1569 = vmul.f32 %v1547, %v1566
        %v1570 = vmul.f32 %v1548, %v1566
        %v1571 = vmul.f32 %v1549, %v1566
        %v1572 = vmul.f32 %v1550, %v1566
        %v1573 = vmul.f32 %v1551, %v1566
        %v1574 = vmul.f32 %v1552, %v1566
        %v1575 = vmul.f32 %v1553, %v1566
        %v1576 = vmul.f32 %v1554, %v1566
        %v1577 = vmul.f32 %v1555, %v1566
        %v1578 = vmul.f32 %v1556, %v1566
        %v1579 = vmul.f32 %v1557, %v1566
        %v1580 = vmul.f32 %v1558, %v1566
        %v1581 = vmul.f32 %v1559, %v1566
        %v1582 = vmul.f32 %v1560, %v1566
        %v1583 = vadd.f32 %v1528, %v1567
        %v1584 = vadd.f32 %v1529, %v1568
        %v1585 = vadd.f32 %v1530, %v1569
        %v1586 = vadd.f32 %v1531, %v1570
        %v1587 = vadd.f32 %v1532, %v1571
        %v1588 = vadd.f32 %v1533, %v1572
        %v1589 = vadd.f32 %v1534, %v1573
        %v1590 = vadd.f32 %v1535, %v1574
        %v1591 = vadd.f32 %v1536, %v1575
        %v1592 = vadd.f32 %v1537, %v1576
        %v1593 = vadd.f32 %v1538, %v1577
        %v1594 = vadd.f32 %v1539, %v1578
        %v1595 = vadd.f32 %v1540, %v1579
        %v1596 = vadd.f32 %v1541, %v1580
        %v1597 = vadd.f32 %v1542, %v1581
        %v1598 = vadd.f32 %v1543, %v1582
        %v1599 = vld [vmem:[%s1544 + $0x2] sm:$0xff]
        %v1600 = vld [vmem:[%s1544 + $0xa] sm:$0xff]
        %v1601 = vld [vmem:[%s1544 + $0x1a] sm:$0xff]
        %v1602 = vld [vmem:[%s1544 + $0x22] sm:$0xff]
        %v1603 = vld [vmem:[%s1544 + $0x32] sm:$0xff]
        %v1604 = vld [vmem:[%s1544 + $0x3a] sm:$0xff]
        %v1605 = vld [vmem:[%s1544 + $0x4a] sm:$0xff]
        %v1606 = vld [vmem:[%s1544 + $0x52] sm:$0xff]
        %v1607 = vld [vmem:[%s1544 + $0x62] sm:$0xff]
        %v1608 = vld [vmem:[%s1544 + $0x6a] sm:$0xff]
        %v1609 = vld [vmem:[%s1544 + $0x7a] sm:$0xff]
        %v1610 = vld [vmem:[%s1544 + $0x82] sm:$0xff]
        %v1611 = vld [vmem:[%s1544 + $0x92] sm:$0xff]
        %v1612 = vld [vmem:[%s1544 + $0x9a] sm:$0xff]
        %v1613 = vld [vmem:[%s1544 + $0xaa] sm:$0xff]
        %v1614 = vld [vmem:[%s1544 + $0xb2] sm:$0xff]
        %v1615 = vld [vmem:[%s1561 + $0x1] sm:$0x1]
        %v1616 = vlaneseq
        %v1617 = vshrl.u32 %v1616, 7
        %v1618 = vsub.s32 0, %v1617
        %v1619 = vrot.slane %v1615, %v1618
        %v1620 = vmul.f32 %v1599, %v1619
        %v1621 = vmul.f32 %v1600, %v1619
        %v1622 = vmul.f32 %v1601, %v1619
        %v1623 = vmul.f32 %v1602, %v1619
        %v1624 = vmul.f32 %v1603, %v1619
        %v1625 = vmul.f32 %v1604, %v1619
        %v1626 = vmul.f32 %v1605, %v1619
        %v1627 = vmul.f32 %v1606, %v1619
        %v1628 = vmul.f32 %v1607, %v1619
        %v1629 = vmul.f32 %v1608, %v1619
        %v1630 = vmul.f32 %v1609, %v1619
        %v1631 = vmul.f32 %v1610, %v1619
        %v1632 = vmul.f32 %v1611, %v1619
        %v1633 = vmul.f32 %v1612, %v1619
        %v1634 = vmul.f32 %v1613, %v1619
        %v1635 = vmul.f32 %v1614, %v1619
        %v1636 = vadd.f32 %v1583, %v1620
        %v1637 = vadd.f32 %v1584, %v1621
        %v1638 = vadd.f32 %v1585, %v1622
        %v1639 = vadd.f32 %v1586, %v1623
        %v1640 = vadd.f32 %v1587, %v1624
        %v1641 = vadd.f32 %v1588, %v1625
        %v1642 = vadd.f32 %v1589, %v1626
        %v1643 = vadd.f32 %v1590, %v1627
        %v1644 = vadd.f32 %v1591, %v1628
        %v1645 = vadd.f32 %v1592, %v1629
        %v1646 = vadd.f32 %v1593, %v1630
        %v1647 = vadd.f32 %v1594, %v1631
        %v1648 = vadd.f32 %v1595, %v1632
        %v1649 = vadd.f32 %v1596, %v1633
        %v1650 = vadd.f32 %v1597, %v1634
        %v1651 = vadd.f32 %v1598, %v1635
        %v1652 = vld [vmem:[%s1544 + $0x4] sm:$0xff]
        %v1653 = vld [vmem:[%s1544 + $0xc] sm:$0xff]
        %v1654 = vld [vmem:[%s1544 + $0x1c] sm:$0xff]
        %v1655 = vld [vmem:[%s1544 + $0x24] sm:$0xff]
        %v1656 = vld [vmem:[%s1544 + $0x34] sm:$0xff]
        %v1657 = vld [vmem:[%s1544 + $0x3c] sm:$0xff]
        %v1658 = vld [vmem:[%s1544 + $0x4c] sm:$0xff]
        %v1659 = vld [vmem:[%s1544 + $0x54] sm:$0xff]
        %v1660 = vld [vmem:[%s1544 + $0x64] sm:$0xff]
        %v1661 = vld [vmem:[%s1544 + $0x6c] sm:$0xff]
        %v1662 = vld [vmem:[%s1544 + $0x7c] sm:$0xff]
        %v1663 = vld [vmem:[%s1544 + $0x84] sm:$0xff]
        %v1664 = vld [vmem:[%s1544 + $0x94] sm:$0xff]
        %v1665 = vld [vmem:[%s1544 + $0x9c] sm:$0xff]
        %v1666 = vld [vmem:[%s1544 + $0xac] sm:$0xff]
        %v1667 = vld [vmem:[%s1544 + $0xb4] sm:$0xff]
        %v1668 = vld [vmem:[%s1561 + $0x2] sm:$0x1]
        %v1669 = vlaneseq
        %v1670 = vshrl.u32 %v1669, 7
        %v1671 = vsub.s32 0, %v1670
        %v1672 = vrot.slane %v1668, %v1671
        %v1673 = vmul.f32 %v1652, %v1672
        %v1674 = vmul.f32 %v1653, %v1672
        %v1675 = vmul.f32 %v1654, %v1672
        %v1676 = vmul.f32 %v1655, %v1672
        %v1677 = vmul.f32 %v1656, %v1672
        %v1678 = vmul.f32 %v1657, %v1672
        %v1679 = vmul.f32 %v1658, %v1672
        %v1680 = vmul.f32 %v1659, %v1672
        %v1681 = vmul.f32 %v1660, %v1672
        %v1682 = vmul.f32 %v1661, %v1672
        %v1683 = vmul.f32 %v1662, %v1672
        %v1684 = vmul.f32 %v1663, %v1672
        %v1685 = vmul.f32 %v1664, %v1672
        %v1686 = vmul.f32 %v1665, %v1672
        %v1687 = vmul.f32 %v1666, %v1672
        %v1688 = vmul.f32 %v1667, %v1672
        %v1689 = vadd.f32 %v1636, %v1673
        %v1690 = vadd.f32 %v1637, %v1674
        %v1691 = vadd.f32 %v1638, %v1675
        %v1692 = vadd.f32 %v1639, %v1676
        %v1693 = vadd.f32 %v1640, %v1677
        %v1694 = vadd.f32 %v1641, %v1678
        %v1695 = vadd.f32 %v1642, %v1679
        %v1696 = vadd.f32 %v1643, %v1680
        %v1697 = vadd.f32 %v1644, %v1681
        %v1698 = vadd.f32 %v1645, %v1682
        %v1699 = vadd.f32 %v1646, %v1683
        %v1700 = vadd.f32 %v1647, %v1684
        %v1701 = vadd.f32 %v1648, %v1685
        %v1702 = vadd.f32 %v1649, %v1686
        %v1703 = vadd.f32 %v1650, %v1687
        %v1704 = vadd.f32 %v1651, %v1688
        %v1705 = vld [vmem:[%s1544 + $0x6] sm:$0xff]
        %v1706 = vld [vmem:[%s1544 + $0xe] sm:$0xff]
        %v1707 = vld [vmem:[%s1544 + $0x1e] sm:$0xff]
        %v1708 = vld [vmem:[%s1544 + $0x26] sm:$0xff]
        %v1709 = vld [vmem:[%s1544 + $0x36] sm:$0xff]
        %v1710 = vld [vmem:[%s1544 + $0x3e] sm:$0xff]
        %v1711 = vld [vmem:[%s1544 + $0x4e] sm:$0xff]
        %v1712 = vld [vmem:[%s1544 + $0x56] sm:$0xff]
        %v1713 = vld [vmem:[%s1544 + $0x66] sm:$0xff]
        %v1714 = vld [vmem:[%s1544 + $0x6e] sm:$0xff]
        %v1715 = vld [vmem:[%s1544 + $0x7e] sm:$0xff]
        %v1716 = vld [vmem:[%s1544 + $0x86] sm:$0xff]
        %v1717 = vld [vmem:[%s1544 + $0x96] sm:$0xff]
        %v1718 = vld [vmem:[%s1544 + $0x9e] sm:$0xff]
        %v1719 = vld [vmem:[%s1544 + $0xae] sm:$0xff]
        %v1720 = vld [vmem:[%s1544 + $0xb6] sm:$0xff]
        %v1721 = vld [vmem:[%s1561 + $0x3] sm:$0x1]
        %v1722 = vlaneseq
        %v1723 = vshrl.u32 %v1722, 7
        %v1724 = vsub.s32 0, %v1723
        %v1725 = vrot.slane %v1721, %v1724
        %v1726 = vmul.f32 %v1705, %v1725
        %v1727 = vmul.f32 %v1706, %v1725
        %v1728 = vmul.f32 %v1707, %v1725
        %v1729 = vmul.f32 %v1708, %v1725
        %v1730 = vmul.f32 %v1709, %v1725
        %v1731 = vmul.f32 %v1710, %v1725
        %v1732 = vmul.f32 %v1711, %v1725
        %v1733 = vmul.f32 %v1712, %v1725
        %v1734 = vmul.f32 %v1713, %v1725
        %v1735 = vmul.f32 %v1714, %v1725
        %v1736 = vmul.f32 %v1715, %v1725
        %v1737 = vmul.f32 %v1716, %v1725
        %v1738 = vmul.f32 %v1717, %v1725
        %v1739 = vmul.f32 %v1718, %v1725
        %v1740 = vmul.f32 %v1719, %v1725
        %v1741 = vmul.f32 %v1720, %v1725
        %v1742 = vadd.f32 %v1689, %v1726
        %v1743 = vadd.f32 %v1690, %v1727
        %v1744 = vadd.f32 %v1691, %v1728
        %v1745 = vadd.f32 %v1692, %v1729
        %v1746 = vadd.f32 %v1693, %v1730
        %v1747 = vadd.f32 %v1694, %v1731
        %v1748 = vadd.f32 %v1695, %v1732
        %v1749 = vadd.f32 %v1696, %v1733
        %v1750 = vadd.f32 %v1697, %v1734
        %v1751 = vadd.f32 %v1698, %v1735
        %v1752 = vadd.f32 %v1699, %v1736
        %v1753 = vadd.f32 %v1700, %v1737
        %v1754 = vadd.f32 %v1701, %v1738
        %v1755 = vadd.f32 %v1702, %v1739
        %v1756 = vadd.f32 %v1703, %v1740
        %v1757 = vadd.f32 %v1704, %v1741
        %v1758 = vld [vmem:[%s1544 + $0x10] sm:$0xff]
        %v1759 = vld [vmem:[%s1544 + $0x28] sm:$0xff]
        %v1760 = vld [vmem:[%s1544 + $0x40] sm:$0xff]
        %v1761 = vld [vmem:[%s1544 + $0x58] sm:$0xff]
        %v1762 = vld [vmem:[%s1544 + $0x70] sm:$0xff]
        %v1763 = vld [vmem:[%s1544 + $0x88] sm:$0xff]
        %v1764 = vld [vmem:[%s1544 + $0xa0] sm:$0xff]
        %v1765 = vld [vmem:[%s1544 + $0xb8] sm:$0xff]
        %v1766 = vld [vmem:[%s1561 + $0x4] sm:$0x1]
        %v1767 = vlaneseq
        %v1768 = vshrl.u32 %v1767, 7
        %v1769 = vsub.s32 0, %v1768
        %v1770 = vrot.slane %v1766, %v1769
        %v1771 = vmul.f32 %v1546, %v1770
        %v1772 = vmul.f32 %v1758, %v1770
        %v1773 = vmul.f32 %v1548, %v1770
        %v1774 = vmul.f32 %v1759, %v1770
        %v1775 = vmul.f32 %v1550, %v1770
        %v1776 = vmul.f32 %v1760, %v1770
        %v1777 = vmul.f32 %v1552, %v1770
        %v1778 = vmul.f32 %v1761, %v1770
        %v1779 = vmul.f32 %v1554, %v1770
        %v1780 = vmul.f32 %v1762, %v1770
        %v1781 = vmul.f32 %v1556, %v1770
        %v1782 = vmul.f32 %v1763, %v1770
        %v1783 = vmul.f32 %v1558, %v1770
        %v1784 = vmul.f32 %v1764, %v1770
        %v1785 = vmul.f32 %v1560, %v1770
        %v1786 = vmul.f32 %v1765, %v1770
        %v1787 = vadd.f32 %v1742, %v1771
        %v1788 = vadd.f32 %v1743, %v1772
        %v1789 = vadd.f32 %v1744, %v1773
        %v1790 = vadd.f32 %v1745, %v1774
        %v1791 = vadd.f32 %v1746, %v1775
        %v1792 = vadd.f32 %v1747, %v1776
        %v1793 = vadd.f32 %v1748, %v1777
        %v1794 = vadd.f32 %v1749, %v1778
        %v1795 = vadd.f32 %v1750, %v1779
        %v1796 = vadd.f32 %v1751, %v1780
        %v1797 = vadd.f32 %v1752, %v1781
        %v1798 = vadd.f32 %v1753, %v1782
        %v1799 = vadd.f32 %v1754, %v1783
        %v1800 = vadd.f32 %v1755, %v1784
        %v1801 = vadd.f32 %v1756, %v1785
        %v1802 = vadd.f32 %v1757, %v1786
        %v1804 = vlaneseq
        %v1805 = vshrl.u32 %v1804, 7
        %v1806 = vsub.s32 0, %v1805
        %v1807 = vrot.slane %v510, %v1806
        %1809 = vmatprep.subr.mxu0 0.0
        %1810 = vmatpush1.msra.mxu0 %v494
        %1811 = vmatprep.subr.mxu0 0.0
        %1812 = vmatpush1.msra.mxu0 %v495
        %1813 = vmatprep.subr.mxu0 0.0
        %1814 = vmatpush1.msra.mxu0 %v496
        %1815 = vmatprep.subr.mxu0 0.0
        %1816 = vmatpush1.msra.mxu0 %v497
        %1817 = vmatprep.subr.mxu0 0.0
        %1818 = vmatpush1.msra.mxu0 %v498
        %1819 = vmatprep.subr.mxu0 0.0
        %1820 = vmatpush1.msra.mxu0 %v499
        %1821 = vmatprep.subr.mxu0 0.0
        %1822 = vmatpush1.msra.mxu0 %v500
        %1823 = vmatprep.subr.mxu0 0.0
        %1824 = vmatpush1.msra.mxu0 %v501
        %1825 = vmatprep.subr.mxu0 0.0
        %1826 = vmatpush1.msra.mxu0 %v502
        %1827 = vmatprep.subr.mxu0 0.0
        %1828 = vmatpush1.msra.mxu0 %v503
        %1829 = vmatprep.subr.mxu0 0.0
        %1830 = vmatpush1.msra.mxu0 %v504
        %1831 = vmatprep.subr.mxu0 0.0
        %1832 = vmatpush1.msra.mxu0 %v505
        %1833 = vmatprep.subr.mxu0 0.0
        %1834 = vmatpush1.msra.mxu0 %v506
        %1835 = vmatprep.subr.mxu0 0.0
        %1836 = vmatpush1.msra.mxu0 %v507
        %1837 = vmatprep.subr.mxu0 0.0
        %1838 = vmatpush1.msra.mxu0 %v508
        %1839 = vmatprep.subr.mxu0 0.0
        %1840 = vmatpush1.msra.mxu0 %v509
        %1841 = vmatprep.subr.mxu0 0.0
        %1842 = vmatpush1.msra.mxu0 0.0
        %1843 = vmatprep.subr.mxu0 0.0
        %1844 = vmatpush1.msra.mxu0 0.0
        %1845 = vmatprep.subr.mxu0 0.0
        %1846 = vmatpush1.msra.mxu0 0.0
        %1847 = vmatprep.subr.mxu0 0.0
        %1848 = vmatpush1.msra.mxu0 0.0
        %1849 = vmatprep.subr.mxu0 0.0
        %1850 = vmatpush1.msra.mxu0 0.0
        %1851 = vmatprep.subr.mxu0 0.0
        %1852 = vmatpush1.msra.mxu0 0.0
        %1853 = vmatprep.subr.mxu0 0.0
        %1854 = vmatpush1.msra.mxu0 0.0
        %1855 = vmatprep.subr.mxu0 0.0
        %1856 = vmatpush1.msra.mxu0 0.0
        %1857 = vmatprep.subr.mxu0 0.0
        %1858 = vmatpush1.msra.mxu0 0.0
        %1859 = vmatprep.subr.mxu0 0.0
        %1860 = vmatpush1.msra.mxu0 0.0
        %1861 = vmatprep.subr.mxu0 0.0
        %1862 = vmatpush1.msra.mxu0 0.0
        %1863 = vmatprep.subr.mxu0 0.0
        %1864 = vmatpush1.msra.mxu0 0.0
        %1865 = vmatprep.subr.mxu0 0.0
        %1866 = vmatpush1.msra.mxu0 0.0
        %1867 = vmatprep.subr.mxu0 0.0
        %1868 = vmatpush1.msra.mxu0 0.0
        %1869 = vmatprep.subr.mxu0 0.0
        %1870 = vmatpush1.msra.mxu0 0.0
        %1871 = vmatprep.subr.mxu0 0.0
        %1872 = vmatpush1.msra.mxu0 0.0
        %1873 = vmatprep.mubr.f32.mxu0 0.0
        %1874 = vmatmul.mubr.f32.gmra.mrb[0].mxu0 %v1787
        %v1875 = vpop.f32.mrb[0].mxu0
        %v1876 = vadd.f32 %v1807, %v1875
        %v1877 = vpop.f32.mrb[0].mxu0
        %1878 = vmatprep.mubr.f32.mxu0 0.0
        %1879 = vmatmul.mubr.f32.gmra.mrb[0].mxu0 %v1788
        %v1880 = vpop.f32.mrb[0].mxu0
        %v1881 = vadd.f32 %v1807, %v1880
        %v1882 = vpop.f32.mrb[0].mxu0
        %1883 = vmatprep.mubr.f32.mxu0 0.0
        %1884 = vmatmul.mubr.f32.gmra.mrb[0].mxu0 %v1789
        %v1885 = vpop.f32.mrb[0].mxu0
        %v1886 = vadd.f32 %v1807, %v1885
        %v1887 = vpop.f32.mrb[0].mxu0
        %1888 = vmatprep.mubr.f32.mxu0 0.0
        %1889 = vmatmul.mubr.f32.gmra.mrb[0].mxu0 %v1790
        %v1890 = vpop.f32.mrb[0].mxu0
        %v1891 = vadd.f32 %v1807, %v1890
        %v1892 = vpop.f32.mrb[0].mxu0
        %1893 = vmatprep.mubr.f32.mxu0 0.0
        %1894 = vmatmul.mubr.f32.gmra.mrb[0].mxu0 %v1791
        %v1895 = vpop.f32.mrb[0].mxu0
        %v1896 = vadd.f32 %v1807, %v1895
        %v1897 = vpop.f32.mrb[0].mxu0
        %1898 = vmatprep.mubr.f32.mxu0 0.0
        %1899 = vmatmul.mubr.f32.gmra.mrb[0].mxu0 %v1792
        %v1900 = vpop.f32.mrb[0].mxu0
        %v1901 = vadd.f32 %v1807, %v1900
        %v1902 = vpop.f32.mrb[0].mxu0
        %1903 = vmatprep.mubr.f32.mxu0 0.0
        %1904 = vmatmul.mubr.f32.gmra.mrb[0].mxu0 %v1793
        %v1905 = vpop.f32.mrb[0].mxu0
        %v1906 = vadd.f32 %v1807, %v1905
        %v1907 = vpop.f32.mrb[0].mxu0
        %1908 = vmatprep.mubr.f32.mxu0 0.0
        %1909 = vmatmul.mubr.f32.gmra.mrb[0].mxu0 %v1794
        %v1910 = vpop.f32.mrb[0].mxu0
        %v1911 = vadd.f32 %v1807, %v1910
        %v1912 = vpop.f32.mrb[0].mxu0
        %1913 = vmatprep.mubr.f32.mxu0 0.0
        %1914 = vmatmul.mubr.f32.gmra.mrb[0].mxu0 %v1795
        %v1915 = vpop.f32.mrb[0].mxu0
        %v1916 = vadd.f32 %v1807, %v1915
        %v1917 = vpop.f32.mrb[0].mxu0
        %1918 = vmatprep.mubr.f32.mxu0 0.0
        %1919 = vmatmul.mubr.f32.gmra.mrb[0].mxu0 %v1796
        %v1920 = vpop.f32.mrb[0].mxu0
        %v1921 = vadd.f32 %v1807, %v1920
        %v1922 = vpop.f32.mrb[0].mxu0
        %1923 = vmatprep.mubr.f32.mxu0 0.0
        %1924 = vmatmul.mubr.f32.gmra.mrb[0].mxu0 %v1797
        %v1925 = vpop.f32.mrb[0].mxu0
        %v1926 = vadd.f32 %v1807, %v1925
        %v1927 = vpop.f32.mrb[0].mxu0
        %1928 = vmatprep.mubr.f32.mxu0 0.0
        %1929 = vmatmul.mubr.f32.gmra.mrb[0].mxu0 %v1798
        %v1930 = vpop.f32.mrb[0].mxu0
        %v1931 = vadd.f32 %v1807, %v1930
        %v1932 = vpop.f32.mrb[0].mxu0
        %1933 = vmatprep.mubr.f32.mxu0 0.0
        %1934 = vmatmul.mubr.f32.gmra.mrb[0].mxu0 %v1799
        %v1935 = vpop.f32.mrb[0].mxu0
        %v1936 = vadd.f32 %v1807, %v1935
        %v1937 = vpop.f32.mrb[0].mxu0
        %1938 = vmatprep.mubr.f32.mxu0 0.0
        %1939 = vmatmul.mubr.f32.gmra.mrb[0].mxu0 %v1800
        %v1940 = vpop.f32.mrb[0].mxu0
        %v1941 = vadd.f32 %v1807, %v1940
        %v1942 = vpop.f32.mrb[0].mxu0
        %1943 = vmatprep.mubr.f32.mxu0 0.0
        %1944 = vmatmul.mubr.f32.gmra.mrb[0].mxu0 %v1801
        %v1945 = vpop.f32.mrb[0].mxu0
        %v1946 = vadd.f32 %v1807, %v1945
        %v1947 = vpop.f32.mrb[0].mxu0
        %1948 = vmatprep.mubr.f32.mxu0 0.0
        %1949 = vmatmul.mubr.f32.gmra.mrb[0].mxu0 %v1802
        %v1950 = vpop.f32.mrb[0].mxu0
        %v1951 = vadd.f32 %v1807, %v1950
        %v1952 = vpop.f32.mrb[0].mxu0
        %1953 = vdwg.mxu0
        %1954 = vst.msk [vmem:[%s190] sm:$0xff] %vm428, %v1876
        %1955 = vst.msk [vmem:[%s190 + $0x8] sm:$0xff] %vm428, %v1881
        %1956 = vst.msk [vmem:[%s190 + $0x10] sm:$0xff] %vm428, %v1886
        %1957 = vst.msk [vmem:[%s190 + $0x18] sm:$0xff] %vm428, %v1891
        %1958 = vst.msk [vmem:[%s190 + $0x20] sm:$0xff] %vm428, %v1896
        %1959 = vst.msk [vmem:[%s190 + $0x28] sm:$0xff] %vm428, %v1901
        %1960 = vst.msk [vmem:[%s190 + $0x30] sm:$0xff] %vm428, %v1906
        %1961 = vst.msk [vmem:[%s190 + $0x38] sm:$0xff] %vm428, %v1911
        %1962 = vst.msk [vmem:[%s190 + $0x40] sm:$0xff] %vm428, %v1916
        %1963 = vst.msk [vmem:[%s190 + $0x48] sm:$0xff] %vm428, %v1921
        %1964 = vst.msk [vmem:[%s190 + $0x50] sm:$0xff] %vm428, %v1926
        %1965 = vst.msk [vmem:[%s190 + $0x58] sm:$0xff] %vm428, %v1931
        %1966 = vst.msk [vmem:[%s190 + $0x60] sm:$0xff] %vm428, %v1936
        %1967 = vst.msk [vmem:[%s190 + $0x68] sm:$0xff] %vm428, %v1941
        %1968 = vst.msk [vmem:[%s190 + $0x70] sm:$0xff] %vm428, %v1946
        %1969 = vst.msk [vmem:[%s190 + $0x78] sm:$0xff] %vm428, %v1951
        %v1970 = vld [vmem:[%s1544] sm:$0xff]
        %v1971 = vld [vmem:[%s1544 + $0x8] sm:$0xff]
        %v1972 = vld [vmem:[%s1544 + $0x18] sm:$0xff]
        %v1973 = vld [vmem:[%s1544 + $0x20] sm:$0xff]
        %v1974 = vld [vmem:[%s1544 + $0x30] sm:$0xff]
        %v1975 = vld [vmem:[%s1544 + $0x38] sm:$0xff]
        %v1976 = vld [vmem:[%s1544 + $0x48] sm:$0xff]
        %v1977 = vld [vmem:[%s1544 + $0x50] sm:$0xff]
        %v1978 = vld [vmem:[%s1544 + $0x60] sm:$0xff]
        %v1979 = vld [vmem:[%s1544 + $0x68] sm:$0xff]
        %v1980 = vld [vmem:[%s1544 + $0x78] sm:$0xff]
        %v1981 = vld [vmem:[%s1544 + $0x80] sm:$0xff]
        %v1982 = vld [vmem:[%s1544 + $0x90] sm:$0xff]
        %v1983 = vld [vmem:[%s1544 + $0x98] sm:$0xff]
        %v1984 = vld [vmem:[%s1544 + $0xa8] sm:$0xff]
        %v1985 = vld [vmem:[%s1544 + $0xb0] sm:$0xff]
        %v1986 = vld [vmem:[%s1] sm:$0x1]
        %v1987 = vlaneseq
        %v1988 = vshrl.u32 %v1987, 7
        %v1989 = vsub.s32 0, %v1988
        %v1990 = vrot.slane %v1986, %v1989
        %v1991 = vmul.f32 %v1970, %v1990
        %v1992 = vmul.f32 %v1971, %v1990
        %v1993 = vmul.f32 %v1972, %v1990
        %v1994 = vmul.f32 %v1973, %v1990
        %v1995 = vmul.f32 %v1974, %v1990
        %v1996 = vmul.f32 %v1975, %v1990
        %v1997 = vmul.f32 %v1976, %v1990
        %v1998 = vmul.f32 %v1977, %v1990
        %v1999 = vmul.f32 %v1978, %v1990
        %v2000 = vmul.f32 %v1979, %v1990
        %v2001 = vmul.f32 %v1980, %v1990
        %v2002 = vmul.f32 %v1981, %v1990
        %v2003 = vmul.f32 %v1982, %v1990
        %v2004 = vmul.f32 %v1983, %v1990
        %v2005 = vmul.f32 %v1984, %v1990
        %v2006 = vmul.f32 %v1985, %v1990
        %v2007 = vadd.f32 %v1991, 0.0
        %v2008 = vadd.f32 %v1992, 0.0
        %v2009 = vadd.f32 %v1993, 0.0
        %v2010 = vadd.f32 %v1994, 0.0
        %v2011 = vadd.f32 %v1995, 0.0
        %v2012 = vadd.f32 %v1996, 0.0
        %v2013 = vadd.f32 %v1997, 0.0
        %v2014 = vadd.f32 %v1998, 0.0
        %v2015 = vadd.f32 %v1999, 0.0
        %v2016 = vadd.f32 %v2000, 0.0
        %v2017 = vadd.f32 %v2001, 0.0
        %v2018 = vadd.f32 %v2002, 0.0
        %v2019 = vadd.f32 %v2003, 0.0
        %v2020 = vadd.f32 %v2004, 0.0
        %v2021 = vadd.f32 %v2005, 0.0
        %v2022 = vadd.f32 %v2006, 0.0
        %v2023 = vld [vmem:[%s1544 + $0x2] sm:$0xff]
        %v2024 = vld [vmem:[%s1544 + $0xa] sm:$0xff]
        %v2025 = vld [vmem:[%s1544 + $0x1a] sm:$0xff]
        %v2026 = vld [vmem:[%s1544 + $0x22] sm:$0xff]
        %v2027 = vld [vmem:[%s1544 + $0x32] sm:$0xff]
        %v2028 = vld [vmem:[%s1544 + $0x3a] sm:$0xff]
        %v2029 = vld [vmem:[%s1544 + $0x4a] sm:$0xff]
        %v2030 = vld [vmem:[%s1544 + $0x52] sm:$0xff]
        %v2031 = vld [vmem:[%s1544 + $0x62] sm:$0xff]
        %v2032 = vld [vmem:[%s1544 + $0x6a] sm:$0xff]
        %v2033 = vld [vmem:[%s1544 + $0x7a] sm:$0xff]
        %v2034 = vld [vmem:[%s1544 + $0x82] sm:$0xff]
        %v2035 = vld [vmem:[%s1544 + $0x92] sm:$0xff]
        %v2036 = vld [vmem:[%s1544 + $0x9a] sm:$0xff]
        %v2037 = vld [vmem:[%s1544 + $0xaa] sm:$0xff]
        %v2038 = vld [vmem:[%s1544 + $0xb2] sm:$0xff]
        %v2039 = vld [vmem:[%s1 + $0x1] sm:$0x1]
        %v2040 = vlaneseq
        %v2041 = vshrl.u32 %v2040, 7
        %v2042 = vsub.s32 0, %v2041
        %v2043 = vrot.slane %v2039, %v2042
        %v2044 = vmul.f32 %v2023, %v2043
        %v2045 = vmul.f32 %v2024, %v2043
        %v2046 = vmul.f32 %v2025, %v2043
        %v2047 = vmul.f32 %v2026, %v2043
        %v2048 = vmul.f32 %v2027, %v2043
        %v2049 = vmul.f32 %v2028, %v2043
        %v2050 = vmul.f32 %v2029, %v2043
        %v2051 = vmul.f32 %v2030, %v2043
        %v2052 = vmul.f32 %v2031, %v2043
        %v2053 = vmul.f32 %v2032, %v2043
        %v2054 = vmul.f32 %v2033, %v2043
        %v2055 = vmul.f32 %v2034, %v2043
        %v2056 = vmul.f32 %v2035, %v2043
        %v2057 = vmul.f32 %v2036, %v2043
        %v2058 = vmul.f32 %v2037, %v2043
        %v2059 = vmul.f32 %v2038, %v2043
        %v2060 = vadd.f32 %v2007, %v2044
        %v2061 = vadd.f32 %v2008, %v2045
        %v2062 = vadd.f32 %v2009, %v2046
        %v2063 = vadd.f32 %v2010, %v2047
        %v2064 = vadd.f32 %v2011, %v2048
        %v2065 = vadd.f32 %v2012, %v2049
        %v2066 = vadd.f32 %v2013, %v2050
        %v2067 = vadd.f32 %v2014, %v2051
        %v2068 = vadd.f32 %v2015, %v2052
        %v2069 = vadd.f32 %v2016, %v2053
        %v2070 = vadd.f32 %v2017, %v2054
        %v2071 = vadd.f32 %v2018, %v2055
        %v2072 = vadd.f32 %v2019, %v2056
        %v2073 = vadd.f32 %v2020, %v2057
        %v2074 = vadd.f32 %v2021, %v2058
        %v2075 = vadd.f32 %v2022, %v2059
        %v2076 = vld [vmem:[%s1544 + $0x4] sm:$0xff]
        %v2077 = vld [vmem:[%s1544 + $0xc] sm:$0xff]
        %v2078 = vld [vmem:[%s1544 + $0x1c] sm:$0xff]
        %v2079 = vld [vmem:[%s1544 + $0x24] sm:$0xff]
        %v2080 = vld [vmem:[%s1544 + $0x34] sm:$0xff]
        %v2081 = vld [vmem:[%s1544 + $0x3c] sm:$0xff]
        %v2082 = vld [vmem:[%s1544 + $0x4c] sm:$0xff]
        %v2083 = vld [vmem:[%s1544 + $0x54] sm:$0xff]
        %v2084 = vld [vmem:[%s1544 + $0x64] sm:$0xff]
        %v2085 = vld [vmem:[%s1544 + $0x6c] sm:$0xff]
        %v2086 = vld [vmem:[%s1544 + $0x7c] sm:$0xff]
        %v2087 = vld [vmem:[%s1544 + $0x84] sm:$0xff]
        %v2088 = vld [vmem:[%s1544 + $0x94] sm:$0xff]
        %v2089 = vld [vmem:[%s1544 + $0x9c] sm:$0xff]
        %v2090 = vld [vmem:[%s1544 + $0xac] sm:$0xff]
        %v2091 = vld [vmem:[%s1544 + $0xb4] sm:$0xff]
        %v2092 = vld [vmem:[%s1 + $0x2] sm:$0x1]
        %v2093 = vlaneseq
        %v2094 = vshrl.u32 %v2093, 7
        %v2095 = vsub.s32 0, %v2094
        %v2096 = vrot.slane %v2092, %v2095
        %v2097 = vmul.f32 %v2076, %v2096
        %v2098 = vmul.f32 %v2077, %v2096
        %v2099 = vmul.f32 %v2078, %v2096
        %v2100 = vmul.f32 %v2079, %v2096
        %v2101 = vmul.f32 %v2080, %v2096
        %v2102 = vmul.f32 %v2081, %v2096
        %v2103 = vmul.f32 %v2082, %v2096
        %v2104 = vmul.f32 %v2083, %v2096
        %v2105 = vmul.f32 %v2084, %v2096
        %v2106 = vmul.f32 %v2085, %v2096
        %v2107 = vmul.f32 %v2086, %v2096
        %v2108 = vmul.f32 %v2087, %v2096
        %v2109 = vmul.f32 %v2088, %v2096
        %v2110 = vmul.f32 %v2089, %v2096
        %v2111 = vmul.f32 %v2090, %v2096
        %v2112 = vmul.f32 %v2091, %v2096
        %v2113 = vadd.f32 %v2060, %v2097
        %v2114 = vadd.f32 %v2061, %v2098
        %v2115 = vadd.f32 %v2062, %v2099
        %v2116 = vadd.f32 %v2063, %v2100
        %v2117 = vadd.f32 %v2064, %v2101
        %v2118 = vadd.f32 %v2065, %v2102
        %v2119 = vadd.f32 %v2066, %v2103
        %v2120 = vadd.f32 %v2067, %v2104
        %v2121 = vadd.f32 %v2068, %v2105
        %v2122 = vadd.f32 %v2069, %v2106
        %v2123 = vadd.f32 %v2070, %v2107
        %v2124 = vadd.f32 %v2071, %v2108
        %v2125 = vadd.f32 %v2072, %v2109
        %v2126 = vadd.f32 %v2073, %v2110
        %v2127 = vadd.f32 %v2074, %v2111
        %v2128 = vadd.f32 %v2075, %v2112
        %v2129 = vld [vmem:[%s1544 + $0x6] sm:$0xff]
        %v2130 = vld [vmem:[%s1544 + $0xe] sm:$0xff]
        %v2131 = vld [vmem:[%s1544 + $0x1e] sm:$0xff]
        %v2132 = vld [vmem:[%s1544 + $0x26] sm:$0xff]
        %v2133 = vld [vmem:[%s1544 + $0x36] sm:$0xff]
        %v2134 = vld [vmem:[%s1544 + $0x3e] sm:$0xff]
        %v2135 = vld [vmem:[%s1544 + $0x4e] sm:$0xff]
        %v2136 = vld [vmem:[%s1544 + $0x56] sm:$0xff]
        %v2137 = vld [vmem:[%s1544 + $0x66] sm:$0xff]
        %v2138 = vld [vmem:[%s1544 + $0x6e] sm:$0xff]
        %v2139 = vld [vmem:[%s1544 + $0x7e] sm:$0xff]
        %v2140 = vld [vmem:[%s1544 + $0x86] sm:$0xff]
        %v2141 = vld [vmem:[%s1544 + $0x96] sm:$0xff]
        %v2142 = vld [vmem:[%s1544 + $0x9e] sm:$0xff]
        %v2143 = vld [vmem:[%s1544 + $0xae] sm:$0xff]
        %v2144 = vld [vmem:[%s1544 + $0xb6] sm:$0xff]
        %v2145 = vld [vmem:[%s1 + $0x3] sm:$0x1]
        %v2146 = vlaneseq
        %v2147 = vshrl.u32 %v2146, 7
        %v2148 = vsub.s32 0, %v2147
        %v2149 = vrot.slane %v2145, %v2148
        %v2150 = vmul.f32 %v2129, %v2149
        %v2151 = vmul.f32 %v2130, %v2149
        %v2152 = vmul.f32 %v2131, %v2149
        %v2153 = vmul.f32 %v2132, %v2149
        %v2154 = vmul.f32 %v2133, %v2149
        %v2155 = vmul.f32 %v2134, %v2149
        %v2156 = vmul.f32 %v2135, %v2149
        %v2157 = vmul.f32 %v2136, %v2149
        %v2158 = vmul.f32 %v2137, %v2149
        %v2159 = vmul.f32 %v2138, %v2149
        %v2160 = vmul.f32 %v2139, %v2149
        %v2161 = vmul.f32 %v2140, %v2149
        %v2162 = vmul.f32 %v2141, %v2149
        %v2163 = vmul.f32 %v2142, %v2149
        %v2164 = vmul.f32 %v2143, %v2149
        %v2165 = vmul.f32 %v2144, %v2149
        %v2166 = vadd.f32 %v2113, %v2150
        %v2167 = vadd.f32 %v2114, %v2151
        %v2168 = vadd.f32 %v2115, %v2152
        %v2169 = vadd.f32 %v2116, %v2153
        %v2170 = vadd.f32 %v2117, %v2154
        %v2171 = vadd.f32 %v2118, %v2155
        %v2172 = vadd.f32 %v2119, %v2156
        %v2173 = vadd.f32 %v2120, %v2157
        %v2174 = vadd.f32 %v2121, %v2158
        %v2175 = vadd.f32 %v2122, %v2159
        %v2176 = vadd.f32 %v2123, %v2160
        %v2177 = vadd.f32 %v2124, %v2161
        %v2178 = vadd.f32 %v2125, %v2162
        %v2179 = vadd.f32 %v2126, %v2163
        %v2180 = vadd.f32 %v2127, %v2164
        %v2181 = vadd.f32 %v2128, %v2165
        %v2182 = vld [vmem:[%s1544 + $0x10] sm:$0xff]
        %v2183 = vld [vmem:[%s1544 + $0x28] sm:$0xff]
        %v2184 = vld [vmem:[%s1544 + $0x40] sm:$0xff]
        %v2185 = vld [vmem:[%s1544 + $0x58] sm:$0xff]
        %v2186 = vld [vmem:[%s1544 + $0x70] sm:$0xff]
        %v2187 = vld [vmem:[%s1544 + $0x88] sm:$0xff]
        %v2188 = vld [vmem:[%s1544 + $0xa0] sm:$0xff]
        %v2189 = vld [vmem:[%s1544 + $0xb8] sm:$0xff]
        %v2190 = vld [vmem:[%s1 + $0x4] sm:$0x1]
        %v2191 = vlaneseq
        %v2192 = vshrl.u32 %v2191, 7
        %v2193 = vsub.s32 0, %v2192
        %v2194 = vrot.slane %v2190, %v2193
        %v2195 = vmul.f32 %v1971, %v2194
        %v2196 = vmul.f32 %v2182, %v2194
        %v2197 = vmul.f32 %v1973, %v2194
        %v2198 = vmul.f32 %v2183, %v2194
        %v2199 = vmul.f32 %v1975, %v2194
        %v2200 = vmul.f32 %v2184, %v2194
        %v2201 = vmul.f32 %v1977, %v2194
        %v2202 = vmul.f32 %v2185, %v2194
        %v2203 = vmul.f32 %v1979, %v2194
        %v2204 = vmul.f32 %v2186, %v2194
        %v2205 = vmul.f32 %v1981, %v2194
        %v2206 = vmul.f32 %v2187, %v2194
        %v2207 = vmul.f32 %v1983, %v2194
        %v2208 = vmul.f32 %v2188, %v2194
        %v2209 = vmul.f32 %v1985, %v2194
        %v2210 = vmul.f32 %v2189, %v2194
        %v2211 = vadd.f32 %v2166, %v2195
        %v2212 = vadd.f32 %v2167, %v2196
        %v2213 = vadd.f32 %v2168, %v2197
        %v2214 = vadd.f32 %v2169, %v2198
        %v2215 = vadd.f32 %v2170, %v2199
        %v2216 = vadd.f32 %v2171, %v2200
        %v2217 = vadd.f32 %v2172, %v2201
        %v2218 = vadd.f32 %v2173, %v2202
        %v2219 = vadd.f32 %v2174, %v2203
        %v2220 = vadd.f32 %v2175, %v2204
        %v2221 = vadd.f32 %v2176, %v2205
        %v2222 = vadd.f32 %v2177, %v2206
        %v2223 = vadd.f32 %v2178, %v2207
        %v2224 = vadd.f32 %v2179, %v2208
        %v2225 = vadd.f32 %v2180, %v2209
        %v2226 = vadd.f32 %v2181, %v2210
        %s2227 = scalar_lea.vmem [#allocation2], 240
        %v2228 = vld [vmem:[%s2227] sm:$0xff]
        %v2229 = vld [vmem:[%s2227 + $0x8] sm:$0xff]
        %v2230 = vld [vmem:[%s2227 + $0x18] sm:$0xff]
        %v2231 = vld [vmem:[%s2227 + $0x20] sm:$0xff]
        %v2232 = vld [vmem:[%s2227 + $0x30] sm:$0xff]
        %v2233 = vld [vmem:[%s2227 + $0x38] sm:$0xff]
        %v2234 = vld [vmem:[%s2227 + $0x48] sm:$0xff]
        %v2235 = vld [vmem:[%s2227 + $0x50] sm:$0xff]
        %v2236 = vld [vmem:[%s2227 + $0x60] sm:$0xff]
        %v2237 = vld [vmem:[%s2227 + $0x68] sm:$0xff]
        %v2238 = vld [vmem:[%s2227 + $0x78] sm:$0xff]
        %v2239 = vld [vmem:[%s2227 + $0x80] sm:$0xff]
        %v2240 = vld [vmem:[%s2227 + $0x90] sm:$0xff]
        %v2241 = vld [vmem:[%s2227 + $0x98] sm:$0xff]
        %v2242 = vld [vmem:[%s2227 + $0xa8] sm:$0xff]
        %v2243 = vld [vmem:[%s2227 + $0xb0] sm:$0xff]
        %v2244 = vld [vmem:[%s785] sm:$0x1]
        %v2245 = vlaneseq
        %v2246 = vshrl.u32 %v2245, 7
        %v2247 = vsub.s32 0, %v2246
        %v2248 = vrot.slane %v2244, %v2247
        %v2249 = vmul.f32 %v2228, %v2248
        %v2250 = vmul.f32 %v2229, %v2248
        %v2251 = vmul.f32 %v2230, %v2248
        %v2252 = vmul.f32 %v2231, %v2248
        %v2253 = vmul.f32 %v2232, %v2248
        %v2254 = vmul.f32 %v2233, %v2248
        %v2255 = vmul.f32 %v2234, %v2248
        %v2256 = vmul.f32 %v2235, %v2248
        %v2257 = vmul.f32 %v2236, %v2248
        %v2258 = vmul.f32 %v2237, %v2248
        %v2259 = vmul.f32 %v2238, %v2248
        %v2260 = vmul.f32 %v2239, %v2248
        %v2261 = vmul.f32 %v2240, %v2248
        %v2262 = vmul.f32 %v2241, %v2248
        %v2263 = vmul.f32 %v2242, %v2248
        %v2264 = vmul.f32 %v2243, %v2248
        %v2265 = vadd.f32 %v2211, %v2249
        %v2266 = vadd.f32 %v2212, %v2250
        %v2267 = vadd.f32 %v2213, %v2251
        %v2268 = vadd.f32 %v2214, %v2252
        %v2269 = vadd.f32 %v2215, %v2253
        %v2270 = vadd.f32 %v2216, %v2254
        %v2271 = vadd.f32 %v2217, %v2255
        %v2272 = vadd.f32 %v2218, %v2256
        %v2273 = vadd.f32 %v2219, %v2257
        %v2274 = vadd.f32 %v2220, %v2258
        %v2275 = vadd.f32 %v2221, %v2259
        %v2276 = vadd.f32 %v2222, %v2260
        %v2277 = vadd.f32 %v2223, %v2261
        %v2278 = vadd.f32 %v2224, %v2262
        %v2279 = vadd.f32 %v2225, %v2263
        %v2280 = vadd.f32 %v2226, %v2264
        %v2281 = vld [vmem:[%s2227 + $0x2] sm:$0xff]
        %v2282 = vld [vmem:[%s2227 + $0xa] sm:$0xff]
        %v2283 = vld [vmem:[%s2227 + $0x1a] sm:$0xff]
        %v2284 = vld [vmem:[%s2227 + $0x22] sm:$0xff]
        %v2285 = vld [vmem:[%s2227 + $0x32] sm:$0xff]
        %v2286 = vld [vmem:[%s2227 + $0x3a] sm:$0xff]
        %v2287 = vld [vmem:[%s2227 + $0x4a] sm:$0xff]
        %v2288 = vld [vmem:[%s2227 + $0x52] sm:$0xff]
        %v2289 = vld [vmem:[%s2227 + $0x62] sm:$0xff]
        %v2290 = vld [vmem:[%s2227 + $0x6a] sm:$0xff]
        %v2291 = vld [vmem:[%s2227 + $0x7a] sm:$0xff]
        %v2292 = vld [vmem:[%s2227 + $0x82] sm:$0xff]
        %v2293 = vld [vmem:[%s2227 + $0x92] sm:$0xff]
        %v2294 = vld [vmem:[%s2227 + $0x9a] sm:$0xff]
        %v2295 = vld [vmem:[%s2227 + $0xaa] sm:$0xff]
        %v2296 = vld [vmem:[%s2227 + $0xb2] sm:$0xff]
        %v2297 = vld [vmem:[%s785 + $0x1] sm:$0x1]
        %v2298 = vlaneseq
        %v2299 = vshrl.u32 %v2298, 7
        %v2300 = vsub.s32 0, %v2299
        %v2301 = vrot.slane %v2297, %v2300
        %v2302 = vmul.f32 %v2281, %v2301
        %v2303 = vmul.f32 %v2282, %v2301
        %v2304 = vmul.f32 %v2283, %v2301
        %v2305 = vmul.f32 %v2284, %v2301
        %v2306 = vmul.f32 %v2285, %v2301
        %v2307 = vmul.f32 %v2286, %v2301
        %v2308 = vmul.f32 %v2287, %v2301
        %v2309 = vmul.f32 %v2288, %v2301
        %v2310 = vmul.f32 %v2289, %v2301
        %v2311 = vmul.f32 %v2290, %v2301
        %v2312 = vmul.f32 %v2291, %v2301
        %v2313 = vmul.f32 %v2292, %v2301
        %v2314 = vmul.f32 %v2293, %v2301
        %v2315 = vmul.f32 %v2294, %v2301
        %v2316 = vmul.f32 %v2295, %v2301
        %v2317 = vmul.f32 %v2296, %v2301
        %v2318 = vadd.f32 %v2265, %v2302
        %v2319 = vadd.f32 %v2266, %v2303
        %v2320 = vadd.f32 %v2267, %v2304
        %v2321 = vadd.f32 %v2268, %v2305
        %v2322 = vadd.f32 %v2269, %v2306
        %v2323 = vadd.f32 %v2270, %v2307
        %v2324 = vadd.f32 %v2271, %v2308
        %v2325 = vadd.f32 %v2272, %v2309
        %v2326 = vadd.f32 %v2273, %v2310
        %v2327 = vadd.f32 %v2274, %v2311
        %v2328 = vadd.f32 %v2275, %v2312
        %v2329 = vadd.f32 %v2276, %v2313
        %v2330 = vadd.f32 %v2277, %v2314
        %v2331 = vadd.f32 %v2278, %v2315
        %v2332 = vadd.f32 %v2279, %v2316
        %v2333 = vadd.f32 %v2280, %v2317
        %v2334 = vld [vmem:[%s2227 + $0x4] sm:$0xff]
        %v2335 = vld [vmem:[%s2227 + $0xc] sm:$0xff]
        %v2336 = vld [vmem:[%s2227 + $0x1c] sm:$0xff]
        %v2337 = vld [vmem:[%s2227 + $0x24] sm:$0xff]
        %v2338 = vld [vmem:[%s2227 + $0x34] sm:$0xff]
        %v2339 = vld [vmem:[%s2227 + $0x3c] sm:$0xff]
        %v2340 = vld [vmem:[%s2227 + $0x4c] sm:$0xff]
        %v2341 = vld [vmem:[%s2227 + $0x54] sm:$0xff]
        %v2342 = vld [vmem:[%s2227 + $0x64] sm:$0xff]
        %v2343 = vld [vmem:[%s2227 + $0x6c] sm:$0xff]
        %v2344 = vld [vmem:[%s2227 + $0x7c] sm:$0xff]
        %v2345 = vld [vmem:[%s2227 + $0x84] sm:$0xff]
        %v2346 = vld [vmem:[%s2227 + $0x94] sm:$0xff]
        %v2347 = vld [vmem:[%s2227 + $0x9c] sm:$0xff]
        %v2348 = vld [vmem:[%s2227 + $0xac] sm:$0xff]
        %v2349 = vld [vmem:[%s2227 + $0xb4] sm:$0xff]
        %v2350 = vld [vmem:[%s785 + $0x2] sm:$0x1]
        %v2351 = vlaneseq
        %v2352 = vshrl.u32 %v2351, 7
        %v2353 = vsub.s32 0, %v2352
        %v2354 = vrot.slane %v2350, %v2353
        %v2355 = vmul.f32 %v2334, %v2354
        %v2356 = vmul.f32 %v2335, %v2354
        %v2357 = vmul.f32 %v2336, %v2354
        %v2358 = vmul.f32 %v2337, %v2354
        %v2359 = vmul.f32 %v2338, %v2354
        %v2360 = vmul.f32 %v2339, %v2354
        %v2361 = vmul.f32 %v2340, %v2354
        %v2362 = vmul.f32 %v2341, %v2354
        %v2363 = vmul.f32 %v2342, %v2354
        %v2364 = vmul.f32 %v2343, %v2354
        %v2365 = vmul.f32 %v2344, %v2354
        %v2366 = vmul.f32 %v2345, %v2354
        %v2367 = vmul.f32 %v2346, %v2354
        %v2368 = vmul.f32 %v2347, %v2354
        %v2369 = vmul.f32 %v2348, %v2354
        %v2370 = vmul.f32 %v2349, %v2354
        %v2371 = vadd.f32 %v2318, %v2355
        %v2372 = vadd.f32 %v2319, %v2356
        %v2373 = vadd.f32 %v2320, %v2357
        %v2374 = vadd.f32 %v2321, %v2358
        %v2375 = vadd.f32 %v2322, %v2359
        %v2376 = vadd.f32 %v2323, %v2360
        %v2377 = vadd.f32 %v2324, %v2361
        %v2378 = vadd.f32 %v2325, %v2362
        %v2379 = vadd.f32 %v2326, %v2363
        %v2380 = vadd.f32 %v2327, %v2364
        %v2381 = vadd.f32 %v2328, %v2365
        %v2382 = vadd.f32 %v2329, %v2366
        %v2383 = vadd.f32 %v2330, %v2367
        %v2384 = vadd.f32 %v2331, %v2368
        %v2385 = vadd.f32 %v2332, %v2369
        %v2386 = vadd.f32 %v2333, %v2370
        %v2387 = vld [vmem:[%s2227 + $0x6] sm:$0xff]
        %v2388 = vld [vmem:[%s2227 + $0xe] sm:$0xff]
        %v2389 = vld [vmem:[%s2227 + $0x1e] sm:$0xff]
        %v2390 = vld [vmem:[%s2227 + $0x26] sm:$0xff]
        %v2391 = vld [vmem:[%s2227 + $0x36] sm:$0xff]
        %v2392 = vld [vmem:[%s2227 + $0x3e] sm:$0xff]
        %v2393 = vld [vmem:[%s2227 + $0x4e] sm:$0xff]
        %v2394 = vld [vmem:[%s2227 + $0x56] sm:$0xff]
        %v2395 = vld [vmem:[%s2227 + $0x66] sm:$0xff]
        %v2396 = vld [vmem:[%s2227 + $0x6e] sm:$0xff]
        %v2397 = vld [vmem:[%s2227 + $0x7e] sm:$0xff]
        %v2398 = vld [vmem:[%s2227 + $0x86] sm:$0xff]
        %v2399 = vld [vmem:[%s2227 + $0x96] sm:$0xff]
        %v2400 = vld [vmem:[%s2227 + $0x9e] sm:$0xff]
        %v2401 = vld [vmem:[%s2227 + $0xae] sm:$0xff]
        %v2402 = vld [vmem:[%s2227 + $0xb6] sm:$0xff]
        %v2403 = vld [vmem:[%s785 + $0x3] sm:$0x1]
        %v2404 = vlaneseq
        %v2405 = vshrl.u32 %v2404, 7
        %v2406 = vsub.s32 0, %v2405
        %v2407 = vrot.slane %v2403, %v2406
        %v2408 = vmul.f32 %v2387, %v2407
        %v2409 = vmul.f32 %v2388, %v2407
        %v2410 = vmul.f32 %v2389, %v2407
        %v2411 = vmul.f32 %v2390, %v2407
        %v2412 = vmul.f32 %v2391, %v2407
        %v2413 = vmul.f32 %v2392, %v2407
        %v2414 = vmul.f32 %v2393, %v2407
        %v2415 = vmul.f32 %v2394, %v2407
        %v2416 = vmul.f32 %v2395, %v2407
        %v2417 = vmul.f32 %v2396, %v2407
        %v2418 = vmul.f32 %v2397, %v2407
        %v2419 = vmul.f32 %v2398, %v2407
        %v2420 = vmul.f32 %v2399, %v2407
        %v2421 = vmul.f32 %v2400, %v2407
        %v2422 = vmul.f32 %v2401, %v2407
        %v2423 = vmul.f32 %v2402, %v2407
        %v2424 = vadd.f32 %v2371, %v2408
        %v2425 = vadd.f32 %v2372, %v2409
        %v2426 = vadd.f32 %v2373, %v2410
        %v2427 = vadd.f32 %v2374, %v2411
        %v2428 = vadd.f32 %v2375, %v2412
        %v2429 = vadd.f32 %v2376, %v2413
        %v2430 = vadd.f32 %v2377, %v2414
        %v2431 = vadd.f32 %v2378, %v2415
        %v2432 = vadd.f32 %v2379, %v2416
        %v2433 = vadd.f32 %v2380, %v2417
        %v2434 = vadd.f32 %v2381, %v2418
        %v2435 = vadd.f32 %v2382, %v2419
        %v2436 = vadd.f32 %v2383, %v2420
        %v2437 = vadd.f32 %v2384, %v2421
        %v2438 = vadd.f32 %v2385, %v2422
        %v2439 = vadd.f32 %v2386, %v2423
        %v2440 = vld [vmem:[%s2227 + $0x10] sm:$0xff]
        %v2441 = vld [vmem:[%s2227 + $0x28] sm:$0xff]
        %v2442 = vld [vmem:[%s2227 + $0x40] sm:$0xff]
        %v2443 = vld [vmem:[%s2227 + $0x58] sm:$0xff]
        %v2444 = vld [vmem:[%s2227 + $0x70] sm:$0xff]
        %v2445 = vld [vmem:[%s2227 + $0x88] sm:$0xff]
        %v2446 = vld [vmem:[%s2227 + $0xa0] sm:$0xff]
        %v2447 = vld [vmem:[%s2227 + $0xb8] sm:$0xff]
        %v2448 = vld [vmem:[%s785 + $0x4] sm:$0x1]
        %v2449 = vlaneseq
        %v2450 = vshrl.u32 %v2449, 7
        %v2451 = vsub.s32 0, %v2450
        %v2452 = vrot.slane %v2448, %v2451
        %v2453 = vmul.f32 %v2229, %v2452
        %v2454 = vmul.f32 %v2440, %v2452
        %v2455 = vmul.f32 %v2231, %v2452
        %v2456 = vmul.f32 %v2441, %v2452
        %v2457 = vmul.f32 %v2233, %v2452
        %v2458 = vmul.f32 %v2442, %v2452
        %v2459 = vmul.f32 %v2235, %v2452
        %v2460 = vmul.f32 %v2443, %v2452
        %v2461 = vmul.f32 %v2237, %v2452
        %v2462 = vmul.f32 %v2444, %v2452
        %v2463 = vmul.f32 %v2239, %v2452
        %v2464 = vmul.f32 %v2445, %v2452
        %v2465 = vmul.f32 %v2241, %v2452
        %v2466 = vmul.f32 %v2446, %v2452
        %v2467 = vmul.f32 %v2243, %v2452
        %v2468 = vmul.f32 %v2447, %v2452
        %v2469 = vadd.f32 %v2424, %v2453
        %v2470 = vadd.f32 %v2425, %v2454
        %v2471 = vadd.f32 %v2426, %v2455
        %v2472 = vadd.f32 %v2427, %v2456
        %v2473 = vadd.f32 %v2428, %v2457
        %v2474 = vadd.f32 %v2429, %v2458
        %v2475 = vadd.f32 %v2430, %v2459
        %v2476 = vadd.f32 %v2431, %v2460
        %v2477 = vadd.f32 %v2432, %v2461
        %v2478 = vadd.f32 %v2433, %v2462
        %v2479 = vadd.f32 %v2434, %v2463
        %v2480 = vadd.f32 %v2435, %v2464
        %v2481 = vadd.f32 %v2436, %v2465
        %v2482 = vadd.f32 %v2437, %v2466
        %v2483 = vadd.f32 %v2438, %v2467
        %v2484 = vadd.f32 %v2439, %v2468
        %s2485 = scalar_lea.vmem [#allocation2], 288
        %v2486 = vld [vmem:[%s2485] sm:$0xff]
        %v2487 = vld [vmem:[%s2485 + $0x8] sm:$0xff]
        %v2488 = vld [vmem:[%s2485 + $0x18] sm:$0xff]
        %v2489 = vld [vmem:[%s2485 + $0x20] sm:$0xff]
        %v2490 = vld [vmem:[%s2485 + $0x30] sm:$0xff]
        %v2491 = vld [vmem:[%s2485 + $0x38] sm:$0xff]
        %v2492 = vld [vmem:[%s2485 + $0x48] sm:$0xff]
        %v2493 = vld [vmem:[%s2485 + $0x50] sm:$0xff]
        %v2494 = vld [vmem:[%s2485 + $0x60] sm:$0xff]
        %v2495 = vld [vmem:[%s2485 + $0x68] sm:$0xff]
        %v2496 = vld [vmem:[%s2485 + $0x78] sm:$0xff]
        %v2497 = vld [vmem:[%s2485 + $0x80] sm:$0xff]
        %v2498 = vld [vmem:[%s2485 + $0x90] sm:$0xff]
        %v2499 = vld [vmem:[%s2485 + $0x98] sm:$0xff]
        %v2500 = vld [vmem:[%s2485 + $0xa8] sm:$0xff]
        %v2501 = vld [vmem:[%s2485 + $0xb0] sm:$0xff]
        %v2502 = vld [vmem:[%s1043] sm:$0x1]
        %v2503 = vlaneseq
        %v2504 = vshrl.u32 %v2503, 7
        %v2505 = vsub.s32 0, %v2504
        %v2506 = vrot.slane %v2502, %v2505
        %v2507 = vmul.f32 %v2486, %v2506
        %v2508 = vmul.f32 %v2487, %v2506
        %v2509 = vmul.f32 %v2488, %v2506
        %v2510 = vmul.f32 %v2489, %v2506
        %v2511 = vmul.f32 %v2490, %v2506
        %v2512 = vmul.f32 %v2491, %v2506
        %v2513 = vmul.f32 %v2492, %v2506
        %v2514 = vmul.f32 %v2493, %v2506
        %v2515 = vmul.f32 %v2494, %v2506
        %v2516 = vmul.f32 %v2495, %v2506
        %v2517 = vmul.f32 %v2496, %v2506
        %v2518 = vmul.f32 %v2497, %v2506
        %v2519 = vmul.f32 %v2498, %v2506
        %v2520 = vmul.f32 %v2499, %v2506
        %v2521 = vmul.f32 %v2500, %v2506
        %v2522 = vmul.f32 %v2501, %v2506
        %v2523 = vadd.f32 %v2469, %v2507
        %v2524 = vadd.f32 %v2470, %v2508
        %v2525 = vadd.f32 %v2471, %v2509
        %v2526 = vadd.f32 %v2472, %v2510
        %v2527 = vadd.f32 %v2473, %v2511
        %v2528 = vadd.f32 %v2474, %v2512
        %v2529 = vadd.f32 %v2475, %v2513
        %v2530 = vadd.f32 %v2476, %v2514
        %v2531 = vadd.f32 %v2477, %v2515
        %v2532 = vadd.f32 %v2478, %v2516
        %v2533 = vadd.f32 %v2479, %v2517
        %v2534 = vadd.f32 %v2480, %v2518
        %v2535 = vadd.f32 %v2481, %v2519
        %v2536 = vadd.f32 %v2482, %v2520
        %v2537 = vadd.f32 %v2483, %v2521
        %v2538 = vadd.f32 %v2484, %v2522
        %v2539 = vld [vmem:[%s2485 + $0x2] sm:$0xff]
        %v2540 = vld [vmem:[%s2485 + $0xa] sm:$0xff]
        %v2541 = vld [vmem:[%s2485 + $0x1a] sm:$0xff]
        %v2542 = vld [vmem:[%s2485 + $0x22] sm:$0xff]
        %v2543 = vld [vmem:[%s2485 + $0x32] sm:$0xff]
        %v2544 = vld [vmem:[%s2485 + $0x3a] sm:$0xff]
        %v2545 = vld [vmem:[%s2485 + $0x4a] sm:$0xff]
        %v2546 = vld [vmem:[%s2485 + $0x52] sm:$0xff]
        %v2547 = vld [vmem:[%s2485 + $0x62] sm:$0xff]
        %v2548 = vld [vmem:[%s2485 + $0x6a] sm:$0xff]
        %v2549 = vld [vmem:[%s2485 + $0x7a] sm:$0xff]
        %v2550 = vld [vmem:[%s2485 + $0x82] sm:$0xff]
        %v2551 = vld [vmem:[%s2485 + $0x92] sm:$0xff]
        %v2552 = vld [vmem:[%s2485 + $0x9a] sm:$0xff]
        %v2553 = vld [vmem:[%s2485 + $0xaa] sm:$0xff]
        %v2554 = vld [vmem:[%s2485 + $0xb2] sm:$0xff]
        %v2555 = vld [vmem:[%s1043 + $0x1] sm:$0x1]
        %v2556 = vlaneseq
        %v2557 = vshrl.u32 %v2556, 7
        %v2558 = vsub.s32 0, %v2557
        %v2559 = vrot.slane %v2555, %v2558
        %v2560 = vmul.f32 %v2539, %v2559
        %v2561 = vmul.f32 %v2540, %v2559
        %v2562 = vmul.f32 %v2541, %v2559
        %v2563 = vmul.f32 %v2542, %v2559
        %v2564 = vmul.f32 %v2543, %v2559
        %v2565 = vmul.f32 %v2544, %v2559
        %v2566 = vmul.f32 %v2545, %v2559
        %v2567 = vmul.f32 %v2546, %v2559
        %v2568 = vmul.f32 %v2547, %v2559
        %v2569 = vmul.f32 %v2548, %v2559
        %v2570 = vmul.f32 %v2549, %v2559
        %v2571 = vmul.f32 %v2550, %v2559
        %v2572 = vmul.f32 %v2551, %v2559
        %v2573 = vmul.f32 %v2552, %v2559
        %v2574 = vmul.f32 %v2553, %v2559
        %v2575 = vmul.f32 %v2554, %v2559
        %v2576 = vadd.f32 %v2523, %v2560
        %v2577 = vadd.f32 %v2524, %v2561
        %v2578 = vadd.f32 %v2525, %v2562
        %v2579 = vadd.f32 %v2526, %v2563
        %v2580 = vadd.f32 %v2527, %v2564
        %v2581 = vadd.f32 %v2528, %v2565
        %v2582 = vadd.f32 %v2529, %v2566
        %v2583 = vadd.f32 %v2530, %v2567
        %v2584 = vadd.f32 %v2531, %v2568
        %v2585 = vadd.f32 %v2532, %v2569
        %v2586 = vadd.f32 %v2533, %v2570
        %v2587 = vadd.f32 %v2534, %v2571
        %v2588 = vadd.f32 %v2535, %v2572
        %v2589 = vadd.f32 %v2536, %v2573
        %v2590 = vadd.f32 %v2537, %v2574
        %v2591 = vadd.f32 %v2538, %v2575
        %v2592 = vld [vmem:[%s2485 + $0x4] sm:$0xff]
        %v2593 = vld [vmem:[%s2485 + $0xc] sm:$0xff]
        %v2594 = vld [vmem:[%s2485 + $0x1c] sm:$0xff]
        %v2595 = vld [vmem:[%s2485 + $0x24] sm:$0xff]
        %v2596 = vld [vmem:[%s2485 + $0x34] sm:$0xff]
        %v2597 = vld [vmem:[%s2485 + $0x3c] sm:$0xff]
        %v2598 = vld [vmem:[%s2485 + $0x4c] sm:$0xff]
        %v2599 = vld [vmem:[%s2485 + $0x54] sm:$0xff]
        %v2600 = vld [vmem:[%s2485 + $0x64] sm:$0xff]
        %v2601 = vld [vmem:[%s2485 + $0x6c] sm:$0xff]
        %v2602 = vld [vmem:[%s2485 + $0x7c] sm:$0xff]
        %v2603 = vld [vmem:[%s2485 + $0x84] sm:$0xff]
        %v2604 = vld [vmem:[%s2485 + $0x94] sm:$0xff]
        %v2605 = vld [vmem:[%s2485 + $0x9c] sm:$0xff]
        %v2606 = vld [vmem:[%s2485 + $0xac] sm:$0xff]
        %v2607 = vld [vmem:[%s2485 + $0xb4] sm:$0xff]
        %v2608 = vld [vmem:[%s1043 + $0x2] sm:$0x1]
        %v2609 = vlaneseq
        %v2610 = vshrl.u32 %v2609, 7
        %v2611 = vsub.s32 0, %v2610
        %v2612 = vrot.slane %v2608, %v2611
        %v2613 = vmul.f32 %v2592, %v2612
        %v2614 = vmul.f32 %v2593, %v2612
        %v2615 = vmul.f32 %v2594, %v2612
        %v2616 = vmul.f32 %v2595, %v2612
        %v2617 = vmul.f32 %v2596, %v2612
        %v2618 = vmul.f32 %v2597, %v2612
        %v2619 = vmul.f32 %v2598, %v2612
        %v2620 = vmul.f32 %v2599, %v2612
        %v2621 = vmul.f32 %v2600, %v2612
        %v2622 = vmul.f32 %v2601, %v2612
        %v2623 = vmul.f32 %v2602, %v2612
        %v2624 = vmul.f32 %v2603, %v2612
        %v2625 = vmul.f32 %v2604, %v2612
        %v2626 = vmul.f32 %v2605, %v2612
        %v2627 = vmul.f32 %v2606, %v2612
        %v2628 = vmul.f32 %v2607, %v2612
        %v2629 = vadd.f32 %v2576, %v2613
        %v2630 = vadd.f32 %v2577, %v2614
        %v2631 = vadd.f32 %v2578, %v2615
        %v2632 = vadd.f32 %v2579, %v2616
        %v2633 = vadd.f32 %v2580, %v2617
        %v2634 = vadd.f32 %v2581, %v2618
        %v2635 = vadd.f32 %v2582, %v2619
        %v2636 = vadd.f32 %v2583, %v2620
        %v2637 = vadd.f32 %v2584, %v2621
        %v2638 = vadd.f32 %v2585, %v2622
        %v2639 = vadd.f32 %v2586, %v2623
        %v2640 = vadd.f32 %v2587, %v2624
        %v2641 = vadd.f32 %v2588, %v2625
        %v2642 = vadd.f32 %v2589, %v2626
        %v2643 = vadd.f32 %v2590, %v2627
        %v2644 = vadd.f32 %v2591, %v2628
        %v2645 = vld [vmem:[%s2485 + $0x6] sm:$0xff]
        %v2646 = vld [vmem:[%s2485 + $0xe] sm:$0xff]
        %v2647 = vld [vmem:[%s2485 + $0x1e] sm:$0xff]
        %v2648 = vld [vmem:[%s2485 + $0x26] sm:$0xff]
        %v2649 = vld [vmem:[%s2485 + $0x36] sm:$0xff]
        %v2650 = vld [vmem:[%s2485 + $0x3e] sm:$0xff]
        %v2651 = vld [vmem:[%s2485 + $0x4e] sm:$0xff]
        %v2652 = vld [vmem:[%s2485 + $0x56] sm:$0xff]
        %v2653 = vld [vmem:[%s2485 + $0x66] sm:$0xff]
        %v2654 = vld [vmem:[%s2485 + $0x6e] sm:$0xff]
        %v2655 = vld [vmem:[%s2485 + $0x7e] sm:$0xff]
        %v2656 = vld [vmem:[%s2485 + $0x86] sm:$0xff]
        %v2657 = vld [vmem:[%s2485 + $0x96] sm:$0xff]
        %v2658 = vld [vmem:[%s2485 + $0x9e] sm:$0xff]
        %v2659 = vld [vmem:[%s2485 + $0xae] sm:$0xff]
        %v2660 = vld [vmem:[%s2485 + $0xb6] sm:$0xff]
        %v2661 = vld [vmem:[%s1043 + $0x3] sm:$0x1]
        %v2662 = vlaneseq
        %v2663 = vshrl.u32 %v2662, 7
        %v2664 = vsub.s32 0, %v2663
        %v2665 = vrot.slane %v2661, %v2664
        %v2666 = vmul.f32 %v2645, %v2665
        %v2667 = vmul.f32 %v2646, %v2665
        %v2668 = vmul.f32 %v2647, %v2665
        %v2669 = vmul.f32 %v2648, %v2665
        %v2670 = vmul.f32 %v2649, %v2665
        %v2671 = vmul.f32 %v2650, %v2665
        %v2672 = vmul.f32 %v2651, %v2665
        %v2673 = vmul.f32 %v2652, %v2665
        %v2674 = vmul.f32 %v2653, %v2665
        %v2675 = vmul.f32 %v2654, %v2665
        %v2676 = vmul.f32 %v2655, %v2665
        %v2677 = vmul.f32 %v2656, %v2665
        %v2678 = vmul.f32 %v2657, %v2665
        %v2679 = vmul.f32 %v2658, %v2665
        %v2680 = vmul.f32 %v2659, %v2665
        %v2681 = vmul.f32 %v2660, %v2665
        %v2682 = vadd.f32 %v2629, %v2666
        %v2683 = vadd.f32 %v2630, %v2667
        %v2684 = vadd.f32 %v2631, %v2668
        %v2685 = vadd.f32 %v2632, %v2669
        %v2686 = vadd.f32 %v2633, %v2670
        %v2687 = vadd.f32 %v2634, %v2671
        %v2688 = vadd.f32 %v2635, %v2672
        %v2689 = vadd.f32 %v2636, %v2673
        %v2690 = vadd.f32 %v2637, %v2674
        %v2691 = vadd.f32 %v2638, %v2675
        %v2692 = vadd.f32 %v2639, %v2676
        %v2693 = vadd.f32 %v2640, %v2677
        %v2694 = vadd.f32 %v2641, %v2678
        %v2695 = vadd.f32 %v2642, %v2679
        %v2696 = vadd.f32 %v2643, %v2680
        %v2697 = vadd.f32 %v2644, %v2681
        %v2698 = vld [vmem:[%s2485 + $0x10] sm:$0xff]
        %v2699 = vld [vmem:[%s2485 + $0x28] sm:$0xff]
        %v2700 = vld [vmem:[%s2485 + $0x40] sm:$0xff]
        %v2701 = vld [vmem:[%s2485 + $0x58] sm:$0xff]
        %v2702 = vld [vmem:[%s2485 + $0x70] sm:$0xff]
        %v2703 = vld [vmem:[%s2485 + $0x88] sm:$0xff]
        %v2704 = vld [vmem:[%s2485 + $0xa0] sm:$0xff]
        %v2705 = vld [vmem:[%s2485 + $0xb8] sm:$0xff]
        %v2706 = vld [vmem:[%s1043 + $0x4] sm:$0x1]
        %v2707 = vlaneseq
        %v2708 = vshrl.u32 %v2707, 7
        %v2709 = vsub.s32 0, %v2708
        %v2710 = vrot.slane %v2706, %v2709
        %v2711 = vmul.f32 %v2487, %v2710
        %v2712 = vmul.f32 %v2698, %v2710
        %v2713 = vmul.f32 %v2489, %v2710
        %v2714 = vmul.f32 %v2699, %v2710
        %v2715 = vmul.f32 %v2491, %v2710
        %v2716 = vmul.f32 %v2700, %v2710
        %v2717 = vmul.f32 %v2493, %v2710
        %v2718 = vmul.f32 %v2701, %v2710
        %v2719 = vmul.f32 %v2495, %v2710
        %v2720 = vmul.f32 %v2702, %v2710
        %v2721 = vmul.f32 %v2497, %v2710
        %v2722 = vmul.f32 %v2703, %v2710
        %v2723 = vmul.f32 %v2499, %v2710
        %v2724 = vmul.f32 %v2704, %v2710
        %v2725 = vmul.f32 %v2501, %v2710
        %v2726 = vmul.f32 %v2705, %v2710
        %v2727 = vadd.f32 %v2682, %v2711
        %v2728 = vadd.f32 %v2683, %v2712
        %v2729 = vadd.f32 %v2684, %v2713
        %v2730 = vadd.f32 %v2685, %v2714
        %v2731 = vadd.f32 %v2686, %v2715
        %v2732 = vadd.f32 %v2687, %v2716
        %v2733 = vadd.f32 %v2688, %v2717
        %v2734 = vadd.f32 %v2689, %v2718
        %v2735 = vadd.f32 %v2690, %v2719
        %v2736 = vadd.f32 %v2691, %v2720
        %v2737 = vadd.f32 %v2692, %v2721
        %v2738 = vadd.f32 %v2693, %v2722
        %v2739 = vadd.f32 %v2694, %v2723
        %v2740 = vadd.f32 %v2695, %v2724
        %v2741 = vadd.f32 %v2696, %v2725
        %v2742 = vadd.f32 %v2697, %v2726
        %s2743 = scalar_lea.vmem [#allocation2], 336
        %v2744 = vld [vmem:[%s2743] sm:$0xff]
        %v2745 = vld [vmem:[%s2743 + $0x8] sm:$0xff]
        %v2746 = vld [vmem:[%s2743 + $0x18] sm:$0xff]
        %v2747 = vld [vmem:[%s2743 + $0x20] sm:$0xff]
        %v2748 = vld [vmem:[%s2743 + $0x30] sm:$0xff]
        %v2749 = vld [vmem:[%s2743 + $0x38] sm:$0xff]
        %v2750 = vld [vmem:[%s2743 + $0x48] sm:$0xff]
        %v2751 = vld [vmem:[%s2743 + $0x50] sm:$0xff]
        %v2752 = vld [vmem:[%s2743 + $0x60] sm:$0xff]
        %v2753 = vld [vmem:[%s2743 + $0x68] sm:$0xff]
        %v2754 = vld [vmem:[%s2743 + $0x78] sm:$0xff]
        %v2755 = vld [vmem:[%s2743 + $0x80] sm:$0xff]
        %v2756 = vld [vmem:[%s2743 + $0x90] sm:$0xff]
        %v2757 = vld [vmem:[%s2743 + $0x98] sm:$0xff]
        %v2758 = vld [vmem:[%s2743 + $0xa8] sm:$0xff]
        %v2759 = vld [vmem:[%s2743 + $0xb0] sm:$0xff]
        %v2760 = vld [vmem:[%s1302] sm:$0x1]
        %v2761 = vlaneseq
        %v2762 = vshrl.u32 %v2761, 7
        %v2763 = vsub.s32 0, %v2762
        %v2764 = vrot.slane %v2760, %v2763
        %v2765 = vmul.f32 %v2744, %v2764
        %v2766 = vmul.f32 %v2745, %v2764
        %v2767 = vmul.f32 %v2746, %v2764
        %v2768 = vmul.f32 %v2747, %v2764
        %v2769 = vmul.f32 %v2748, %v2764
        %v2770 = vmul.f32 %v2749, %v2764
        %v2771 = vmul.f32 %v2750, %v2764
        %v2772 = vmul.f32 %v2751, %v2764
        %v2773 = vmul.f32 %v2752, %v2764
        %v2774 = vmul.f32 %v2753, %v2764
        %v2775 = vmul.f32 %v2754, %v2764
        %v2776 = vmul.f32 %v2755, %v2764
        %v2777 = vmul.f32 %v2756, %v2764
        %v2778 = vmul.f32 %v2757, %v2764
        %v2779 = vmul.f32 %v2758, %v2764
        %v2780 = vmul.f32 %v2759, %v2764
        %v2781 = vadd.f32 %v2727, %v2765
        %v2782 = vadd.f32 %v2728, %v2766
        %v2783 = vadd.f32 %v2729, %v2767
        %v2784 = vadd.f32 %v2730, %v2768
        %v2785 = vadd.f32 %v2731, %v2769
        %v2786 = vadd.f32 %v2732, %v2770
        %v2787 = vadd.f32 %v2733, %v2771
        %v2788 = vadd.f32 %v2734, %v2772
        %v2789 = vadd.f32 %v2735, %v2773
        %v2790 = vadd.f32 %v2736, %v2774
        %v2791 = vadd.f32 %v2737, %v2775
        %v2792 = vadd.f32 %v2738, %v2776
        %v2793 = vadd.f32 %v2739, %v2777
        %v2794 = vadd.f32 %v2740, %v2778
        %v2795 = vadd.f32 %v2741, %v2779
        %v2796 = vadd.f32 %v2742, %v2780
        %v2797 = vld [vmem:[%s2743 + $0x2] sm:$0xff]
        %v2798 = vld [vmem:[%s2743 + $0xa] sm:$0xff]
        %v2799 = vld [vmem:[%s2743 + $0x1a] sm:$0xff]
        %v2800 = vld [vmem:[%s2743 + $0x22] sm:$0xff]
        %v2801 = vld [vmem:[%s2743 + $0x32] sm:$0xff]
        %v2802 = vld [vmem:[%s2743 + $0x3a] sm:$0xff]
        %v2803 = vld [vmem:[%s2743 + $0x4a] sm:$0xff]
        %v2804 = vld [vmem:[%s2743 + $0x52] sm:$0xff]
        %v2805 = vld [vmem:[%s2743 + $0x62] sm:$0xff]
        %v2806 = vld [vmem:[%s2743 + $0x6a] sm:$0xff]
        %v2807 = vld [vmem:[%s2743 + $0x7a] sm:$0xff]
        %v2808 = vld [vmem:[%s2743 + $0x82] sm:$0xff]
        %v2809 = vld [vmem:[%s2743 + $0x92] sm:$0xff]
        %v2810 = vld [vmem:[%s2743 + $0x9a] sm:$0xff]
        %v2811 = vld [vmem:[%s2743 + $0xaa] sm:$0xff]
        %v2812 = vld [vmem:[%s2743 + $0xb2] sm:$0xff]
        %v2813 = vld [vmem:[%s1302 + $0x1] sm:$0x1]
        %v2814 = vlaneseq
        %v2815 = vshrl.u32 %v2814, 7
        %v2816 = vsub.s32 0, %v2815
        %v2817 = vrot.slane %v2813, %v2816
        %v2818 = vmul.f32 %v2797, %v2817
        %v2819 = vmul.f32 %v2798, %v2817
        %v2820 = vmul.f32 %v2799, %v2817
        %v2821 = vmul.f32 %v2800, %v2817
        %v2822 = vmul.f32 %v2801, %v2817
        %v2823 = vmul.f32 %v2802, %v2817
        %v2824 = vmul.f32 %v2803, %v2817
        %v2825 = vmul.f32 %v2804, %v2817
        %v2826 = vmul.f32 %v2805, %v2817
        %v2827 = vmul.f32 %v2806, %v2817
        %v2828 = vmul.f32 %v2807, %v2817
        %v2829 = vmul.f32 %v2808, %v2817
        %v2830 = vmul.f32 %v2809, %v2817
        %v2831 = vmul.f32 %v2810, %v2817
        %v2832 = vmul.f32 %v2811, %v2817
        %v2833 = vmul.f32 %v2812, %v2817
        %v2834 = vadd.f32 %v2781, %v2818
        %v2835 = vadd.f32 %v2782, %v2819
        %v2836 = vadd.f32 %v2783, %v2820
        %v2837 = vadd.f32 %v2784, %v2821
        %v2838 = vadd.f32 %v2785, %v2822
        %v2839 = vadd.f32 %v2786, %v2823
        %v2840 = vadd.f32 %v2787, %v2824
        %v2841 = vadd.f32 %v2788, %v2825
        %v2842 = vadd.f32 %v2789, %v2826
        %v2843 = vadd.f32 %v2790, %v2827
        %v2844 = vadd.f32 %v2791, %v2828
        %v2845 = vadd.f32 %v2792, %v2829
        %v2846 = vadd.f32 %v2793, %v2830
        %v2847 = vadd.f32 %v2794, %v2831
        %v2848 = vadd.f32 %v2795, %v2832
        %v2849 = vadd.f32 %v2796, %v2833
        %v2850 = vld [vmem:[%s2743 + $0x4] sm:$0xff]
        %v2851 = vld [vmem:[%s2743 + $0xc] sm:$0xff]
        %v2852 = vld [vmem:[%s2743 + $0x1c] sm:$0xff]
        %v2853 = vld [vmem:[%s2743 + $0x24] sm:$0xff]
        %v2854 = vld [vmem:[%s2743 + $0x34] sm:$0xff]
        %v2855 = vld [vmem:[%s2743 + $0x3c] sm:$0xff]
        %v2856 = vld [vmem:[%s2743 + $0x4c] sm:$0xff]
        %v2857 = vld [vmem:[%s2743 + $0x54] sm:$0xff]
        %v2858 = vld [vmem:[%s2743 + $0x64] sm:$0xff]
        %v2859 = vld [vmem:[%s2743 + $0x6c] sm:$0xff]
        %v2860 = vld [vmem:[%s2743 + $0x7c] sm:$0xff]
        %v2861 = vld [vmem:[%s2743 + $0x84] sm:$0xff]
        %v2862 = vld [vmem:[%s2743 + $0x94] sm:$0xff]
        %v2863 = vld [vmem:[%s2743 + $0x9c] sm:$0xff]
        %v2864 = vld [vmem:[%s2743 + $0xac] sm:$0xff]
        %v2865 = vld [vmem:[%s2743 + $0xb4] sm:$0xff]
        %v2866 = vld [vmem:[%s1302 + $0x2] sm:$0x1]
        %v2867 = vlaneseq
        %v2868 = vshrl.u32 %v2867, 7
        %v2869 = vsub.s32 0, %v2868
        %v2870 = vrot.slane %v2866, %v2869
        %v2871 = vmul.f32 %v2850, %v2870
        %v2872 = vmul.f32 %v2851, %v2870
        %v2873 = vmul.f32 %v2852, %v2870
        %v2874 = vmul.f32 %v2853, %v2870
        %v2875 = vmul.f32 %v2854, %v2870
        %v2876 = vmul.f32 %v2855, %v2870
        %v2877 = vmul.f32 %v2856, %v2870
        %v2878 = vmul.f32 %v2857, %v2870
        %v2879 = vmul.f32 %v2858, %v2870
        %v2880 = vmul.f32 %v2859, %v2870
        %v2881 = vmul.f32 %v2860, %v2870
        %v2882 = vmul.f32 %v2861, %v2870
        %v2883 = vmul.f32 %v2862, %v2870
        %v2884 = vmul.f32 %v2863, %v2870
        %v2885 = vmul.f32 %v2864, %v2870
        %v2886 = vmul.f32 %v2865, %v2870
        %v2887 = vadd.f32 %v2834, %v2871
        %v2888 = vadd.f32 %v2835, %v2872
        %v2889 = vadd.f32 %v2836, %v2873
        %v2890 = vadd.f32 %v2837, %v2874
        %v2891 = vadd.f32 %v2838, %v2875
        %v2892 = vadd.f32 %v2839, %v2876
        %v2893 = vadd.f32 %v2840, %v2877
        %v2894 = vadd.f32 %v2841, %v2878
        %v2895 = vadd.f32 %v2842, %v2879
        %v2896 = vadd.f32 %v2843, %v2880
        %v2897 = vadd.f32 %v2844, %v2881
        %v2898 = vadd.f32 %v2845, %v2882
        %v2899 = vadd.f32 %v2846, %v2883
        %v2900 = vadd.f32 %v2847, %v2884
        %v2901 = vadd.f32 %v2848, %v2885
        %v2902 = vadd.f32 %v2849, %v2886
        %v2903 = vld [vmem:[%s2743 + $0x6] sm:$0xff]
        %v2904 = vld [vmem:[%s2743 + $0xe] sm:$0xff]
        %v2905 = vld [vmem:[%s2743 + $0x1e] sm:$0xff]
        %v2906 = vld [vmem:[%s2743 + $0x26] sm:$0xff]
        %v2907 = vld [vmem:[%s2743 + $0x36] sm:$0xff]
        %v2908 = vld [vmem:[%s2743 + $0x3e] sm:$0xff]
        %v2909 = vld [vmem:[%s2743 + $0x4e] sm:$0xff]
        %v2910 = vld [vmem:[%s2743 + $0x56] sm:$0xff]
        %v2911 = vld [vmem:[%s2743 + $0x66] sm:$0xff]
        %v2912 = vld [vmem:[%s2743 + $0x6e] sm:$0xff]
        %v2913 = vld [vmem:[%s2743 + $0x7e] sm:$0xff]
        %v2914 = vld [vmem:[%s2743 + $0x86] sm:$0xff]
        %v2915 = vld [vmem:[%s2743 + $0x96] sm:$0xff]
        %v2916 = vld [vmem:[%s2743 + $0x9e] sm:$0xff]
        %v2917 = vld [vmem:[%s2743 + $0xae] sm:$0xff]
        %v2918 = vld [vmem:[%s2743 + $0xb6] sm:$0xff]
        %v2919 = vld [vmem:[%s1302 + $0x3] sm:$0x1]
        %v2920 = vlaneseq
        %v2921 = vshrl.u32 %v2920, 7
        %v2922 = vsub.s32 0, %v2921
        %v2923 = vrot.slane %v2919, %v2922
        %v2924 = vmul.f32 %v2903, %v2923
        %v2925 = vmul.f32 %v2904, %v2923
        %v2926 = vmul.f32 %v2905, %v2923
        %v2927 = vmul.f32 %v2906, %v2923
        %v2928 = vmul.f32 %v2907, %v2923
        %v2929 = vmul.f32 %v2908, %v2923
        %v2930 = vmul.f32 %v2909, %v2923
        %v2931 = vmul.f32 %v2910, %v2923
        %v2932 = vmul.f32 %v2911, %v2923
        %v2933 = vmul.f32 %v2912, %v2923
        %v2934 = vmul.f32 %v2913, %v2923
        %v2935 = vmul.f32 %v2914, %v2923
        %v2936 = vmul.f32 %v2915, %v2923
        %v2937 = vmul.f32 %v2916, %v2923
        %v2938 = vmul.f32 %v2917, %v2923
        %v2939 = vmul.f32 %v2918, %v2923
        %v2940 = vadd.f32 %v2887, %v2924
        %v2941 = vadd.f32 %v2888, %v2925
        %v2942 = vadd.f32 %v2889, %v2926
        %v2943 = vadd.f32 %v2890, %v2927
        %v2944 = vadd.f32 %v2891, %v2928
        %v2945 = vadd.f32 %v2892, %v2929
        %v2946 = vadd.f32 %v2893, %v2930
        %v2947 = vadd.f32 %v2894, %v2931
        %v2948 = vadd.f32 %v2895, %v2932
        %v2949 = vadd.f32 %v2896, %v2933
        %v2950 = vadd.f32 %v2897, %v2934
        %v2951 = vadd.f32 %v2898, %v2935
        %v2952 = vadd.f32 %v2899, %v2936
        %v2953 = vadd.f32 %v2900, %v2937
        %v2954 = vadd.f32 %v2901, %v2938
        %v2955 = vadd.f32 %v2902, %v2939
        %v2956 = vld [vmem:[%s2743 + $0x10] sm:$0xff]
        %v2957 = vld [vmem:[%s2743 + $0x28] sm:$0xff]
        %v2958 = vld [vmem:[%s2743 + $0x40] sm:$0xff]
        %v2959 = vld [vmem:[%s2743 + $0x58] sm:$0xff]
        %v2960 = vld [vmem:[%s2743 + $0x70] sm:$0xff]
        %v2961 = vld [vmem:[%s2743 + $0x88] sm:$0xff]
        %v2962 = vld [vmem:[%s2743 + $0xa0] sm:$0xff]
        %v2963 = vld [vmem:[%s2743 + $0xb8] sm:$0xff]
        %v2964 = vld [vmem:[%s1302 + $0x4] sm:$0x1]
        %v2965 = vlaneseq
        %v2966 = vshrl.u32 %v2965, 7
        %v2967 = vsub.s32 0, %v2966
        %v2968 = vrot.slane %v2964, %v2967
        %v2969 = vmul.f32 %v2745, %v2968
        %v2970 = vmul.f32 %v2956, %v2968
        %v2971 = vmul.f32 %v2747, %v2968
        %v2972 = vmul.f32 %v2957, %v2968
        %v2973 = vmul.f32 %v2749, %v2968
        %v2974 = vmul.f32 %v2958, %v2968
        %v2975 = vmul.f32 %v2751, %v2968
        %v2976 = vmul.f32 %v2959, %v2968
        %v2977 = vmul.f32 %v2753, %v2968
        %v2978 = vmul.f32 %v2960, %v2968
        %v2979 = vmul.f32 %v2755, %v2968
        %v2980 = vmul.f32 %v2961, %v2968
        %v2981 = vmul.f32 %v2757, %v2968
        %v2982 = vmul.f32 %v2962, %v2968
        %v2983 = vmul.f32 %v2759, %v2968
        %v2984 = vmul.f32 %v2963, %v2968
        %v2985 = vadd.f32 %v2940, %v2969
        %v2986 = vadd.f32 %v2941, %v2970
        %v2987 = vadd.f32 %v2942, %v2971
        %v2988 = vadd.f32 %v2943, %v2972
        %v2989 = vadd.f32 %v2944, %v2973
        %v2990 = vadd.f32 %v2945, %v2974
        %v2991 = vadd.f32 %v2946, %v2975
        %v2992 = vadd.f32 %v2947, %v2976
        %v2993 = vadd.f32 %v2948, %v2977
        %v2994 = vadd.f32 %v2949, %v2978
        %v2995 = vadd.f32 %v2950, %v2979
        %v2996 = vadd.f32 %v2951, %v2980
        %v2997 = vadd.f32 %v2952, %v2981
        %v2998 = vadd.f32 %v2953, %v2982
        %v2999 = vadd.f32 %v2954, %v2983
        %v3000 = vadd.f32 %v2955, %v2984
        %s3001 = scalar_lea.vmem [#allocation2], 384
        %v3002 = vld [vmem:[%s3001] sm:$0xff]
        %v3003 = vld [vmem:[%s3001 + $0x8] sm:$0xff]
        %v3004 = vld [vmem:[%s3001 + $0x18] sm:$0xff]
        %v3005 = vld [vmem:[%s3001 + $0x20] sm:$0xff]
        %v3006 = vld [vmem:[%s3001 + $0x30] sm:$0xff]
        %v3007 = vld [vmem:[%s3001 + $0x38] sm:$0xff]
        %v3008 = vld [vmem:[%s3001 + $0x48] sm:$0xff]
        %v3009 = vld [vmem:[%s3001 + $0x50] sm:$0xff]
        %v3010 = vld [vmem:[%s3001 + $0x60] sm:$0xff]
        %v3011 = vld [vmem:[%s3001 + $0x68] sm:$0xff]
        %v3012 = vld [vmem:[%s3001 + $0x78] sm:$0xff]
        %v3013 = vld [vmem:[%s3001 + $0x80] sm:$0xff]
        %v3014 = vld [vmem:[%s3001 + $0x90] sm:$0xff]
        %v3015 = vld [vmem:[%s3001 + $0x98] sm:$0xff]
        %v3016 = vld [vmem:[%s3001 + $0xa8] sm:$0xff]
        %v3017 = vld [vmem:[%s3001 + $0xb0] sm:$0xff]
        %v3018 = vld [vmem:[%s1561] sm:$0x1]
        %v3019 = vlaneseq
        %v3020 = vshrl.u32 %v3019, 7
        %v3021 = vsub.s32 0, %v3020
        %v3022 = vrot.slane %v3018, %v3021
        %v3023 = vmul.f32 %v3002, %v3022
        %v3024 = vmul.f32 %v3003, %v3022
        %v3025 = vmul.f32 %v3004, %v3022
        %v3026 = vmul.f32 %v3005, %v3022
        %v3027 = vmul.f32 %v3006, %v3022
        %v3028 = vmul.f32 %v3007, %v3022
        %v3029 = vmul.f32 %v3008, %v3022
        %v3030 = vmul.f32 %v3009, %v3022
        %v3031 = vmul.f32 %v3010, %v3022
        %v3032 = vmul.f32 %v3011, %v3022
        %v3033 = vmul.f32 %v3012, %v3022
        %v3034 = vmul.f32 %v3013, %v3022
        %v3035 = vmul.f32 %v3014, %v3022
        %v3036 = vmul.f32 %v3015, %v3022
        %v3037 = vmul.f32 %v3016, %v3022
        %v3038 = vmul.f32 %v3017, %v3022
        %v3039 = vadd.f32 %v2985, %v3023
        %v3040 = vadd.f32 %v2986, %v3024
        %v3041 = vadd.f32 %v2987, %v3025
        %v3042 = vadd.f32 %v2988, %v3026
        %v3043 = vadd.f32 %v2989, %v3027
        %v3044 = vadd.f32 %v2990, %v3028
        %v3045 = vadd.f32 %v2991, %v3029
        %v3046 = vadd.f32 %v2992, %v3030
        %v3047 = vadd.f32 %v2993, %v3031
        %v3048 = vadd.f32 %v2994, %v3032
        %v3049 = vadd.f32 %v2995, %v3033
        %v3050 = vadd.f32 %v2996, %v3034
        %v3051 = vadd.f32 %v2997, %v3035
        %v3052 = vadd.f32 %v2998, %v3036
        %v3053 = vadd.f32 %v2999, %v3037
        %v3054 = vadd.f32 %v3000, %v3038
        %v3055 = vld [vmem:[%s3001 + $0x2] sm:$0xff]
        %v3056 = vld [vmem:[%s3001 + $0xa] sm:$0xff]
        %v3057 = vld [vmem:[%s3001 + $0x1a] sm:$0xff]
        %v3058 = vld [vmem:[%s3001 + $0x22] sm:$0xff]
        %v3059 = vld [vmem:[%s3001 + $0x32] sm:$0xff]
        %v3060 = vld [vmem:[%s3001 + $0x3a] sm:$0xff]
        %v3061 = vld [vmem:[%s3001 + $0x4a] sm:$0xff]
        %v3062 = vld [vmem:[%s3001 + $0x52] sm:$0xff]
        %v3063 = vld [vmem:[%s3001 + $0x62] sm:$0xff]
        %v3064 = vld [vmem:[%s3001 + $0x6a] sm:$0xff]
        %v3065 = vld [vmem:[%s3001 + $0x7a] sm:$0xff]
        %v3066 = vld [vmem:[%s3001 + $0x82] sm:$0xff]
        %v3067 = vld [vmem:[%s3001 + $0x92] sm:$0xff]
        %v3068 = vld [vmem:[%s3001 + $0x9a] sm:$0xff]
        %v3069 = vld [vmem:[%s3001 + $0xaa] sm:$0xff]
        %v3070 = vld [vmem:[%s3001 + $0xb2] sm:$0xff]
        %v3071 = vld [vmem:[%s1561 + $0x1] sm:$0x1]
        %v3072 = vlaneseq
        %v3073 = vshrl.u32 %v3072, 7
        %v3074 = vsub.s32 0, %v3073
        %v3075 = vrot.slane %v3071, %v3074
        %v3076 = vmul.f32 %v3055, %v3075
        %v3077 = vmul.f32 %v3056, %v3075
        %v3078 = vmul.f32 %v3057, %v3075
        %v3079 = vmul.f32 %v3058, %v3075
        %v3080 = vmul.f32 %v3059, %v3075
        %v3081 = vmul.f32 %v3060, %v3075
        %v3082 = vmul.f32 %v3061, %v3075
        %v3083 = vmul.f32 %v3062, %v3075
        %v3084 = vmul.f32 %v3063, %v3075
        %v3085 = vmul.f32 %v3064, %v3075
        %v3086 = vmul.f32 %v3065, %v3075
        %v3087 = vmul.f32 %v3066, %v3075
        %v3088 = vmul.f32 %v3067, %v3075
        %v3089 = vmul.f32 %v3068, %v3075
        %v3090 = vmul.f32 %v3069, %v3075
        %v3091 = vmul.f32 %v3070, %v3075
        %v3092 = vadd.f32 %v3039, %v3076
        %v3093 = vadd.f32 %v3040, %v3077
        %v3094 = vadd.f32 %v3041, %v3078
        %v3095 = vadd.f32 %v3042, %v3079
        %v3096 = vadd.f32 %v3043, %v3080
        %v3097 = vadd.f32 %v3044, %v3081
        %v3098 = vadd.f32 %v3045, %v3082
        %v3099 = vadd.f32 %v3046, %v3083
        %v3100 = vadd.f32 %v3047, %v3084
        %v3101 = vadd.f32 %v3048, %v3085
        %v3102 = vadd.f32 %v3049, %v3086
        %v3103 = vadd.f32 %v3050, %v3087
        %v3104 = vadd.f32 %v3051, %v3088
        %v3105 = vadd.f32 %v3052, %v3089
        %v3106 = vadd.f32 %v3053, %v3090
        %v3107 = vadd.f32 %v3054, %v3091
        %v3108 = vld [vmem:[%s3001 + $0x4] sm:$0xff]
        %v3109 = vld [vmem:[%s3001 + $0xc] sm:$0xff]
        %v3110 = vld [vmem:[%s3001 + $0x1c] sm:$0xff]
        %v3111 = vld [vmem:[%s3001 + $0x24] sm:$0xff]
        %v3112 = vld [vmem:[%s3001 + $0x34] sm:$0xff]
        %v3113 = vld [vmem:[%s3001 + $0x3c] sm:$0xff]
        %v3114 = vld [vmem:[%s3001 + $0x4c] sm:$0xff]
        %v3115 = vld [vmem:[%s3001 + $0x54] sm:$0xff]
        %v3116 = vld [vmem:[%s3001 + $0x64] sm:$0xff]
        %v3117 = vld [vmem:[%s3001 + $0x6c] sm:$0xff]
        %v3118 = vld [vmem:[%s3001 + $0x7c] sm:$0xff]
        %v3119 = vld [vmem:[%s3001 + $0x84] sm:$0xff]
        %v3120 = vld [vmem:[%s3001 + $0x94] sm:$0xff]
        %v3121 = vld [vmem:[%s3001 + $0x9c] sm:$0xff]
        %v3122 = vld [vmem:[%s3001 + $0xac] sm:$0xff]
        %v3123 = vld [vmem:[%s3001 + $0xb4] sm:$0xff]
        %v3124 = vld [vmem:[%s1561 + $0x2] sm:$0x1]
        %v3125 = vlaneseq
        %v3126 = vshrl.u32 %v3125, 7
        %v3127 = vsub.s32 0, %v3126
        %v3128 = vrot.slane %v3124, %v3127
        %v3129 = vmul.f32 %v3108, %v3128
        %v3130 = vmul.f32 %v3109, %v3128
        %v3131 = vmul.f32 %v3110, %v3128
        %v3132 = vmul.f32 %v3111, %v3128
        %v3133 = vmul.f32 %v3112, %v3128
        %v3134 = vmul.f32 %v3113, %v3128
        %v3135 = vmul.f32 %v3114, %v3128
        %v3136 = vmul.f32 %v3115, %v3128
        %v3137 = vmul.f32 %v3116, %v3128
        %v3138 = vmul.f32 %v3117, %v3128
        %v3139 = vmul.f32 %v3118, %v3128
        %v3140 = vmul.f32 %v3119, %v3128
        %v3141 = vmul.f32 %v3120, %v3128
        %v3142 = vmul.f32 %v3121, %v3128
        %v3143 = vmul.f32 %v3122, %v3128
        %v3144 = vmul.f32 %v3123, %v3128
        %v3145 = vadd.f32 %v3092, %v3129
        %v3146 = vadd.f32 %v3093, %v3130
        %v3147 = vadd.f32 %v3094, %v3131
        %v3148 = vadd.f32 %v3095, %v3132
        %v3149 = vadd.f32 %v3096, %v3133
        %v3150 = vadd.f32 %v3097, %v3134
        %v3151 = vadd.f32 %v3098, %v3135
        %v3152 = vadd.f32 %v3099, %v3136
        %v3153 = vadd.f32 %v3100, %v3137
        %v3154 = vadd.f32 %v3101, %v3138
        %v3155 = vadd.f32 %v3102, %v3139
        %v3156 = vadd.f32 %v3103, %v3140
        %v3157 = vadd.f32 %v3104, %v3141
        %v3158 = vadd.f32 %v3105, %v3142
        %v3159 = vadd.f32 %v3106, %v3143
        %v3160 = vadd.f32 %v3107, %v3144
        %v3161 = vld [vmem:[%s3001 + $0x6] sm:$0xff]
        %v3162 = vld [vmem:[%s3001 + $0xe] sm:$0xff]
        %v3163 = vld [vmem:[%s3001 + $0x1e] sm:$0xff]
        %v3164 = vld [vmem:[%s3001 + $0x26] sm:$0xff]
        %v3165 = vld [vmem:[%s3001 + $0x36] sm:$0xff]
        %v3166 = vld [vmem:[%s3001 + $0x3e] sm:$0xff]
        %v3167 = vld [vmem:[%s3001 + $0x4e] sm:$0xff]
        %v3168 = vld [vmem:[%s3001 + $0x56] sm:$0xff]
        %v3169 = vld [vmem:[%s3001 + $0x66] sm:$0xff]
        %v3170 = vld [vmem:[%s3001 + $0x6e] sm:$0xff]
        %v3171 = vld [vmem:[%s3001 + $0x7e] sm:$0xff]
        %v3172 = vld [vmem:[%s3001 + $0x86] sm:$0xff]
        %v3173 = vld [vmem:[%s3001 + $0x96] sm:$0xff]
        %v3174 = vld [vmem:[%s3001 + $0x9e] sm:$0xff]
        %v3175 = vld [vmem:[%s3001 + $0xae] sm:$0xff]
        %v3176 = vld [vmem:[%s3001 + $0xb6] sm:$0xff]
        %v3177 = vld [vmem:[%s1561 + $0x3] sm:$0x1]
        %v3178 = vlaneseq
        %v3179 = vshrl.u32 %v3178, 7
        %v3180 = vsub.s32 0, %v3179
        %v3181 = vrot.slane %v3177, %v3180
        %v3182 = vmul.f32 %v3161, %v3181
        %v3183 = vmul.f32 %v3162, %v3181
        %v3184 = vmul.f32 %v3163, %v3181
        %v3185 = vmul.f32 %v3164, %v3181
        %v3186 = vmul.f32 %v3165, %v3181
        %v3187 = vmul.f32 %v3166, %v3181
        %v3188 = vmul.f32 %v3167, %v3181
        %v3189 = vmul.f32 %v3168, %v3181
        %v3190 = vmul.f32 %v3169, %v3181
        %v3191 = vmul.f32 %v3170, %v3181
        %v3192 = vmul.f32 %v3171, %v3181
        %v3193 = vmul.f32 %v3172, %v3181
        %v3194 = vmul.f32 %v3173, %v3181
        %v3195 = vmul.f32 %v3174, %v3181
        %v3196 = vmul.f32 %v3175, %v3181
        %v3197 = vmul.f32 %v3176, %v3181
        %v3198 = vadd.f32 %v3145, %v3182
        %v3199 = vadd.f32 %v3146, %v3183
        %v3200 = vadd.f32 %v3147, %v3184
        %v3201 = vadd.f32 %v3148, %v3185
        %v3202 = vadd.f32 %v3149, %v3186
        %v3203 = vadd.f32 %v3150, %v3187
        %v3204 = vadd.f32 %v3151, %v3188
        %v3205 = vadd.f32 %v3152, %v3189
        %v3206 = vadd.f32 %v3153, %v3190
        %v3207 = vadd.f32 %v3154, %v3191
        %v3208 = vadd.f32 %v3155, %v3192
        %v3209 = vadd.f32 %v3156, %v3193
        %v3210 = vadd.f32 %v3157, %v3194
        %v3211 = vadd.f32 %v3158, %v3195
        %v3212 = vadd.f32 %v3159, %v3196
        %v3213 = vadd.f32 %v3160, %v3197
        %v3214 = vld [vmem:[%s3001 + $0x10] sm:$0xff]
        %v3215 = vld [vmem:[%s3001 + $0x28] sm:$0xff]
        %v3216 = vld [vmem:[%s3001 + $0x40] sm:$0xff]
        %v3217 = vld [vmem:[%s3001 + $0x58] sm:$0xff]
        %v3218 = vld [vmem:[%s3001 + $0x70] sm:$0xff]
        %v3219 = vld [vmem:[%s3001 + $0x88] sm:$0xff]
        %v3220 = vld [vmem:[%s3001 + $0xa0] sm:$0xff]
        %v3221 = vld [vmem:[%s3001 + $0xb8] sm:$0xff]
        %v3222 = vld [vmem:[%s1561 + $0x4] sm:$0x1]
        %v3223 = vlaneseq
        %v3224 = vshrl.u32 %v3223, 7
        %v3225 = vsub.s32 0, %v3224
        %v3226 = vrot.slane %v3222, %v3225
        %v3227 = vmul.f32 %v3003, %v3226
        %v3228 = vmul.f32 %v3214, %v3226
        %v3229 = vmul.f32 %v3005, %v3226
        %v3230 = vmul.f32 %v3215, %v3226
        %v3231 = vmul.f32 %v3007, %v3226
        %v3232 = vmul.f32 %v3216, %v3226
        %v3233 = vmul.f32 %v3009, %v3226
        %v3234 = vmul.f32 %v3217, %v3226
        %v3235 = vmul.f32 %v3011, %v3226
        %v3236 = vmul.f32 %v3218, %v3226
        %v3237 = vmul.f32 %v3013, %v3226
        %v3238 = vmul.f32 %v3219, %v3226
        %v3239 = vmul.f32 %v3015, %v3226
        %v3240 = vmul.f32 %v3220, %v3226
        %v3241 = vmul.f32 %v3017, %v3226
        %v3242 = vmul.f32 %v3221, %v3226
        %v3243 = vadd.f32 %v3198, %v3227
        %v3244 = vadd.f32 %v3199, %v3228
        %v3245 = vadd.f32 %v3200, %v3229
        %v3246 = vadd.f32 %v3201, %v3230
        %v3247 = vadd.f32 %v3202, %v3231
        %v3248 = vadd.f32 %v3203, %v3232
        %v3249 = vadd.f32 %v3204, %v3233
        %v3250 = vadd.f32 %v3205, %v3234
        %v3251 = vadd.f32 %v3206, %v3235
        %v3252 = vadd.f32 %v3207, %v3236
        %v3253 = vadd.f32 %v3208, %v3237
        %v3254 = vadd.f32 %v3209, %v3238
        %v3255 = vadd.f32 %v3210, %v3239
        %v3256 = vadd.f32 %v3211, %v3240
        %v3257 = vadd.f32 %v3212, %v3241
        %v3258 = vadd.f32 %v3213, %v3242
        %3259 = vmatprep.subr.mxu0 0.0
        %3260 = vmatpush1.msra.mxu0 %v494
        %3261 = vmatprep.subr.mxu0 0.0
        %3262 = vmatpush1.msra.mxu0 %v495
        %3263 = vmatprep.subr.mxu0 0.0
        %3264 = vmatpush1.msra.mxu0 %v496
        %3265 = vmatprep.subr.mxu0 0.0
        %3266 = vmatpush1.msra.mxu0 %v497
        %3267 = vmatprep.subr.mxu0 0.0
        %3268 = vmatpush1.msra.mxu0 %v498
        %3269 = vmatprep.subr.mxu0 0.0
        %3270 = vmatpush1.msra.mxu0 %v499
        %3271 = vmatprep.subr.mxu0 0.0
        %3272 = vmatpush1.msra.mxu0 %v500
        %3273 = vmatprep.subr.mxu0 0.0
        %3274 = vmatpush1.msra.mxu0 %v501
        %3275 = vmatprep.subr.mxu0 0.0
        %3276 = vmatpush1.msra.mxu0 %v502
        %3277 = vmatprep.subr.mxu0 0.0
        %3278 = vmatpush1.msra.mxu0 %v503
        %3279 = vmatprep.subr.mxu0 0.0
        %3280 = vmatpush1.msra.mxu0 %v504
        %3281 = vmatprep.subr.mxu0 0.0
        %3282 = vmatpush1.msra.mxu0 %v505
        %3283 = vmatprep.subr.mxu0 0.0
        %3284 = vmatpush1.msra.mxu0 %v506
        %3285 = vmatprep.subr.mxu0 0.0
        %3286 = vmatpush1.msra.mxu0 %v507
        %3287 = vmatprep.subr.mxu0 0.0
        %3288 = vmatpush1.msra.mxu0 %v508
        %3289 = vmatprep.subr.mxu0 0.0
        %3290 = vmatpush1.msra.mxu0 %v509
        %3291 = vmatprep.subr.mxu0 0.0
        %3292 = vmatpush1.msra.mxu0 0.0
        %3293 = vmatprep.subr.mxu0 0.0
        %3294 = vmatpush1.msra.mxu0 0.0
        %3295 = vmatprep.subr.mxu0 0.0
        %3296 = vmatpush1.msra.mxu0 0.0
        %3297 = vmatprep.subr.mxu0 0.0
        %3298 = vmatpush1.msra.mxu0 0.0
        %3299 = vmatprep.subr.mxu0 0.0
        %3300 = vmatpush1.msra.mxu0 0.0
        %3301 = vmatprep.subr.mxu0 0.0
        %3302 = vmatpush1.msra.mxu0 0.0
        %3303 = vmatprep.subr.mxu0 0.0
        %3304 = vmatpush1.msra.mxu0 0.0
        %3305 = vmatprep.subr.mxu0 0.0
        %3306 = vmatpush1.msra.mxu0 0.0
        %3307 = vmatprep.subr.mxu0 0.0
        %3308 = vmatpush1.msra.mxu0 0.0
        %3309 = vmatprep.subr.mxu0 0.0
        %3310 = vmatpush1.msra.mxu0 0.0
        %3311 = vmatprep.subr.mxu0 0.0
        %3312 = vmatpush1.msra.mxu0 0.0
        %3313 = vmatprep.subr.mxu0 0.0
        %3314 = vmatpush1.msra.mxu0 0.0
        %3315 = vmatprep.subr.mxu0 0.0
        %3316 = vmatpush1.msra.mxu0 0.0
        %3317 = vmatprep.subr.mxu0 0.0
        %3318 = vmatpush1.msra.mxu0 0.0
        %3319 = vmatprep.subr.mxu0 0.0
        %3320 = vmatpush1.msra.mxu0 0.0
        %3321 = vmatprep.subr.mxu0 0.0
        %3322 = vmatpush1.msra.mxu0 0.0
        %3323 = vmatprep.mubr.f32.mxu0 0.0
        %3324 = vmatmul.mubr.f32.gmra.mrb[0].mxu0 %v3243
        %v3325 = vpop.f32.mrb[0].mxu0
        %v3326 = vadd.f32 %v1807, %v3325
        %v3327 = vpop.f32.mrb[0].mxu0
        %3328 = vmatprep.mubr.f32.mxu0 0.0
        %3329 = vmatmul.mubr.f32.gmra.mrb[0].mxu0 %v3244
        %v3330 = vpop.f32.mrb[0].mxu0
        %v3331 = vadd.f32 %v1807, %v3330
        %v3332 = vpop.f32.mrb[0].mxu0
        %3333 = vmatprep.mubr.f32.mxu0 0.0
        %3334 = vmatmul.mubr.f32.gmra.mrb[0].mxu0 %v3245
        %v3335 = vpop.f32.mrb[0].mxu0
        %v3336 = vadd.f32 %v1807, %v3335
        %v3337 = vpop.f32.mrb[0].mxu0
        %3338 = vmatprep.mubr.f32.mxu0 0.0
        %3339 = vmatmul.mubr.f32.gmra.mrb[0].mxu0 %v3246
        %v3340 = vpop.f32.mrb[0].mxu0
        %v3341 = vadd.f32 %v1807, %v3340
        %v3342 = vpop.f32.mrb[0].mxu0
        %3343 = vmatprep.mubr.f32.mxu0 0.0
        %3344 = vmatmul.mubr.f32.gmra.mrb[0].mxu0 %v3247
        %v3345 = vpop.f32.mrb[0].mxu0
        %v3346 = vadd.f32 %v1807, %v3345
        %v3347 = vpop.f32.mrb[0].mxu0
        %3348 = vmatprep.mubr.f32.mxu0 0.0
        %3349 = vmatmul.mubr.f32.gmra.mrb[0].mxu0 %v3248
        %v3350 = vpop.f32.mrb[0].mxu0
        %v3351 = vadd.f32 %v1807, %v3350
        %v3352 = vpop.f32.mrb[0].mxu0
        %3353 = vmatprep.mubr.f32.mxu0 0.0
        %3354 = vmatmul.mubr.f32.gmra.mrb[0].mxu0 %v3249
        %v3355 = vpop.f32.mrb[0].mxu0
        %v3356 = vadd.f32 %v1807, %v3355
        %v3357 = vpop.f32.mrb[0].mxu0
        %3358 = vmatprep.mubr.f32.mxu0 0.0
        %3359 = vmatmul.mubr.f32.gmra.mrb[0].mxu0 %v3250
        %v3360 = vpop.f32.mrb[0].mxu0
        %v3361 = vadd.f32 %v1807, %v3360
        %v3362 = vpop.f32.mrb[0].mxu0
        %3363 = vmatprep.mubr.f32.mxu0 0.0
        %3364 = vmatmul.mubr.f32.gmra.mrb[0].mxu0 %v3251
        %v3365 = vpop.f32.mrb[0].mxu0
        %v3366 = vadd.f32 %v1807, %v3365
        %v3367 = vpop.f32.mrb[0].mxu0
        %3368 = vmatprep.mubr.f32.mxu0 0.0
        %3369 = vmatmul.mubr.f32.gmra.mrb[0].mxu0 %v3252
        %v3370 = vpop.f32.mrb[0].mxu0
        %v3371 = vadd.f32 %v1807, %v3370
        %v3372 = vpop.f32.mrb[0].mxu0
        %3373 = vmatprep.mubr.f32.mxu0 0.0
        %3374 = vmatmul.mubr.f32.gmra.mrb[0].mxu0 %v3253
        %v3375 = vpop.f32.mrb[0].mxu0
        %v3376 = vadd.f32 %v1807, %v3375
        %v3377 = vpop.f32.mrb[0].mxu0
        %3378 = vmatprep.mubr.f32.mxu0 0.0
        %3379 = vmatmul.mubr.f32.gmra.mrb[0].mxu0 %v3254
        %v3380 = vpop.f32.mrb[0].mxu0
        %v3381 = vadd.f32 %v1807, %v3380
        %v3382 = vpop.f32.mrb[0].mxu0
        %3383 = vmatprep.mubr.f32.mxu0 0.0
        %3384 = vmatmul.mubr.f32.gmra.mrb[0].mxu0 %v3255
        %v3385 = vpop.f32.mrb[0].mxu0
        %v3386 = vadd.f32 %v1807, %v3385
        %v3387 = vpop.f32.mrb[0].mxu0
        %3388 = vmatprep.mubr.f32.mxu0 0.0
        %3389 = vmatmul.mubr.f32.gmra.mrb[0].mxu0 %v3256
        %v3390 = vpop.f32.mrb[0].mxu0
        %v3391 = vadd.f32 %v1807, %v3390
        %v3392 = vpop.f32.mrb[0].mxu0
        %3393 = vmatprep.mubr.f32.mxu0 0.0
        %3394 = vmatmul.mubr.f32.gmra.mrb[0].mxu0 %v3257
        %v3395 = vpop.f32.mrb[0].mxu0
        %v3396 = vadd.f32 %v1807, %v3395
        %v3397 = vpop.f32.mrb[0].mxu0
        %3398 = vmatprep.mubr.f32.mxu0 0.0
        %3399 = vmatmul.mubr.f32.gmra.mrb[0].mxu0 %v3258
        %v3400 = vpop.f32.mrb[0].mxu0
        %v3401 = vadd.f32 %v1807, %v3400
        %v3402 = vpop.f32.mrb[0].mxu0
        %3403 = vdwg.mxu0
        %s3404 = scalar_lea.vmem %s190, 128 [#allocation3]
        %3405 = vst.msk [vmem:[%s3404] sm:$0xff] %vm428, %v3326
        %3406 = vst.msk [vmem:[%s3404 + $0x8] sm:$0xff] %vm428, %v3331
        %3407 = vst.msk [vmem:[%s3404 + $0x10] sm:$0xff] %vm428, %v3336
        %3408 = vst.msk [vmem:[%s3404 + $0x18] sm:$0xff] %vm428, %v3341
        %3409 = vst.msk [vmem:[%s3404 + $0x20] sm:$0xff] %vm428, %v3346
        %3410 = vst.msk [vmem:[%s3404 + $0x28] sm:$0xff] %vm428, %v3351
        %3411 = vst.msk [vmem:[%s3404 + $0x30] sm:$0xff] %vm428, %v3356
        %3412 = vst.msk [vmem:[%s3404 + $0x38] sm:$0xff] %vm428, %v3361
        %3413 = vst.msk [vmem:[%s3404 + $0x40] sm:$0xff] %vm428, %v3366
        %3414 = vst.msk [vmem:[%s3404 + $0x48] sm:$0xff] %vm428, %v3371
        %3415 = vst.msk [vmem:[%s3404 + $0x50] sm:$0xff] %vm428, %v3376
        %3416 = vst.msk [vmem:[%s3404 + $0x58] sm:$0xff] %vm428, %v3381
        %3417 = vst.msk [vmem:[%s3404 + $0x60] sm:$0xff] %vm428, %v3386
        %3418 = vst.msk [vmem:[%s3404 + $0x68] sm:$0xff] %vm428, %v3391
        %3419 = vst.msk [vmem:[%s3404 + $0x70] sm:$0xff] %vm428, %v3396
        %3420 = vst.msk [vmem:[%s3404 + $0x78] sm:$0xff] %vm428, %v3401
        %s3421 = sand.u32 %s115, 1
        %s3422 = scalar_lea.sflag [#allocation4], %s3421
        %s3423 = sand.u32 %s115, 1
        %s3424 = smul.addr %s3423, 256
        %s3425 = scalar_lea.vmem [#allocation3], %s3424
        // Predicated region
        $region37: #{custom_conv_block.1} parent=35 // pred_check
          %p3426 = pneg %p125
        $region38: #{custom_conv_block.1} parent=35 // pred_check_branch
          %3428 = sbr.rel (%p3426) target = $region40
        $region39: #{custom_conv_block.1} parent=35 // pred_region
          %s3430 = ssub.s32 4096, 4096
          %3431 = vsyncadd %s3422, %s3430
          %s3432 = smul.addr %s18, 32
          %s3433 = smul.addr %s3432, 128
          %s3434 = scalar_lea.hbm %s4, %s3433
          %s3435 = sshll.u32 %s3425, 4
          %s3436 = int_to_ptr.vmem [resolvable:$true] %s3435
          %3441 = dma.vmem_to_hbm [thread:$0]  %s3436, 4096, %s3434, %s3422, 128, 128, 8
        $region40: #{custom_conv_block.1} parent=35 // pred_fallthru
          _
      $region36: #{custom_conv_block.1} parent=5 // pred_fallthru
        _
      %p3442 = scmp.le.s32.totalorder 2, %s13
      // Predicated region
      $region41: #{custom_conv_block.1} parent=5 // pred_check
        %p3443 = pneg %p3442
      $region42: #{custom_conv_block.1} parent=5 // pred_check_branch
        %3445 = sbr.rel (%p3443) target = $region44
      $region43: #{custom_conv_block.1} parent=5 // pred_region
        %s3446 = ssub.s32 %s13, 2
        // Predicated region
        $region45: #{custom_conv_block.1} parent=43 // pred_check
          %p3447 = pneg %p131
        $region46: #{custom_conv_block.1} parent=43 // pred_check_branch
          %3449 = sbr.rel (%p3447) target = $region48
        $region47: #{custom_conv_block.1} parent=43 // pred_region
          %s3450 = sand.u32 %s116, 1
          %s3451 = scalar_lea.sflag [#allocation4], %s3450
          %s3452 = sand.u32 %s116, 1
          %s3453 = smul.addr %s3452, 256
          %s3454 = scalar_lea.vmem [#allocation3], %s3453
          %3455 = dma.done %s3451, 4096
        $region48: #{custom_conv_block.1} parent=43 // pred_fallthru
          _
      $region44: #{custom_conv_block.1} parent=5 // pred_fallthru
        _
    $region6: #{custom_conv_block.1} parent=1 // loop_footer
      %s17 = sadd.s32 1, %s13
    $region7: #{custom_conv_block.1} parent=1 // loop_footer_branch
      %12 = sbr.rel target = $region3
    $region8: #{custom_conv_block.1} parent=1 // loop_exit
      _
    %3456 = vsyncpa [#allocation4], 1
    %s3457 = scalar_lea.sflag [#allocation4], 1
    %3458 = vsyncpa %s3457, 1

</llo_original>
